<compile_context>
chip_gen: v7x
topology: tpu7x:2x2x1
jax: 0.10.0
libtpu: 0.0.40
codegen_flags: <defaults>
</compile_context>

<pallas_src>
import functools
import math

import jax
import jax.numpy as jnp
from jax.experimental import pallas as pl
from jax.experimental.pallas import tpu as pltpu


# ----------------------------------------------------------------------------
# Fused kernel: (CLS prepend at layer 0) + one encoder layer per grid step.
# Grid = (batch_tiles, n_layers); activation carried across layer steps in VMEM.
# ----------------------------------------------------------------------------
def _encoder_kernel(x_ref, wqkv_ref, wo_ref, bo_ref, w1_ref, b1_ref,
                    w2_ref, b2_ref, g_ref, be_ref, o_ref, act_ref,
                    *, n_head, d_k, d_v):
    layer = pl.program_id(1)
    n_layers = pl.num_programs(1)
    Bt, L, D = act_ref.shape                               # L = N + 1

    # --- layer 0: CLS = mean over sequence, prepended (row writes, no concat)
    @pl.when(layer == 0)
    def _():
        x_in = x_ref[...].astype(jnp.float32)              # (Bt, N, D)
        act_ref[:, 0:1, :] = jnp.mean(x_in, axis=1, keepdims=True)
        act_ref[:, 1:, :] = x_in

    x3 = act_ref[...]                                      # (Bt, L, D) f32
    xf = x3.reshape(Bt * L, D)                             # dense-matmul slab

    # --- fused QKV projection: single bf16 MXU matmul, f32 accumulation -----
    hk = n_head * d_k
    hv = n_head * d_v
    qkv = jnp.dot(xf.astype(jnp.bfloat16), wqkv_ref[0],
                  preferred_element_type=jnp.float32)      # (Bt*L, 2*hk+hv)
    q = qkv[:, :hk] * (1.0 / math.sqrt(d_k))               # scale once on q
    k = qkv[:, hk:2 * hk]
    v = qkv[:, 2 * hk:]

    # head-major batched layout (Bt*H, L, d) for the attention einsums
    qh = jnp.transpose(q.reshape(Bt, L, n_head, d_k), (0, 2, 1, 3)
                       ).reshape(Bt * n_head, L, d_k).astype(jnp.bfloat16)
    kh = jnp.transpose(k.reshape(Bt, L, n_head, d_k), (0, 2, 1, 3)
                       ).reshape(Bt * n_head, L, d_k).astype(jnp.bfloat16)
    vh = jnp.transpose(v.reshape(Bt, L, n_head, d_v), (0, 2, 1, 3)
                       ).reshape(Bt * n_head, L, d_v).astype(jnp.bfloat16)

    s = jnp.einsum('bqd,bkd->bqk', qh, kh,
                   preferred_element_type=jnp.float32)     # (Bt*H, L, L)
    s = s - jnp.max(s, axis=-1, keepdims=True)
    p = jnp.exp(s)
    p = p * pl.reciprocal(jnp.sum(p, axis=-1, keepdims=True), approx=True)

    ctx = jnp.einsum('bqk,bkd->bqd', p.astype(jnp.bfloat16), vh,
                     preferred_element_type=jnp.float32)   # (Bt*H, L, dv)
    ctx = jnp.transpose(ctx.reshape(Bt, n_head, L, d_v), (0, 2, 1, 3)
                        ).reshape(Bt * L, n_head * d_v)

    mha = jnp.dot(ctx.astype(jnp.bfloat16), wo_ref[0],
                  preferred_element_type=jnp.float32) + bo_ref[0]
    y = mha + xf                                           # residual, no LN

    # --- position-wise feed-forward + residual + LayerNorm(eps=1e-6) --------
    h1 = jnp.maximum(
        jnp.dot(y.astype(jnp.bfloat16), w1_ref[0],
                preferred_element_type=jnp.float32) + b1_ref[0],
        0.0)
    ffn = jnp.dot(h1.astype(jnp.bfloat16), w2_ref[0],
                  preferred_element_type=jnp.float32) + b2_ref[0]
    z = ffn + y

    mu = jnp.mean(z, axis=-1, keepdims=True)
    var = jnp.mean((z - mu) ** 2, axis=-1, keepdims=True)
    out = (z - mu) * jax.lax.rsqrt(var + 1e-6) * g_ref[0] + be_ref[0]
    out3 = out.reshape(Bt, L, D)

    act_ref[...] = out3                                    # carry to next layer

    @pl.when(layer == n_layers - 1)
    def _():
        o_ref[...] = out3.astype(o_ref.dtype)              # one lane-dense store


# ----------------------------------------------------------------------------
# Wrapper: single pallas_call over (batch_tiles, n_layers)
# ----------------------------------------------------------------------------
def encoder_forward(x, stacked_params, *, n_head, d_k, d_v, block_b=None):
    B, N, D = x.shape
    n_layers = stacked_params[0].shape[0]
    L = N + 1
    if block_b is None:
        # whole batch per step for small B (best MXU fill / weight reuse);
        # cap for big B so multiple "parallel" tiles exist (v7x 2-TC sharding).
        block_b = B if B <= 8 else 8
    n_btiles = pl.cdiv(B, block_b)

    def wspec(arr):
        nd = arr.ndim
        return pl.BlockSpec((1,) + arr.shape[1:],
                            lambda bt, l, _nd=nd: (l,) + (0,) * (_nd - 1))

    kernel = functools.partial(_encoder_kernel,
                               n_head=n_head, d_k=d_k, d_v=d_v)

    return pl.pallas_call(
        kernel,
        out_shape=jax.ShapeDtypeStruct((B, L, D), x.dtype),
        grid=(n_btiles, n_layers),
        in_specs=[pl.BlockSpec((block_b, N, D), lambda bt, l: (bt, 0, 0))]
                 + [wspec(w) for w in stacked_params],
        out_specs=pl.BlockSpec((block_b, L, D), lambda bt, l: (bt, 0, 0)),
        scratch_shapes=[pltpu.VMEM((block_b, L, D), jnp.float32)],
        compiler_params=pltpu.CompilerParams(
            dimension_semantics=("parallel", "arbitrary"),
            vmem_limit_bytes=64 * 1024 * 1024),
    )(x, *stacked_params)


# ----------------------------------------------------------------------------
# Parameter init: xavier_uniform for matrices (as in _reset_parameters, with
# per-projection fan), zeros for biases, LayerNorm gamma=1 / beta=0.
# Weights stacked over layers; matmul weights stored in bf16, small f32 biases.
# ----------------------------------------------------------------------------
def xavier_uniform(key, shape, dtype=jnp.float32):
    fan_in, fan_out = shape[-2], shape[-1]
    bound = math.sqrt(6.0 / (fan_in + fan_out))
    return jax.random.uniform(key, shape, dtype, minval=-bound, maxval=bound)


def init_encoder_params(key, n_layers, n_head, d_k, d_v, d_model, d_inner):
    ks = jax.random.split(key, 6)
    wq = xavier_uniform(ks[0], (n_layers, d_model, n_head * d_k))
    wk = xavier_uniform(ks[1], (n_layers, d_model, n_head * d_k))
    wv = xavier_uniform(ks[2], (n_layers, d_model, n_head * d_v))
    wqkv = jnp.concatenate([wq, wk, wv], axis=-1).astype(jnp.bfloat16)
    wo = xavier_uniform(ks[3], (n_layers, n_head * d_v, d_model)
                        ).astype(jnp.bfloat16)
    bo = jnp.zeros((n_layers, 1, d_model), jnp.float32)
    w1 = xavier_uniform(ks[4], (n_layers, d_model, d_inner)).astype(jnp.bfloat16)
    b1 = jnp.zeros((n_layers, 1, d_inner), jnp.float32)
    w2 = xavier_uniform(ks[5], (n_layers, d_inner, d_model)).astype(jnp.bfloat16)
    b2 = jnp.zeros((n_layers, 1, d_model), jnp.float32)
    g = jnp.ones((n_layers, 1, d_model), jnp.float32)
    be = jnp.zeros((n_layers, 1, d_model), jnp.float32)
    return (wqkv, wo, bo, w1, b1, w2, b2, g, be)


if __name__ == "__main__":
    # small config consistent with the module's constructor
    n_layers, n_head, d_k, d_v = 2, 2, 16, 16
    d_model, d_inner = 32, 64
    B, N = 2, 8

    key = jax.random.PRNGKey(0)
    key_x, key_p = jax.random.split(key)
    x = jax.random.normal(key_x, (B, N, d_model), jnp.float32)   # (B, seq, d_model)
    params = init_encoder_params(key_p, n_layers, n_head, d_k, d_v,
                                 d_model, d_inner)

    out = encoder_forward(x, params, n_head=n_head, d_k=d_k, d_v=d_v)
    out = jax.block_until_ready(out)
    assert out.shape == (B, N + 1, d_model)
    assert bool(jnp.all(jnp.isfinite(out)))
    print("KERNEL_OK")
</pallas_src>

<mosaic_0001>
module attributes {stable_mosaic.version = 11 : i64} {
  func.func @_encoder_kernel(%arg0: i32, %arg1: i32, %arg2: memref<2x8x32xf32, #tpu.memory_space<vmem>>, %arg3: memref<1x32x96xbf16, #tpu.memory_space<vmem>>, %arg4: memref<1x32x32xbf16, #tpu.memory_space<vmem>>, %arg5: memref<1x1x32xf32, #tpu.memory_space<vmem>>, %arg6: memref<1x32x64xbf16, #tpu.memory_space<vmem>>, %arg7: memref<1x1x64xf32, #tpu.memory_space<vmem>>, %arg8: memref<1x64x32xbf16, #tpu.memory_space<vmem>>, %arg9: memref<1x1x32xf32, #tpu.memory_space<vmem>>, %arg10: memref<1x1x32xf32, #tpu.memory_space<vmem>>, %arg11: memref<1x1x32xf32, #tpu.memory_space<vmem>>, %arg12: memref<2x9x32xf32, #tpu.memory_space<vmem>>, %arg13: memref<2x9x32xf32, #tpu.memory_space<vmem>>) attributes {dimension_semantics = [#tpu.dimension_semantics<parallel>, #tpu.dimension_semantics<arbitrary>], iteration_bounds = array<i64: 1, 2>, scalar_prefetch = 0 : i64, scratch_operands = 1 : i64, tpu.core_type = #tpu.core_type<tc>, window_params = [{transform_indices = @transform_0, window_bounds = array<i64: 2, 8, 32>}, {transform_indices = @transform_1, window_bounds = array<i64: 1, 32, 96>}, {transform_indices = @transform_2, window_bounds = array<i64: 1, 32, 32>}, {transform_indices = @transform_3, window_bounds = array<i64: 1, 1, 32>}, {transform_indices = @transform_4, window_bounds = array<i64: 1, 32, 64>}, {transform_indices = @transform_5, window_bounds = array<i64: 1, 1, 64>}, {transform_indices = @transform_6, window_bounds = array<i64: 1, 64, 32>}, {transform_indices = @transform_7, window_bounds = array<i64: 1, 1, 32>}, {transform_indices = @transform_8, window_bounds = array<i64: 1, 1, 32>}, {transform_indices = @transform_9, window_bounds = array<i64: 1, 1, 32>}, {transform_indices = @transform_10, window_bounds = array<i64: 2, 9, 32>}]} {
    %c0_i32 = arith.constant 0 : i32
    %0 = arith.cmpi eq, %arg1, %c0_i32 : i32
    %1 = arith.extui %0 : i1 to i32
    %c0_i32_0 = arith.constant 0 : i32
    %2 = arith.cmpi ne, %1, %c0_i32_0 : i32
    scf.if %2 {
      %c0_48 = arith.constant 0 : index
      %c0_49 = arith.constant 0 : index
      %c0_50 = arith.constant 0 : index
      %101 = vector.load %arg2[%c0_48, %c0_49, %c0_50] : memref<2x8x32xf32, #tpu.memory_space<vmem>>, vector<2x8x32xf32>
      %cst_51 = arith.constant dense<0.000000e+00> : vector<2x32xf32>
      %102 = vector.multi_reduction <add>, %101, %cst_51 [1] : vector<2x8x32xf32> to vector<2x32xf32>
      %103 = vector.shape_cast %102 : vector<2x32xf32> to vector<2x1x32xf32>
      %cst_52 = arith.constant 8.000000e+00 : f32
      %104 = vector.broadcast %cst_52 : f32 to vector<2x1x32xf32>
      %105 = arith.divf %103, %104 : vector<2x1x32xf32>
      %c0_53 = arith.constant 0 : index
      %c0_54 = arith.constant 0 : index
      %c0_55 = arith.constant 0 : index
      %106 = vector.load %arg13[%c0_53, %c0_54, %c0_55] : memref<2x9x32xf32, #tpu.memory_space<vmem>>, vector<2x1x32xf32>
      tpu.vector_store %arg13[%c0_53, %c0_54, %c0_55], %105 {strides = array<i32>} : memref<2x9x32xf32, #tpu.memory_space<vmem>>, vector<2x1x32xf32>,
      %c0_56 = arith.constant 0 : index
      %c1 = arith.constant 1 : index
      %c0_57 = arith.constant 0 : index
      %107 = vector.load %arg13[%c0_56, %c1, %c0_57] : memref<2x9x32xf32, #tpu.memory_space<vmem>>, vector<2x8x32xf32>
      tpu.vector_store %arg13[%c0_56, %c1, %c0_57], %101 {strides = array<i32>} : memref<2x9x32xf32, #tpu.memory_space<vmem>>, vector<2x8x32xf32>,
    } else {
    }
    %c0 = arith.constant 0 : index
    %c0_1 = arith.constant 0 : index
    %c0_2 = arith.constant 0 : index
    %3 = vector.load %arg13[%c0, %c0_1, %c0_2] : memref<2x9x32xf32, #tpu.memory_space<vmem>>, vector<2x9x32xf32>
    %4 = vector.shape_cast %3 : vector<2x9x32xf32> to vector<18x32xf32>
    %5 = arith.truncf %4 : vector<18x32xf32> to vector<18x32xbf16>
    %c0_3 = arith.constant 0 : index
    %c0_4 = arith.constant 0 : index
    %c0_5 = arith.constant 0 : index
    %6 = vector.load %arg3[%c0_3, %c0_4, %c0_5] : memref<1x32x96xbf16, #tpu.memory_space<vmem>>, vector<1x32x96xbf16>
    %7 = vector.shape_cast %6 : vector<1x32x96xbf16> to vector<32x96xbf16>
    %cst = arith.constant dense<0.000000e+00> : vector<18x96xf32>
    %8 = tpu.matmul %5, %7, %cst {dimension_numbers = #tpu.dot_dimension_numbers<[1], [0], [0], [1], [0, 0, 1, 1], [], []>} : vector<18x32xbf16>, vector<32x96xbf16>, vector<18x96xf32> -> vector<18x96xf32>
    %9 = vector.extract_strided_slice %8 {offsets = [0, 0], sizes = [18, 32], strides = [1, 1]} : vector<18x96xf32> to vector<18x32xf32>
    %cst_6 = arith.constant 2.500000e-01 : f32
    %10 = vector.broadcast %cst_6 : f32 to vector<18x32xf32>
    %11 = arith.mulf %9, %10 : vector<18x32xf32>
    %12 = vector.extract_strided_slice %8 {offsets = [0, 32], sizes = [18, 32], strides = [1, 1]} : vector<18x96xf32> to vector<18x32xf32>
    %13 = vector.extract_strided_slice %8 {offsets = [0, 64], sizes = [18, 32], strides = [1, 1]} : vector<18x96xf32> to vector<18x32xf32>
    %14 = vector.shape_cast %11 : vector<18x32xf32> to vector<2x9x2x16xf32>
    %15 = tpu.transpose %14, [0, 2, 1, 3] : vector<2x9x2x16xf32> -> vector<2x2x9x16xf32>
    %16 = vector.shape_cast %15 : vector<2x2x9x16xf32> to vector<4x9x16xf32>
    %17 = arith.truncf %16 : vector<4x9x16xf32> to vector<4x9x16xbf16>
    %18 = vector.shape_cast %12 : vector<18x32xf32> to vector<2x9x2x16xf32>
    %19 = tpu.transpose %18, [0, 2, 1, 3] : vector<2x9x2x16xf32> -> vector<2x2x9x16xf32>
    %20 = vector.shape_cast %19 : vector<2x2x9x16xf32> to vector<4x9x16xf32>
    %21 = arith.truncf %20 : vector<4x9x16xf32> to vector<4x9x16xbf16>
    %22 = vector.shape_cast %13 : vector<18x32xf32> to vector<2x9x2x16xf32>
    %23 = tpu.transpose %22, [0, 2, 1, 3] : vector<2x9x2x16xf32> -> vector<2x2x9x16xf32>
    %24 = vector.shape_cast %23 : vector<2x2x9x16xf32> to vector<4x9x16xf32>
    %25 = arith.truncf %24 : vector<4x9x16xf32> to vector<4x9x16xbf16>
    "tpu.trace_start"() <{level = 10 : i32, message = "bqd,bkd->bqk"}> : () -> ()
    %cst_7 = arith.constant dense<0.000000e+00> : vector<4x9x9xf32>
    %26 = tpu.matmul %17, %21, %cst_7 {dimension_numbers = #tpu.dot_dimension_numbers<[2], [2], [1], [1], [0, 0, 0, 1, 1, 1], [0], [0]>} : vector<4x9x16xbf16>, vector<4x9x16xbf16>, vector<4x9x9xf32> -> vector<4x9x9xf32>
    "tpu.trace_stop"() : () -> ()
    %cst_8 = arith.constant dense<0xFF800000> : vector<4x9xf32>
    %27 = vector.multi_reduction <maximumf>, %26, %cst_8 [2] : vector<4x9x9xf32> to vector<4x9xf32>
    %28 = vector.shape_cast %27 : vector<4x9xf32> to vector<4x9x1xf32>
    %29 = vector.broadcast %28 : vector<4x9x1xf32> to vector<4x9x9xf32>
    %30 = arith.subf %26, %29 : vector<4x9x9xf32>
    %31 = math.exp %30 : vector<4x9x9xf32>
    %cst_9 = arith.constant dense<0.000000e+00> : vector<4x9xf32>
    %32 = vector.multi_reduction <add>, %31, %cst_9 [2] : vector<4x9x9xf32> to vector<4x9xf32>
    %33 = vector.shape_cast %32 : vector<4x9xf32> to vector<4x9x1xf32>
    %34 = tpu.reciprocal %33 {approx = true} : vector<4x9x1xf32> -> vector<4x9x1xf32>
    %35 = vector.broadcast %34 : vector<4x9x1xf32> to vector<4x9x9xf32>
    %36 = arith.mulf %31, %35 : vector<4x9x9xf32>
    %37 = arith.truncf %36 : vector<4x9x9xf32> to vector<4x9x9xbf16>
    "tpu.trace_start"() <{level = 10 : i32, message = "bqk,bkd->bqd"}> : () -> ()
    %cst_10 = arith.constant dense<0.000000e+00> : vector<4x9x16xf32>
    %38 = tpu.matmul %37, %25, %cst_10 {dimension_numbers = #tpu.dot_dimension_numbers<[2], [1], [1], [2], [0, 0, 0, 1, 1, 2], [0], [0]>} : vector<4x9x9xbf16>, vector<4x9x16xbf16>, vector<4x9x16xf32> -> vector<4x9x16xf32>
    "tpu.trace_stop"() : () -> ()
    %39 = vector.shape_cast %38 : vector<4x9x16xf32> to vector<2x2x9x16xf32>
    %40 = tpu.transpose %39, [0, 2, 1, 3] : vector<2x2x9x16xf32> -> vector<2x9x2x16xf32>
    %41 = vector.shape_cast %40 : vector<2x9x2x16xf32> to vector<18x32xf32>
    %42 = arith.truncf %41 : vector<18x32xf32> to vector<18x32xbf16>
    %c0_11 = arith.constant 0 : index
    %c0_12 = arith.constant 0 : index
    %c0_13 = arith.constant 0 : index
    %43 = vector.load %arg4[%c0_11, %c0_12, %c0_13] : memref<1x32x32xbf16, #tpu.memory_space<vmem>>, vector<1x32x32xbf16>
    %44 = vector.shape_cast %43 : vector<1x32x32xbf16> to vector<32x32xbf16>
    %cst_14 = arith.constant dense<0.000000e+00> : vector<18x32xf32>
    %45 = tpu.matmul %42, %44, %cst_14 {dimension_numbers = #tpu.dot_dimension_numbers<[1], [0], [0], [1], [0, 0, 1, 1], [], []>} : vector<18x32xbf16>, vector<32x32xbf16>, vector<18x32xf32> -> vector<18x32xf32>
    %c0_15 = arith.constant 0 : index
    %c0_16 = arith.constant 0 : index
    %c0_17 = arith.constant 0 : index
    %46 = vector.load %arg5[%c0_15, %c0_16, %c0_17] : memref<1x1x32xf32, #tpu.memory_space<vmem>>, vector<1x1x32xf32>
    %47 = vector.shape_cast %46 : vector<1x1x32xf32> to vector<1x32xf32>
    %48 = vector.broadcast %47 : vector<1x32xf32> to vector<18x32xf32>
    %49 = arith.addf %45, %48 : vector<18x32xf32>
    %50 = arith.addf %49, %4 : vector<18x32xf32>
    %51 = arith.truncf %50 : vector<18x32xf32> to vector<18x32xbf16>
    %c0_18 = arith.constant 0 : index
    %c0_19 = arith.constant 0 : index
    %c0_20 = arith.constant 0 : index
    %52 = vector.load %arg6[%c0_18, %c0_19, %c0_20] : memref<1x32x64xbf16, #tpu.memory_space<vmem>>, vector<1x32x64xbf16>
    %53 = vector.shape_cast %52 : vector<1x32x64xbf16> to vector<32x64xbf16>
    %cst_21 = arith.constant dense<0.000000e+00> : vector<18x64xf32>
    %54 = tpu.matmul %51, %53, %cst_21 {dimension_numbers = #tpu.dot_dimension_numbers<[1], [0], [0], [1], [0, 0, 1, 1], [], []>} : vector<18x32xbf16>, vector<32x64xbf16>, vector<18x64xf32> -> vector<18x64xf32>
    %c0_22 = arith.constant 0 : index
    %c0_23 = arith.constant 0 : index
    %c0_24 = arith.constant 0 : index
    %55 = vector.load %arg7[%c0_22, %c0_23, %c0_24] : memref<1x1x64xf32, #tpu.memory_space<vmem>>, vector<1x1x64xf32>
    %56 = vector.shape_cast %55 : vector<1x1x64xf32> to vector<1x64xf32>
    %57 = vector.broadcast %56 : vector<1x64xf32> to vector<18x64xf32>
    %58 = arith.addf %54, %57 : vector<18x64xf32>
    %cst_25 = arith.constant 0.000000e+00 : f32
    %59 = vector.broadcast %cst_25 : f32 to vector<18x64xf32>
    %60 = arith.maximumf %58, %59 : vector<18x64xf32>
    %61 = arith.truncf %60 : vector<18x64xf32> to vector<18x64xbf16>
    %c0_26 = arith.constant 0 : index
    %c0_27 = arith.constant 0 : index
    %c0_28 = arith.constant 0 : index
    %62 = vector.load %arg8[%c0_26, %c0_27, %c0_28] : memref<1x64x32xbf16, #tpu.memory_space<vmem>>, vector<1x64x32xbf16>
    %63 = vector.shape_cast %62 : vector<1x64x32xbf16> to vector<64x32xbf16>
    %cst_29 = arith.constant dense<0.000000e+00> : vector<18x32xf32>
    %64 = tpu.matmul %61, %63, %cst_29 {dimension_numbers = #tpu.dot_dimension_numbers<[1], [0], [0], [1], [0, 0, 1, 1], [], []>} : vector<18x64xbf16>, vector<64x32xbf16>, vector<18x32xf32> -> vector<18x32xf32>
    %c0_30 = arith.constant 0 : index
    %c0_31 = arith.constant 0 : index
    %c0_32 = arith.constant 0 : index
    %65 = vector.load %arg9[%c0_30, %c0_31, %c0_32] : memref<1x1x32xf32, #tpu.memory_space<vmem>>, vector<1x1x32xf32>
    %66 = vector.shape_cast %65 : vector<1x1x32xf32> to vector<1x32xf32>
    %67 = vector.broadcast %66 : vector<1x32xf32> to vector<18x32xf32>
    %68 = arith.addf %64, %67 : vector<18x32xf32>
    %69 = arith.addf %68, %50 : vector<18x32xf32>
    %cst_33 = arith.constant dense<0.000000e+00> : vector<18xf32>
    %70 = vector.multi_reduction <add>, %69, %cst_33 [1] : vector<18x32xf32> to vector<18xf32>
    %71 = vector.shape_cast %70 : vector<18xf32> to vector<18x1xf32>
    %cst_34 = arith.constant 3.200000e+01 : f32
    %72 = vector.broadcast %cst_34 : f32 to vector<18x1xf32>
    %73 = arith.divf %71, %72 : vector<18x1xf32>
    %74 = vector.broadcast %73 : vector<18x1xf32> to vector<18x32xf32>
    %75 = arith.subf %69, %74 : vector<18x32xf32>
    %76 = arith.mulf %75, %75 : vector<18x32xf32>
    %cst_35 = arith.constant dense<0.000000e+00> : vector<18xf32>
    %77 = vector.multi_reduction <add>, %76, %cst_35 [1] : vector<18x32xf32> to vector<18xf32>
    %78 = vector.shape_cast %77 : vector<18xf32> to vector<18x1xf32>
    %cst_36 = arith.constant 3.200000e+01 : f32
    %79 = vector.broadcast %cst_36 : f32 to vector<18x1xf32>
    %80 = arith.divf %78, %79 : vector<18x1xf32>
    %81 = vector.broadcast %73 : vector<18x1xf32> to vector<18x32xf32>
    %82 = arith.subf %69, %81 : vector<18x32xf32>
    %cst_37 = arith.constant 9.99999997E-7 : f32
    %83 = vector.broadcast %cst_37 : f32 to vector<18x1xf32>
    %84 = arith.addf %80, %83 : vector<18x1xf32>
    %85 = math.rsqrt %84 : vector<18x1xf32>
    %86 = vector.broadcast %85 : vector<18x1xf32> to vector<18x32xf32>
    %87 = arith.mulf %82, %86 : vector<18x32xf32>
    %c0_38 = arith.constant 0 : index
    %c0_39 = arith.constant 0 : index
    %c0_40 = arith.constant 0 : index
    %88 = vector.load %arg10[%c0_38, %c0_39, %c0_40] : memref<1x1x32xf32, #tpu.memory_space<vmem>>, vector<1x1x32xf32>
    %89 = vector.shape_cast %88 : vector<1x1x32xf32> to vector<1x32xf32>
    %90 = vector.broadcast %89 : vector<1x32xf32> to vector<18x32xf32>
    %91 = arith.mulf %87, %90 : vector<18x32xf32>
    %c0_41 = arith.constant 0 : index
    %c0_42 = arith.constant 0 : index
    %c0_43 = arith.constant 0 : index
    %92 = vector.load %arg11[%c0_41, %c0_42, %c0_43] : memref<1x1x32xf32, #tpu.memory_space<vmem>>, vector<1x1x32xf32>
    %93 = vector.shape_cast %92 : vector<1x1x32xf32> to vector<1x32xf32>
    %94 = vector.broadcast %93 : vector<1x32xf32> to vector<18x32xf32>
    %95 = arith.addf %91, %94 : vector<18x32xf32>
    %96 = vector.shape_cast %95 : vector<18x32xf32> to vector<2x9x32xf32>
    %c0_44 = arith.constant 0 : index
    %c0_45 = arith.constant 0 : index
    %c0_46 = arith.constant 0 : index
    %97 = vector.load %arg13[%c0_44, %c0_45, %c0_46] : memref<2x9x32xf32, #tpu.memory_space<vmem>>, vector<2x9x32xf32>
    tpu.vector_store %arg13[%c0_44, %c0_45, %c0_46], %96 {strides = array<i32>} : memref<2x9x32xf32, #tpu.memory_space<vmem>>, vector<2x9x32xf32>,
    %c1_i32 = arith.constant 1 : i32
    %98 = arith.cmpi eq, %arg1, %c1_i32 : i32
    %99 = arith.extui %98 : i1 to i32
    %c0_i32_47 = arith.constant 0 : i32
    %100 = arith.cmpi ne, %99, %c0_i32_47 : i32
    scf.if %100 {
      %c0_48 = arith.constant 0 : index
      %c0_49 = arith.constant 0 : index
      %c0_50 = arith.constant 0 : index
      %101 = vector.load %arg12[%c0_48, %c0_49, %c0_50] : memref<2x9x32xf32, #tpu.memory_space<vmem>>, vector<2x9x32xf32>
      tpu.vector_store %arg12[%c0_48, %c0_49, %c0_50], %96 {strides = array<i32>} : memref<2x9x32xf32, #tpu.memory_space<vmem>>, vector<2x9x32xf32>,
    } else {
    }
    return
  }
  func.func @transform_0(%arg0: i32, %arg1: i32) -> (i32, i32, i32) {
    %c0_i32 = arith.constant 0 : i32
    %c0_i32_0 = arith.constant 0 : i32
    %c0_i32_1 = arith.constant 0 : i32
    return %arg0, %c0_i32, %c0_i32_0 : i32, i32, i32
  }
  func.func @transform_1(%arg0: i32, %arg1: i32) -> (i32, i32, i32) {
    %c0_i32 = arith.constant 0 : i32
    %c0_i32_0 = arith.constant 0 : i32
    %c0_i32_1 = arith.constant 0 : i32
    return %arg1, %c0_i32, %c0_i32_0 : i32, i32, i32
  }
  func.func @transform_2(%arg0: i32, %arg1: i32) -> (i32, i32, i32) {
    %c0_i32 = arith.constant 0 : i32
    %c0_i32_0 = arith.constant 0 : i32
    %c0_i32_1 = arith.constant 0 : i32
    return %arg1, %c0_i32, %c0_i32_0 : i32, i32, i32
  }
  func.func @transform_3(%arg0: i32, %arg1: i32) -> (i32, i32, i32) {
    %c0_i32 = arith.constant 0 : i32
    %c0_i32_0 = arith.constant 0 : i32
    %c0_i32_1 = arith.constant 0 : i32
    return %arg1, %c0_i32, %c0_i32_0 : i32, i32, i32
  }
  func.func @transform_4(%arg0: i32, %arg1: i32) -> (i32, i32, i32) {
    %c0_i32 = arith.constant 0 : i32
    %c0_i32_0 = arith.constant 0 : i32
    %c0_i32_1 = arith.constant 0 : i32
    return %arg1, %c0_i32, %c0_i32_0 : i32, i32, i32
  }
  func.func @transform_5(%arg0: i32, %arg1: i32) -> (i32, i32, i32) {
    %c0_i32 = arith.constant 0 : i32
    %c0_i32_0 = arith.constant 0 : i32
    %c0_i32_1 = arith.constant 0 : i32
    return %arg1, %c0_i32, %c0_i32_0 : i32, i32, i32
  }
  func.func @transform_6(%arg0: i32, %arg1: i32) -> (i32, i32, i32) {
    %c0_i32 = arith.constant 0 : i32
    %c0_i32_0 = arith.constant 0 : i32
    %c0_i32_1 = arith.constant 0 : i32
    return %arg1, %c0_i32, %c0_i32_0 : i32, i32, i32
  }
  func.func @transform_7(%arg0: i32, %arg1: i32) -> (i32, i32, i32) {
    %c0_i32 = arith.constant 0 : i32
    %c0_i32_0 = arith.constant 0 : i32
    %c0_i32_1 = arith.constant 0 : i32
    return %arg1, %c0_i32, %c0_i32_0 : i32, i32, i32
  }
  func.func @transform_8(%arg0: i32, %arg1: i32) -> (i32, i32, i32) {
    %c0_i32 = arith.constant 0 : i32
    %c0_i32_0 = arith.constant 0 : i32
    %c0_i32_1 = arith.constant 0 : i32
    return %arg1, %c0_i32, %c0_i32_0 : i32, i32, i32
  }
  func.func @transform_9(%arg0: i32, %arg1: i32) -> (i32, i32, i32) {
    %c0_i32 = arith.constant 0 : i32
    %c0_i32_0 = arith.constant 0 : i32
    %c0_i32_1 = arith.constant 0 : i32
    return %arg1, %c0_i32, %c0_i32_0 : i32, i32, i32
  }
  func.func @transform_10(%arg0: i32, %arg1: i32) -> (i32, i32, i32) {
    %c0_i32 = arith.constant 0 : i32
    %c0_i32_0 = arith.constant 0 : i32
    %c0_i32_1 = arith.constant 0 : i32
    return %arg0, %c0_i32, %c0_i32_0 : i32, i32, i32
  }
}

</mosaic_0001>

<llo_original>
// kernel: tpu_custom_call.1
$region0: #{tpu_custom_call.1}
  #allocation0 [shape = 'u32[]', space=smem, size = 0x4, offset = 0x4, fixed_abs, tag = 'smem constant byte address 0x4 - core index']
  #allocation1 [shape = 'u32[144,128]{1,0:T(1,128)}', space=vmem, size = 0x12000, scoped, tag = 'internal scratch']
  #allocation2 [shape = 'f32[2,9,32]{2,1,0:T(8,128)}', space=vmem, size = 0x4000, scoped, tag = 'scratch operand']
  %s0 = inlined_call_operand.hbm [shape: f32[2,8,32], index: 0, kind: input, shape index: {}]
  %s1 = inlined_call_operand.hbm [shape: bf16[2,32,96], index: 1, kind: input, shape index: {}]
  %s2 = inlined_call_operand.hbm [shape: bf16[2,32,32], index: 2, kind: input, shape index: {}]
  %s3 = inlined_call_operand.hbm [shape: f32[2,1,32], index: 3, kind: input, shape index: {}]
  %s4 = inlined_call_operand.hbm [shape: bf16[2,32,64], index: 4, kind: input, shape index: {}]
  %s5 = inlined_call_operand.hbm [shape: f32[2,1,64], index: 5, kind: input, shape index: {}]
  %s6 = inlined_call_operand.hbm [shape: bf16[2,64,32], index: 6, kind: input, shape index: {}]
  %s7 = inlined_call_operand.hbm [shape: f32[2,1,32], index: 7, kind: input, shape index: {}]
  %s8 = inlined_call_operand.hbm [shape: f32[2,1,32], index: 8, kind: input, shape index: {}]
  %s9 = inlined_call_operand.hbm [shape: f32[2,1,32], index: 9, kind: input, shape index: {}]
  %s10 = inlined_call_operand.hbm [shape: f32[2,9,32], index: 10, kind: output, shape index: {}]
  %s11 = sld [smem:[#allocation0]]
  $region121: #{tpu_custom_call.1} parent=0
    _
  %s13 = ssub.s32 1, %s11
  %s14 = scalar_select 0, %s13, %s11
  $region1: #{tpu_custom_call.1} parent=0
    #allocation3 [shape = 'u8[8192]{0}', space=vmem, size = 0x2000, scoped, tag = 'input window, operand 0, single buffered']
    #allocation4 [shape = 's32[2]{0}', space=sflag, size = 0x8, scoped, tag = 'scoped memory for tpu_custom_call.1']
    #allocation5 [shape = 's32[2]{0}', space=sflag, size = 0x8, scoped, tag = 'scoped memory for tpu_custom_call.1']
    #allocation6 [shape = 'u8[16384]{0}', space=vmem, size = 0x4000, scoped, tag = 'input window, operand 1']
    #allocation7 [shape = 's32[2]{0}', space=sflag, size = 0x8, scoped, tag = 'scoped memory for tpu_custom_call.1']
    #allocation8 [shape = 'u8[16384]{0}', space=vmem, size = 0x4000, scoped, tag = 'input window, operand 2']
    #allocation9 [shape = 'u8[1024]{0}', space=vmem, size = 0x400, scoped, tag = 'input window, operand 3']
    #allocation10 [shape = 's32[2]{0}', space=sflag, size = 0x8, scoped, tag = 'scoped memory for tpu_custom_call.1']
    #allocation11 [shape = 'u8[16384]{0}', space=vmem, size = 0x4000, scoped, tag = 'input window, operand 4']
    #allocation12 [shape = 'u8[1024]{0}', space=vmem, size = 0x400, scoped, tag = 'input window, operand 5']
    #allocation13 [shape = 's32[2]{0}', space=sflag, size = 0x8, scoped, tag = 'scoped memory for tpu_custom_call.1']
    #allocation14 [shape = 'u8[32768]{0}', space=vmem, size = 0x8000, scoped, tag = 'input window, operand 6']
    #allocation15 [shape = 'u8[1024]{0}', space=vmem, size = 0x400, scoped, tag = 'input window, operand 7']
    #allocation16 [shape = 's32[2]{0}', space=sflag, size = 0x8, scoped, tag = 'scoped memory for tpu_custom_call.1']
    #allocation17 [shape = 'u8[1024]{0}', space=vmem, size = 0x400, scoped, tag = 'input window, operand 8']
    #allocation18 [shape = 'u8[1024]{0}', space=vmem, size = 0x400, scoped, tag = 'input window, operand 9']
    #allocation19 [shape = 's32[2]{0}', space=sflag, size = 0x8, scoped, tag = 'scoped memory for tpu_custom_call.1']
    #allocation20 [shape = 'u8[16384]{0}', space=vmem, size = 0x4000, scoped, tag = 'output window, operand 0, single buffered']
    %15 = vsyncpa [#allocation4], 0
    %16 = vsyncpa [#allocation7], 0
    %s17 = scalar_lea.sflag [#allocation7], 1
    %18 = vsyncpa %s17, 0
    %19 = vsyncpa [#allocation10], 0
    %s20 = scalar_lea.sflag [#allocation10], 1
    %21 = vsyncpa %s20, 0
    %22 = vsyncpa [#allocation13], 0
    %s23 = scalar_lea.sflag [#allocation13], 1
    %24 = vsyncpa %s23, 0
    %25 = vsyncpa [#allocation16], 0
    %s26 = scalar_lea.sflag [#allocation16], 1
    %27 = vsyncpa %s26, 0
    %28 = vsyncpa [#allocation19], 0
    %s29 = scalar_lea.sflag [#allocation19], 1
    %30 = vsyncpa %s29, 0
    %31 = vsyncpa [#allocation5], 0
    loop: start=0, step=1, limit=4
    $region2: #{tpu_custom_call.1} parent=1 // loop_pre_header
      _
    $region3: #{tpu_custom_call.1} parent=1 // loop_header
      %s33 = sphi 0, %s37
      %p34 = scmp.ge.s32.totalorder %s33, 4
      %s40 = sphi 0, %s52
      %s41 = sphi 0, %s48
      %s42 = sphi 0, %s40
      %s43 = sphi 0, %s41
      %s44 = sphi 0, %s42
      %s45 = sphi 0, %s43
      %s55 = sphi 0, %s57
      %s58 = sphi 0, %s55
      %s59 = sphi 0, %s58
      %s75 = sphi 0, %s59
      %s81 = sphi 0, %s83
      %s84 = sphi 0, %s81
      %s85 = sphi 0, %s84
      %s101 = sphi 0, %s85
      %s107 = sphi 0, %s109
      %s110 = sphi 0, %s107
      %s111 = sphi 0, %s110
      %s127 = sphi 0, %s111
      %s133 = sphi 0, %s135
      %s136 = sphi 0, %s133
      %s137 = sphi 0, %s136
      %s153 = sphi 0, %s137
      %s159 = sphi 0, %s161
      %s162 = sphi 0, %s159
      %s163 = sphi 0, %s162
      %s179 = sphi 0, %s163
      %s185 = sphi 0, %s187
      %s188 = sphi 0, %s185
      %s189 = sphi 0, %s188
      %s205 = sphi 0, %s189
      %s211 = sphi 0, %s213
      %s214 = sphi 0, %s211
      %s215 = sphi 0, %s214
      %s231 = sphi 0, %s215
      %s237 = sphi 0, %s239
      %s240 = sphi 0, %s237
      %s241 = sphi 0, %s240
      %s257 = sphi 0, %s241
      %s263 = sphi 0, %s265
      %s266 = sphi 0, %s263
      %s267 = sphi 0, %s266
      %s283 = sphi 0, %s267
      %s289 = sphi 0, %s291
      %s292 = sphi 0, %s289
      %s293 = sphi 0, %s292
      %s309 = sphi 0, %s293
      %s315 = sphi 0, %s317
      %s318 = sphi 0, %s315
      %s319 = sphi 0, %s318
      %s335 = sphi 0, %s319
    $region4: #{tpu_custom_call.1} parent=1 // loop_header_branch
      %36 = sbr.rel (%p34) target = $region8
    $region5: #{tpu_custom_call.1} parent=1 // loop_body
      %s38 = ssub.s32 %s33, 1
      %s39 = ssub.s32 %s33, 2
      %s46 = sadd.s32 1, %s41
      %p47 = scmp.ge.s32.totalorder %s46, 2
      %s48 = scalar_select %p47, 0, %s46
      %s49 = sadd.s32 1, %s40
      %s50 = scalar_select %p47, %s49, %s40
      %p51 = scmp.ge.s32.totalorder %s50, 1
      %s52 = scalar_select %p51, 0, %s50
      %s53 = ssub.s32 %s40, %s52
      %p54 = scmp.eq.s32.totalorder %s53, 0
      %s56 = sadd.s32 %s55, 1
      %s57 = scalar_select %p54, %s55, %s56
      %p60 = pneg %p54
      %p61 = scmp.eq.s32.totalorder %s33, 1
      %p62 = por %p60, %p61
      %p63 = scmp.ne.s32.totalorder %s55, %s58
      %p64 = scmp.eq.s32.totalorder %s33, 0
      %p65 = por %p63, %p64
      %p66 = scmp.ne.s32.totalorder %s55, %s58
      %p67 = scmp.eq.s32.totalorder %s38, 1
      %p68 = por %p66, %p67
      %p69 = scmp.ne.s32.totalorder %s58, %s59
      %p70 = scmp.eq.s32.totalorder %s38, 0
      %p71 = por %p69, %p70
      %p72 = scmp.ne.s32.totalorder %s58, %s59
      %p73 = scmp.eq.s32.totalorder %s39, 1
      %p74 = por %p72, %p73
      %p76 = scmp.ne.s32.totalorder %s59, %s75
      %p77 = scmp.eq.s32.totalorder %s39, 0
      %p78 = por %p76, %p77
      %s79 = ssub.s32 %s41, %s48
      %p80 = scmp.eq.s32.totalorder %s79, 0
      %s82 = sadd.s32 %s81, 1
      %s83 = scalar_select %p80, %s81, %s82
      %p86 = pneg %p80
      %p87 = scmp.eq.s32.totalorder %s33, 1
      %p88 = por %p86, %p87
      %p89 = scmp.ne.s32.totalorder %s81, %s84
      %p90 = scmp.eq.s32.totalorder %s33, 0
      %p91 = por %p89, %p90
      %p92 = scmp.ne.s32.totalorder %s81, %s84
      %p93 = scmp.eq.s32.totalorder %s38, 1
      %p94 = por %p92, %p93
      %p95 = scmp.ne.s32.totalorder %s84, %s85
      %p96 = scmp.eq.s32.totalorder %s38, 0
      %p97 = por %p95, %p96
      %p98 = scmp.ne.s32.totalorder %s84, %s85
      %p99 = scmp.eq.s32.totalorder %s39, 1
      %p100 = por %p98, %p99
      %p102 = scmp.ne.s32.totalorder %s85, %s101
      %p103 = scmp.eq.s32.totalorder %s39, 0
      %p104 = por %p102, %p103
      %s105 = ssub.s32 %s41, %s48
      %p106 = scmp.eq.s32.totalorder %s105, 0
      %s108 = sadd.s32 %s107, 1
      %s109 = scalar_select %p106, %s107, %s108
      %p112 = pneg %p106
      %p113 = scmp.eq.s32.totalorder %s33, 1
      %p114 = por %p112, %p113
      %p115 = scmp.ne.s32.totalorder %s107, %s110
      %p116 = scmp.eq.s32.totalorder %s33, 0
      %p117 = por %p115, %p116
      %p118 = scmp.ne.s32.totalorder %s107, %s110
      %p119 = scmp.eq.s32.totalorder %s38, 1
      %p120 = por %p118, %p119
      %p121 = scmp.ne.s32.totalorder %s110, %s111
      %p122 = scmp.eq.s32.totalorder %s38, 0
      %p123 = por %p121, %p122
      %p124 = scmp.ne.s32.totalorder %s110, %s111
      %p125 = scmp.eq.s32.totalorder %s39, 1
      %p126 = por %p124, %p125
      %p128 = scmp.ne.s32.totalorder %s111, %s127
      %p129 = scmp.eq.s32.totalorder %s39, 0
      %p130 = por %p128, %p129
      %s131 = ssub.s32 %s41, %s48
      %p132 = scmp.eq.s32.totalorder %s131, 0
      %s134 = sadd.s32 %s133, 1
      %s135 = scalar_select %p132, %s133, %s134
      %p138 = pneg %p132
      %p139 = scmp.eq.s32.totalorder %s33, 1
      %p140 = por %p138, %p139
      %p141 = scmp.ne.s32.totalorder %s133, %s136
      %p142 = scmp.eq.s32.totalorder %s33, 0
      %p143 = por %p141, %p142
      %p144 = scmp.ne.s32.totalorder %s133, %s136
      %p145 = scmp.eq.s32.totalorder %s38, 1
      %p146 = por %p144, %p145
      %p147 = scmp.ne.s32.totalorder %s136, %s137
      %p148 = scmp.eq.s32.totalorder %s38, 0
      %p149 = por %p147, %p148
      %p150 = scmp.ne.s32.totalorder %s136, %s137
      %p151 = scmp.eq.s32.totalorder %s39, 1
      %p152 = por %p150, %p151
      %p154 = scmp.ne.s32.totalorder %s137, %s153
      %p155 = scmp.eq.s32.totalorder %s39, 0
      %p156 = por %p154, %p155
      %s157 = ssub.s32 %s41, %s48
      %p158 = scmp.eq.s32.totalorder %s157, 0
      %s160 = sadd.s32 %s159, 1
      %s161 = scalar_select %p158, %s159, %s160
      %p164 = pneg %p158
      %p165 = scmp.eq.s32.totalorder %s33, 1
      %p166 = por %p164, %p165
      %p167 = scmp.ne.s32.totalorder %s159, %s162
      %p168 = scmp.eq.s32.totalorder %s33, 0
      %p169 = por %p167, %p168
      %p170 = scmp.ne.s32.totalorder %s159, %s162
      %p171 = scmp.eq.s32.totalorder %s38, 1
      %p172 = por %p170, %p171
      %p173 = scmp.ne.s32.totalorder %s162, %s163
      %p174 = scmp.eq.s32.totalorder %s38, 0
      %p175 = por %p173, %p174
      %p176 = scmp.ne.s32.totalorder %s162, %s163
      %p177 = scmp.eq.s32.totalorder %s39, 1
      %p178 = por %p176, %p177
      %p180 = scmp.ne.s32.totalorder %s163, %s179
      %p181 = scmp.eq.s32.totalorder %s39, 0
      %p182 = por %p180, %p181
      %s183 = ssub.s32 %s41, %s48
      %p184 = scmp.eq.s32.totalorder %s183, 0
      %s186 = sadd.s32 %s185, 1
      %s187 = scalar_select %p184, %s185, %s186
      %p190 = pneg %p184
      %p191 = scmp.eq.s32.totalorder %s33, 1
      %p192 = por %p190, %p191
      %p193 = scmp.ne.s32.totalorder %s185, %s188
      %p194 = scmp.eq.s32.totalorder %s33, 0
      %p195 = por %p193, %p194
      %p196 = scmp.ne.s32.totalorder %s185, %s188
      %p197 = scmp.eq.s32.totalorder %s38, 1
      %p198 = por %p196, %p197
      %p199 = scmp.ne.s32.totalorder %s188, %s189
      %p200 = scmp.eq.s32.totalorder %s38, 0
      %p201 = por %p199, %p200
      %p202 = scmp.ne.s32.totalorder %s188, %s189
      %p203 = scmp.eq.s32.totalorder %s39, 1
      %p204 = por %p202, %p203
      %p206 = scmp.ne.s32.totalorder %s189, %s205
      %p207 = scmp.eq.s32.totalorder %s39, 0
      %p208 = por %p206, %p207
      %s209 = ssub.s32 %s41, %s48
      %p210 = scmp.eq.s32.totalorder %s209, 0
      %s212 = sadd.s32 %s211, 1
      %s213 = scalar_select %p210, %s211, %s212
      %p216 = pneg %p210
      %p217 = scmp.eq.s32.totalorder %s33, 1
      %p218 = por %p216, %p217
      %p219 = scmp.ne.s32.totalorder %s211, %s214
      %p220 = scmp.eq.s32.totalorder %s33, 0
      %p221 = por %p219, %p220
      %p222 = scmp.ne.s32.totalorder %s211, %s214
      %p223 = scmp.eq.s32.totalorder %s38, 1
      %p224 = por %p222, %p223
      %p225 = scmp.ne.s32.totalorder %s214, %s215
      %p226 = scmp.eq.s32.totalorder %s38, 0
      %p227 = por %p225, %p226
      %p228 = scmp.ne.s32.totalorder %s214, %s215
      %p229 = scmp.eq.s32.totalorder %s39, 1
      %p230 = por %p228, %p229
      %p232 = scmp.ne.s32.totalorder %s215, %s231
      %p233 = scmp.eq.s32.totalorder %s39, 0
      %p234 = por %p232, %p233
      %s235 = ssub.s32 %s41, %s48
      %p236 = scmp.eq.s32.totalorder %s235, 0
      %s238 = sadd.s32 %s237, 1
      %s239 = scalar_select %p236, %s237, %s238
      %p242 = pneg %p236
      %p243 = scmp.eq.s32.totalorder %s33, 1
      %p244 = por %p242, %p243
      %p245 = scmp.ne.s32.totalorder %s237, %s240
      %p246 = scmp.eq.s32.totalorder %s33, 0
      %p247 = por %p245, %p246
      %p248 = scmp.ne.s32.totalorder %s237, %s240
      %p249 = scmp.eq.s32.totalorder %s38, 1
      %p250 = por %p248, %p249
      %p251 = scmp.ne.s32.totalorder %s240, %s241
      %p252 = scmp.eq.s32.totalorder %s38, 0
      %p253 = por %p251, %p252
      %p254 = scmp.ne.s32.totalorder %s240, %s241
      %p255 = scmp.eq.s32.totalorder %s39, 1
      %p256 = por %p254, %p255
      %p258 = scmp.ne.s32.totalorder %s241, %s257
      %p259 = scmp.eq.s32.totalorder %s39, 0
      %p260 = por %p258, %p259
      %s261 = ssub.s32 %s41, %s48
      %p262 = scmp.eq.s32.totalorder %s261, 0
      %s264 = sadd.s32 %s263, 1
      %s265 = scalar_select %p262, %s263, %s264
      %p268 = pneg %p262
      %p269 = scmp.eq.s32.totalorder %s33, 1
      %p270 = por %p268, %p269
      %p271 = scmp.ne.s32.totalorder %s263, %s266
      %p272 = scmp.eq.s32.totalorder %s33, 0
      %p273 = por %p271, %p272
      %p274 = scmp.ne.s32.totalorder %s263, %s266
      %p275 = scmp.eq.s32.totalorder %s38, 1
      %p276 = por %p274, %p275
      %p277 = scmp.ne.s32.totalorder %s266, %s267
      %p278 = scmp.eq.s32.totalorder %s38, 0
      %p279 = por %p277, %p278
      %p280 = scmp.ne.s32.totalorder %s266, %s267
      %p281 = scmp.eq.s32.totalorder %s39, 1
      %p282 = por %p280, %p281
      %p284 = scmp.ne.s32.totalorder %s267, %s283
      %p285 = scmp.eq.s32.totalorder %s39, 0
      %p286 = por %p284, %p285
      %s287 = ssub.s32 %s41, %s48
      %p288 = scmp.eq.s32.totalorder %s287, 0
      %s290 = sadd.s32 %s289, 1
      %s291 = scalar_select %p288, %s289, %s290
      %p294 = pneg %p288
      %p295 = scmp.eq.s32.totalorder %s33, 1
      %p296 = por %p294, %p295
      %p297 = scmp.ne.s32.totalorder %s289, %s292
      %p298 = scmp.eq.s32.totalorder %s33, 0
      %p299 = por %p297, %p298
      %p300 = scmp.ne.s32.totalorder %s289, %s292
      %p301 = scmp.eq.s32.totalorder %s38, 1
      %p302 = por %p300, %p301
      %p303 = scmp.ne.s32.totalorder %s292, %s293
      %p304 = scmp.eq.s32.totalorder %s38, 0
      %p305 = por %p303, %p304
      %p306 = scmp.ne.s32.totalorder %s292, %s293
      %p307 = scmp.eq.s32.totalorder %s39, 1
      %p308 = por %p306, %p307
      %p310 = scmp.ne.s32.totalorder %s293, %s309
      %p311 = scmp.eq.s32.totalorder %s39, 0
      %p312 = por %p310, %p311
      %s313 = ssub.s32 %s40, %s52
      %p314 = scmp.eq.s32.totalorder %s313, 0
      %s316 = sadd.s32 %s315, 1
      %s317 = scalar_select %p314, %s315, %s316
      %p320 = pneg %p314
      %p321 = scmp.eq.s32.totalorder %s33, 1
      %p322 = por %p320, %p321
      %p323 = scmp.ne.s32.totalorder %s315, %s318
      %p324 = scmp.eq.s32.totalorder %s33, 0
      %p325 = por %p323, %p324
      %p326 = scmp.ne.s32.totalorder %s315, %s318
      %p327 = scmp.eq.s32.totalorder %s38, 1
      %p328 = por %p326, %p327
      %p329 = scmp.ne.s32.totalorder %s318, %s319
      %p330 = scmp.eq.s32.totalorder %s38, 0
      %p331 = por %p329, %p330
      %p332 = scmp.ne.s32.totalorder %s318, %s319
      %p333 = scmp.eq.s32.totalorder %s39, 1
      %p334 = por %p332, %p333
      %p336 = scmp.ne.s32.totalorder %s319, %s335
      %p337 = scmp.eq.s32.totalorder %s39, 0
      %p338 = por %p336, %p337
      %p339 = scmp.le.s32.totalorder 1, %s33
      %p340 = scmp.lt.s32.totalorder %s33, 3
      %p341 = pnand %p339, %p340
      %p342 = pneg %p341
      // Predicated region
      $region9: #{tpu_custom_call.1} parent=5 // pred_check
        _
      $region10: #{tpu_custom_call.1} parent=5 // pred_check_branch
        %344 = sbr.rel (%p341) target = $region12
      $region11: #{tpu_custom_call.1} parent=5 // pred_region
        %s345 = ssub.s32 %s33, 1
        // Predicated region
        $region13: #{tpu_custom_call.1} parent=11 // pred_check
          %p346 = pneg %p71
        $region14: #{tpu_custom_call.1} parent=11 // pred_check_branch
          %348 = sbr.rel (%p346) target = $region16
        $region15: #{tpu_custom_call.1} parent=11 // pred_region
          %s349 = smul.u32 2, %s42
          %s351 = ssub.s32 256, 256
          %352 = vsyncadd [#allocation4], %s351
          %s353 = smul.addr %s349, 128
          %s354 = scalar_lea.hbm %s0, %s353
          %s355 = sshll.u32 [#allocation3], 4
          %s356 = int_to_ptr.vmem [resolvable:$true] %s355
          %361 = dma.hbm_to_vmem [thread:$0]  %s354, 256, %s356, [#allocation4], 128, 128, 8
        $region16: #{tpu_custom_call.1} parent=11 // pred_fallthru
          _
      $region12: #{tpu_custom_call.1} parent=5 // pred_fallthru
        _
      %p362 = scmp.lt.s32.totalorder %s33, 2
      // Predicated region
      $region17: #{tpu_custom_call.1} parent=5 // pred_check
        %p363 = pneg %p362
      $region18: #{tpu_custom_call.1} parent=5 // pred_check_branch
        %365 = sbr.rel (%p363) target = $region20
      $region19: #{tpu_custom_call.1} parent=5 // pred_region
        // Predicated region
        $region21: #{tpu_custom_call.1} parent=19 // pred_check
          %p366 = pneg %p91
        $region22: #{tpu_custom_call.1} parent=19 // pred_check_branch
          %368 = sbr.rel (%p366) target = $region24
        $region23: #{tpu_custom_call.1} parent=19 // pred_region
          %s369 = sand.u32 %s33, 1
          %s370 = scalar_lea.sflag [#allocation7], %s369
          %s371 = sand.u32 %s81, 1
          %s372 = smul.addr %s371, 16
          %s373 = scalar_lea.vmem [#allocation6], %s372
          %s375 = ssub.s32 256, 256
          %376 = vsyncadd %s370, %s375
          %s377 = smul.addr %s41, 4
          %s378 = smul.addr %s377, 64
          %s379 = scalar_lea.hbm %s1, %s378
          %s380 = sshll.u32 %s373, 4
          %s381 = int_to_ptr.vmem [resolvable:$true] %s380
          %386 = dma.hbm_to_vmem [thread:$0]  %s379, 256, %s381, %s370, 64, 64, 4
        $region24: #{tpu_custom_call.1} parent=19 // pred_fallthru
          _
        // Predicated region
        $region25: #{tpu_custom_call.1} parent=19 // pred_check
          %p387 = pneg %p117
        $region26: #{tpu_custom_call.1} parent=19 // pred_check_branch
          %389 = sbr.rel (%p387) target = $region28
        $region27: #{tpu_custom_call.1} parent=19 // pred_region
          %s390 = sand.u32 %s33, 1
          %s391 = scalar_lea.sflag [#allocation7], %s390
          %s392 = sand.u32 %s107, 1
          %s393 = smul.addr %s392, 16
          %s394 = scalar_lea.vmem [#allocation8], %s393
          %s396 = ssub.s32 256, 256
          %397 = vsyncadd %s391, %s396
          %s398 = smul.addr %s41, 4
          %s399 = smul.addr %s398, 64
          %s400 = scalar_lea.hbm %s2, %s399
          %s401 = sshll.u32 %s394, 4
          %s402 = int_to_ptr.vmem [resolvable:$true] %s401
          %407 = dma.hbm_to_vmem [thread:$0]  %s400, 256, %s402, %s391, 64, 64, 4
        $region28: #{tpu_custom_call.1} parent=19 // pred_fallthru
          _
        // Predicated region
        $region29: #{tpu_custom_call.1} parent=19 // pred_check
          %p408 = pneg %p143
        $region30: #{tpu_custom_call.1} parent=19 // pred_check_branch
          %410 = sbr.rel (%p408) target = $region32
        $region31: #{tpu_custom_call.1} parent=19 // pred_region
          %s411 = sand.u32 %s33, 1
          %s412 = scalar_lea.sflag [#allocation10], %s411
          %s413 = sand.u32 %s133, 1
          %s414 = scalar_lea.vmem [#allocation9], %s413
          %s416 = ssub.s32 16, 16
          %417 = vsyncadd %s412, %s416
          %s418 = smul.addr %s41, 16
          %s419 = scalar_lea.hbm %s3, %s418
          %s421 = sshll.u32 %s414, 4
          %s422 = int_to_ptr.vmem [resolvable:$true] %s421
          %424 = dma.hbm_to_vmem [thread:$0]  %s419, 16, %s422, %s412
        $region32: #{tpu_custom_call.1} parent=19 // pred_fallthru
          _
        // Predicated region
        $region33: #{tpu_custom_call.1} parent=19 // pred_check
          %p425 = pneg %p169
        $region34: #{tpu_custom_call.1} parent=19 // pred_check_branch
          %427 = sbr.rel (%p425) target = $region36
        $region35: #{tpu_custom_call.1} parent=19 // pred_region
          %s428 = sand.u32 %s33, 1
          %s429 = scalar_lea.sflag [#allocation10], %s428
          %s430 = sand.u32 %s159, 1
          %s431 = smul.addr %s430, 16
          %s432 = scalar_lea.vmem [#allocation11], %s431
          %s434 = ssub.s32 256, 256
          %435 = vsyncadd %s429, %s434
          %s436 = smul.addr %s41, 4
          %s437 = smul.addr %s436, 64
          %s438 = scalar_lea.hbm %s4, %s437
          %s439 = sshll.u32 %s432, 4
          %s440 = int_to_ptr.vmem [resolvable:$true] %s439
          %445 = dma.hbm_to_vmem [thread:$0]  %s438, 256, %s440, %s429, 64, 64, 4
        $region36: #{tpu_custom_call.1} parent=19 // pred_fallthru
          _
        // Predicated region
        $region37: #{tpu_custom_call.1} parent=19 // pred_check
          %p446 = pneg %p195
        $region38: #{tpu_custom_call.1} parent=19 // pred_check_branch
          %448 = sbr.rel (%p446) target = $region40
        $region39: #{tpu_custom_call.1} parent=19 // pred_region
          %s449 = sand.u32 %s33, 1
          %s450 = scalar_lea.sflag [#allocation13], %s449
          %s451 = sand.u32 %s185, 1
          %s452 = scalar_lea.vmem [#allocation12], %s451
          %s454 = ssub.s32 16, 16
          %455 = vsyncadd %s450, %s454
          %s456 = smul.addr %s41, 16
          %s457 = scalar_lea.hbm %s5, %s456
          %s459 = sshll.u32 %s452, 4
          %s460 = int_to_ptr.vmem [resolvable:$true] %s459
          %462 = dma.hbm_to_vmem [thread:$0]  %s457, 16, %s460, %s450
        $region40: #{tpu_custom_call.1} parent=19 // pred_fallthru
          _
        // Predicated region
        $region41: #{tpu_custom_call.1} parent=19 // pred_check
          %p463 = pneg %p221
        $region42: #{tpu_custom_call.1} parent=19 // pred_check_branch
          %465 = sbr.rel (%p463) target = $region44
        $region43: #{tpu_custom_call.1} parent=19 // pred_region
          %s466 = sand.u32 %s33, 1
          %s467 = scalar_lea.sflag [#allocation13], %s466
          %s468 = sand.u32 %s211, 1
          %s469 = smul.addr %s468, 32
          %s470 = scalar_lea.vmem [#allocation14], %s469
          %s472 = ssub.s32 512, 512
          %473 = vsyncadd %s467, %s472
          %s474 = smul.addr %s41, 8
          %s475 = smul.addr %s474, 64
          %s476 = scalar_lea.hbm %s6, %s475
          %s477 = sshll.u32 %s470, 4
          %s478 = int_to_ptr.vmem [resolvable:$true] %s477
          %483 = dma.hbm_to_vmem [thread:$0]  %s476, 512, %s478, %s467, 64, 64, 4
        $region44: #{tpu_custom_call.1} parent=19 // pred_fallthru
          _
        // Predicated region
        $region45: #{tpu_custom_call.1} parent=19 // pred_check
          %p484 = pneg %p247
        $region46: #{tpu_custom_call.1} parent=19 // pred_check_branch
          %486 = sbr.rel (%p484) target = $region48
        $region47: #{tpu_custom_call.1} parent=19 // pred_region
          %s487 = sand.u32 %s33, 1
          %s488 = scalar_lea.sflag [#allocation16], %s487
          %s489 = sand.u32 %s237, 1
          %s490 = scalar_lea.vmem [#allocation15], %s489
          %s492 = ssub.s32 16, 16
          %493 = vsyncadd %s488, %s492
          %s494 = smul.addr %s41, 16
          %s495 = scalar_lea.hbm %s7, %s494
          %s497 = sshll.u32 %s490, 4
          %s498 = int_to_ptr.vmem [resolvable:$true] %s497
          %500 = dma.hbm_to_vmem [thread:$0]  %s495, 16, %s498, %s488
        $region48: #{tpu_custom_call.1} parent=19 // pred_fallthru
          _
        // Predicated region
        $region49: #{tpu_custom_call.1} parent=19 // pred_check
          %p501 = pneg %p273
        $region50: #{tpu_custom_call.1} parent=19 // pred_check_branch
          %503 = sbr.rel (%p501) target = $region52
        $region51: #{tpu_custom_call.1} parent=19 // pred_region
          %s504 = sand.u32 %s33, 1
          %s505 = scalar_lea.sflag [#allocation16], %s504
          %s506 = sand.u32 %s263, 1
          %s507 = scalar_lea.vmem [#allocation17], %s506
          %s509 = ssub.s32 16, 16
          %510 = vsyncadd %s505, %s509
          %s511 = smul.addr %s41, 16
          %s512 = scalar_lea.hbm %s8, %s511
          %s514 = sshll.u32 %s507, 4
          %s515 = int_to_ptr.vmem [resolvable:$true] %s514
          %517 = dma.hbm_to_vmem [thread:$0]  %s512, 16, %s515, %s505
        $region52: #{tpu_custom_call.1} parent=19 // pred_fallthru
          _
        // Predicated region
        $region53: #{tpu_custom_call.1} parent=19 // pred_check
          %p518 = pneg %p299
        $region54: #{tpu_custom_call.1} parent=19 // pred_check_branch
          %520 = sbr.rel (%p518) target = $region56
        $region55: #{tpu_custom_call.1} parent=19 // pred_region
          %s521 = sand.u32 %s289, 1
          %s522 = scalar_lea.sflag [#allocation19], %s521
          %s523 = sand.u32 %s289, 1
          %s524 = scalar_lea.vmem [#allocation18], %s523
          %s526 = ssub.s32 16, 16
          %527 = vsyncadd %s522, %s526
          %s528 = smul.addr %s41, 16
          %s529 = scalar_lea.hbm %s9, %s528
          %s531 = sshll.u32 %s524, 4
          %s532 = int_to_ptr.vmem [resolvable:$true] %s531
          %534 = dma.hbm_to_vmem [thread:$0]  %s529, 16, %s532, %s522
        $region56: #{tpu_custom_call.1} parent=19 // pred_fallthru
          _
      $region20: #{tpu_custom_call.1} parent=5 // pred_fallthru
        _
      %p535 = scmp.le.s32.totalorder 1, %s33
      %p536 = scmp.lt.s32.totalorder %s33, 3
      %p537 = pnand %p535, %p536
      %p538 = pneg %p537
      // Predicated region
      $region57: #{tpu_custom_call.1} parent=5 // pred_check
        _
      $region58: #{tpu_custom_call.1} parent=5 // pred_check_branch
        %540 = sbr.rel (%p537) target = $region60
      $region59: #{tpu_custom_call.1} parent=5 // pred_region
        %s541 = ssub.s32 %s33, 1
        // Predicated region
        $region61: #{tpu_custom_call.1} parent=59 // pred_check
          %p542 = pneg %p71
        $region62: #{tpu_custom_call.1} parent=59 // pred_check_branch
          %544 = sbr.rel (%p542) target = $region64
        $region63: #{tpu_custom_call.1} parent=59 // pred_region
          %545 = dma.done [#allocation4], 256
        $region64: #{tpu_custom_call.1} parent=59 // pred_fallthru
          _
        %s546 = sand.u32 %s38, 1
        %s547 = scalar_lea.sflag [#allocation7], %s546
        %s548 = sand.u32 %s84, 1
        %s549 = smul.addr %s548, 16
        %s550 = scalar_lea.vmem [#allocation6], %s549
        // Predicated region
        $region65: #{tpu_custom_call.1} parent=59 // pred_check
          %p551 = pneg %p97
        $region66: #{tpu_custom_call.1} parent=59 // pred_check_branch
          %553 = sbr.rel (%p551) target = $region68
        $region67: #{tpu_custom_call.1} parent=59 // pred_region
          %554 = dma.done %s547, 256
        $region68: #{tpu_custom_call.1} parent=59 // pred_fallthru
          _
        %s555 = sand.u32 %s38, 1
        %s556 = scalar_lea.sflag [#allocation7], %s555
        %s557 = sand.u32 %s110, 1
        %s558 = smul.addr %s557, 16
        %s559 = scalar_lea.vmem [#allocation8], %s558
        // Predicated region
        $region69: #{tpu_custom_call.1} parent=59 // pred_check
          %p560 = pneg %p123
        $region70: #{tpu_custom_call.1} parent=59 // pred_check_branch
          %562 = sbr.rel (%p560) target = $region72
        $region71: #{tpu_custom_call.1} parent=59 // pred_region
          %563 = dma.done %s556, 256
        $region72: #{tpu_custom_call.1} parent=59 // pred_fallthru
          _
        %s564 = sand.u32 %s38, 1
        %s565 = scalar_lea.sflag [#allocation10], %s564
        %s566 = sand.u32 %s136, 1
        %s567 = scalar_lea.vmem [#allocation9], %s566
        // Predicated region
        $region73: #{tpu_custom_call.1} parent=59 // pred_check
          %p568 = pneg %p149
        $region74: #{tpu_custom_call.1} parent=59 // pred_check_branch
          %570 = sbr.rel (%p568) target = $region76
        $region75: #{tpu_custom_call.1} parent=59 // pred_region
          %571 = dma.done %s565, 16
        $region76: #{tpu_custom_call.1} parent=59 // pred_fallthru
          _
        %s572 = sand.u32 %s38, 1
        %s573 = scalar_lea.sflag [#allocation10], %s572
        %s574 = sand.u32 %s162, 1
        %s575 = smul.addr %s574, 16
        %s576 = scalar_lea.vmem [#allocation11], %s575
        // Predicated region
        $region77: #{tpu_custom_call.1} parent=59 // pred_check
          %p577 = pneg %p175
        $region78: #{tpu_custom_call.1} parent=59 // pred_check_branch
          %579 = sbr.rel (%p577) target = $region80
        $region79: #{tpu_custom_call.1} parent=59 // pred_region
          %580 = dma.done %s573, 256
        $region80: #{tpu_custom_call.1} parent=59 // pred_fallthru
          _
        %s581 = sand.u32 %s38, 1
        %s582 = scalar_lea.sflag [#allocation13], %s581
        %s583 = sand.u32 %s188, 1
        %s584 = scalar_lea.vmem [#allocation12], %s583
        // Predicated region
        $region81: #{tpu_custom_call.1} parent=59 // pred_check
          %p585 = pneg %p201
        $region82: #{tpu_custom_call.1} parent=59 // pred_check_branch
          %587 = sbr.rel (%p585) target = $region84
        $region83: #{tpu_custom_call.1} parent=59 // pred_region
          %588 = dma.done %s582, 16
        $region84: #{tpu_custom_call.1} parent=59 // pred_fallthru
          _
        %s589 = sand.u32 %s38, 1
        %s590 = scalar_lea.sflag [#allocation13], %s589
        %s591 = sand.u32 %s214, 1
        %s592 = smul.addr %s591, 32
        %s593 = scalar_lea.vmem [#allocation14], %s592
        // Predicated region
        $region85: #{tpu_custom_call.1} parent=59 // pred_check
          %p594 = pneg %p227
        $region86: #{tpu_custom_call.1} parent=59 // pred_check_branch
          %596 = sbr.rel (%p594) target = $region88
        $region87: #{tpu_custom_call.1} parent=59 // pred_region
          %597 = dma.done %s590, 512
        $region88: #{tpu_custom_call.1} parent=59 // pred_fallthru
          _
        %s598 = sand.u32 %s38, 1
        %s599 = scalar_lea.sflag [#allocation16], %s598
        %s600 = sand.u32 %s240, 1
        %s601 = scalar_lea.vmem [#allocation15], %s600
        // Predicated region
        $region89: #{tpu_custom_call.1} parent=59 // pred_check
          %p602 = pneg %p253
        $region90: #{tpu_custom_call.1} parent=59 // pred_check_branch
          %604 = sbr.rel (%p602) target = $region92
        $region91: #{tpu_custom_call.1} parent=59 // pred_region
          %605 = dma.done %s599, 16
        $region92: #{tpu_custom_call.1} parent=59 // pred_fallthru
          _
        %s606 = sand.u32 %s38, 1
        %s607 = scalar_lea.sflag [#allocation16], %s606
        %s608 = sand.u32 %s266, 1
        %s609 = scalar_lea.vmem [#allocation17], %s608
        // Predicated region
        $region93: #{tpu_custom_call.1} parent=59 // pred_check
          %p610 = pneg %p279
        $region94: #{tpu_custom_call.1} parent=59 // pred_check_branch
          %612 = sbr.rel (%p610) target = $region96
        $region95: #{tpu_custom_call.1} parent=59 // pred_region
          %613 = dma.done %s607, 16
        $region96: #{tpu_custom_call.1} parent=59 // pred_fallthru
          _
        %s614 = sand.u32 %s292, 1
        %s615 = scalar_lea.sflag [#allocation19], %s614
        %s616 = sand.u32 %s292, 1
        %s617 = scalar_lea.vmem [#allocation18], %s616
        // Predicated region
        $region97: #{tpu_custom_call.1} parent=59 // pred_check
          %p618 = pneg %p305
        $region98: #{tpu_custom_call.1} parent=59 // pred_check_branch
          %620 = sbr.rel (%p618) target = $region100
        $region99: #{tpu_custom_call.1} parent=59 // pred_region
          %621 = dma.done %s615, 16
        $region100: #{tpu_custom_call.1} parent=59 // pred_fallthru
          _
        %p622 = pneg %p71
        %p623 = pneg %p68
        %s624 = sand.u32 %s38, 1
        %s625 = scalar_lea.sflag [#allocation7], %s624
        %s626 = sand.u32 %s84, 1
        %s627 = smul.addr %s626, 16
        %s628 = scalar_lea.vmem [#allocation6], %s627
        %p629 = pneg %p97
        %p630 = pneg %p94
        %s631 = sand.u32 %s38, 1
        %s632 = scalar_lea.sflag [#allocation7], %s631
        %s633 = sand.u32 %s110, 1
        %s634 = smul.addr %s633, 16
        %s635 = scalar_lea.vmem [#allocation8], %s634
        %p636 = pneg %p123
        %p637 = pneg %p120
        %s638 = sand.u32 %s38, 1
        %s639 = scalar_lea.sflag [#allocation10], %s638
        %s640 = sand.u32 %s136, 1
        %s641 = scalar_lea.vmem [#allocation9], %s640
        %p642 = pneg %p149
        %p643 = pneg %p146
        %s644 = sand.u32 %s38, 1
        %s645 = scalar_lea.sflag [#allocation10], %s644
        %s646 = sand.u32 %s162, 1
        %s647 = smul.addr %s646, 16
        %s648 = scalar_lea.vmem [#allocation11], %s647
        %p649 = pneg %p175
        %p650 = pneg %p172
        %s651 = sand.u32 %s38, 1
        %s652 = scalar_lea.sflag [#allocation13], %s651
        %s653 = sand.u32 %s188, 1
        %s654 = scalar_lea.vmem [#allocation12], %s653
        %p655 = pneg %p201
        %p656 = pneg %p198
        %s657 = sand.u32 %s38, 1
        %s658 = scalar_lea.sflag [#allocation13], %s657
        %s659 = sand.u32 %s214, 1
        %s660 = smul.addr %s659, 32
        %s661 = scalar_lea.vmem [#allocation14], %s660
        %p662 = pneg %p227
        %p663 = pneg %p224
        %s664 = sand.u32 %s38, 1
        %s665 = scalar_lea.sflag [#allocation16], %s664
        %s666 = sand.u32 %s240, 1
        %s667 = scalar_lea.vmem [#allocation15], %s666
        %p668 = pneg %p253
        %p669 = pneg %p250
        %s670 = sand.u32 %s38, 1
        %s671 = scalar_lea.sflag [#allocation16], %s670
        %s672 = sand.u32 %s266, 1
        %s673 = scalar_lea.vmem [#allocation17], %s672
        %p674 = pneg %p279
        %p675 = pneg %p276
        %s676 = sand.u32 %s292, 1
        %s677 = scalar_lea.sflag [#allocation19], %s676
        %s678 = sand.u32 %s292, 1
        %s679 = scalar_lea.vmem [#allocation18], %s678
        %p680 = pneg %p305
        %p681 = pneg %p302
        %p682 = pneg %p331
        %p683 = pneg %p328
        %s684 = smul.u32 2, %s42
        %s685 = smul.u32 2, %s42
        %p687 = scmp.eq.s32.totalorder %s43, 0
        // Predicated region
        $region101: #{tpu_custom_call.1} parent=59 // pred_check
          %p688 = pneg %p687
        $region102: #{tpu_custom_call.1} parent=59 // pred_check_branch
          %690 = sbr.rel (%p688) target = $region104
        $region103: #{tpu_custom_call.1} parent=59 // pred_region
          %v691 = vld [vmem:[#allocation3] sm:$0xff]
          %v692 = vld [vmem:[#allocation3 + $0x8] sm:$0xff]
          %vm693 = vcmask 261120
          %v694 = vsel %vm693, %v691, 0.0
          %v695 = vrot.slane %v694, 4
          %v696 = vadd.f32 %v694, %v695
          %v697 = vrot.slane %v696, 2
          %v698 = vadd.f32 %v696, %v697
          %v699 = vrot.slane %v698, 1
          %v700 = vadd.f32 %v698, %v699
          %v701 = vsel %vm693, %v692, 0.0
          %v702 = vrot.slane %v701, 4
          %v703 = vadd.f32 %v701, %v702
          %v704 = vrot.slane %v703, 2
          %v705 = vadd.f32 %v703, %v704
          %v706 = vrot.slane %v705, 1
          %v707 = vadd.f32 %v705, %v706
          %v708 = vrcp.pop 8.0
          %v709 = vmul.f32 %v700, %v708
          %v710 = vmul.f32 %v707, %v708
          %vm711 = vcmask 253952
          %712 = vst.msk [vmem:[#allocation2] sm:$0x1] %vm711, %v709
          %713 = vst.msk [vmem:[#allocation2 + $0x10] sm:$0x1] %vm711, %v710
          %714 = vst.msk [vmem:[#allocation2 + $0x1] sm:$0xff] %vm693, %v691
          %715 = vst.msk [vmem:[#allocation2 + $0x11] sm:$0xff] %vm693, %v692
        $region104: #{tpu_custom_call.1} parent=59 // pred_fallthru
          _
        %v716 = vld [vmem:[#allocation2] sm:$0xff]
        %v717 = vld [vmem:[#allocation2 + $0x8] sm:$0x1]
        %v718 = vld [vmem:[#allocation2 + $0x10] sm:$0xff]
        %v719 = vld [vmem:[#allocation2 + $0x18] sm:$0x1]
        %v724 = vcombine.high %v716, %v716
        %v726 = vunpack.c.l.s4 1966171168
        %v727 = vunpack.c.0.s8 %v726
        %v728 = vlaneseq
        %v729 = vshrl.u32 %v728, 7
        %v730 = vsub.s32 %v727, %v729
        %v731 = vrot.slane %v716, %v730
        %v733 = vunpack.c.l.s4 1966171168
        %v734 = vunpack.c.0.s8 %v733
        %v735 = vlaneseq
        %v736 = vshrl.u32 %v735, 7
        %v737 = vsub.s32 %v734, %v736
        %v738 = vrot.slane %v724, %v737
        %v739 = vcombine.high %v731, %v731
        %v740 = vcombine.high %v738, %v738
        %v742 = vunpack.c.l.s4 1966171168
        %v743 = vunpack.c.0.s8 %v742
        %v744 = vlaneseq
        %v745 = vshrl.u32 %v744, 7
        %v746 = vsub.s32 %v743, %v745
        %v747 = vrot.slane %v731, %v746
        %v749 = vunpack.c.l.s4 1966171168
        %v750 = vunpack.c.0.s8 %v749
        %v751 = vlaneseq
        %v752 = vshrl.u32 %v751, 7
        %v753 = vsub.s32 %v750, %v752
        %v754 = vrot.slane %v738, %v753
        %v756 = vunpack.c.l.s4 1966171168
        %v757 = vunpack.c.0.s8 %v756
        %v758 = vlaneseq
        %v759 = vshrl.u32 %v758, 7
        %v760 = vsub.s32 %v757, %v759
        %v761 = vrot.slane %v739, %v760
        %v763 = vunpack.c.l.s4 1966171168
        %v764 = vunpack.c.0.s8 %v763
        %v765 = vlaneseq
        %v766 = vshrl.u32 %v765, 7
        %v767 = vsub.s32 %v764, %v766
        %v768 = vrot.slane %v740, %v767
        %v769 = vcombine.high %v747, %v747
        %v770 = vcombine.high %v754, %v754
        %v771 = vcombine.high %v761, %v761
        %v772 = vcombine.high %v768, %v768
        %v774 = vunpack.c.l.s4 1966171168
        %v775 = vunpack.c.0.s8 %v774
        %v776 = vlaneseq
        %v777 = vshrl.u32 %v776, 7
        %v778 = vsub.s32 %v775, %v777
        %v779 = vrot.slane %v717, %v778
        %v781 = vunpack.c.l.s4 1966171168
        %v782 = vunpack.c.0.s8 %v781
        %v783 = vlaneseq
        %v784 = vshrl.u32 %v783, 7
        %v785 = vsub.s32 %v782, %v784
        %v786 = vrot.slane %v779, %v785
        %v787 = vcombine.high %v718, %v718
        %v789 = vunpack.c.l.s4 1966171168
        %v790 = vunpack.c.0.s8 %v789
        %v791 = vlaneseq
        %v792 = vshrl.u32 %v791, 7
        %v793 = vsub.s32 %v790, %v792
        %v794 = vrot.slane %v718, %v793
        %v796 = vunpack.c.l.s4 1966171168
        %v797 = vunpack.c.0.s8 %v796
        %v798 = vlaneseq
        %v799 = vshrl.u32 %v798, 7
        %v800 = vsub.s32 %v797, %v799
        %v801 = vrot.slane %v787, %v800
        %v802 = vcombine.high %v794, %v794
        %v803 = vcombine.high %v801, %v801
        %v805 = vunpack.c.l.s4 1966171168
        %v806 = vunpack.c.0.s8 %v805
        %v807 = vlaneseq
        %v808 = vshrl.u32 %v807, 7
        %v809 = vsub.s32 %v806, %v808
        %v810 = vrot.slane %v794, %v809
        %v812 = vunpack.c.l.s4 1966171168
        %v813 = vunpack.c.0.s8 %v812
        %v814 = vlaneseq
        %v815 = vshrl.u32 %v814, 7
        %v816 = vsub.s32 %v813, %v815
        %v817 = vrot.slane %v801, %v816
        %v819 = vunpack.c.l.s4 1966171168
        %v820 = vunpack.c.0.s8 %v819
        %v821 = vlaneseq
        %v822 = vshrl.u32 %v821, 7
        %v823 = vsub.s32 %v820, %v822
        %v824 = vrot.slane %v802, %v823
        %v826 = vunpack.c.l.s4 1966171168
        %v827 = vunpack.c.0.s8 %v826
        %v828 = vlaneseq
        %v829 = vshrl.u32 %v828, 7
        %v830 = vsub.s32 %v827, %v829
        %v831 = vrot.slane %v803, %v830
        %v832 = vcombine.high %v810, %v810
        %v833 = vcombine.high %v817, %v817
        %v834 = vcombine.high %v824, %v824
        %v835 = vcombine.high %v831, %v831
        %v837 = vunpack.c.l.s4 1966171168
        %v838 = vunpack.c.0.s8 %v837
        %v839 = vlaneseq
        %v840 = vshrl.u32 %v839, 7
        %v841 = vsub.s32 %v838, %v840
        %v842 = vrot.slane %v719, %v841
        %v844 = vunpack.c.l.s4 1966171168
        %v845 = vunpack.c.0.s8 %v844
        %v846 = vlaneseq
        %v847 = vshrl.u32 %v846, 7
        %v848 = vsub.s32 %v845, %v847
        %v849 = vrot.slane %v842, %v848
        %v850 = vcombine.low %v747, %v761
        %v851 = vcombine.low %v769, %v771
        %v852 = vcombine.low %v754, %v768
        %v853 = vcombine.low %v770, %v772
        %v855 = vunpack.c.l.s4 1966171168
        %v856 = vunpack.c.0.s8 %v855
        %v857 = vlaneseq
        %v858 = vshrl.u32 %v857, 7
        %v859 = vsub.s32 %v856, %v858
        %v860 = vrot.slane %v850, %v859
        %v862 = vunpack.c.l.s4 1966171168
        %v863 = vunpack.c.0.s8 %v862
        %v864 = vlaneseq
        %v865 = vshrl.u32 %v864, 7
        %v866 = vsub.s32 %v863, %v865
        %v867 = vrot.slane %v851, %v866
        %v869 = vunpack.c.l.s4 1966171168
        %v870 = vunpack.c.0.s8 %v869
        %v871 = vlaneseq
        %v872 = vshrl.u32 %v871, 7
        %v873 = vsub.s32 %v870, %v872
        %v874 = vrot.slane %v852, %v873
        %v876 = vunpack.c.l.s4 1966171168
        %v877 = vunpack.c.0.s8 %v876
        %v878 = vlaneseq
        %v879 = vshrl.u32 %v878, 7
        %v880 = vsub.s32 %v877, %v879
        %v881 = vrot.slane %v853, %v880
        %v882 = vcombine.low %v860, %v867
        %v883 = vcombine.low %v874, %v881
        %v885 = vunpack.c.l.s4 1966171168
        %v886 = vunpack.c.0.s8 %v885
        %v887 = vlaneseq
        %v888 = vshrl.u32 %v887, 7
        %v889 = vsub.s32 %v886, %v888
        %v890 = vrot.slane %v882, %v889
        %v892 = vunpack.c.l.s4 1966171168
        %v893 = vunpack.c.0.s8 %v892
        %v894 = vlaneseq
        %v895 = vshrl.u32 %v894, 7
        %v896 = vsub.s32 %v893, %v895
        %v897 = vrot.slane %v883, %v896
        %v898 = vcombine.low %v890, %v897
        %v899 = vcombine.low %v786, %v810
        %v900 = vcombine.low %v824, %v832
        %v901 = vcombine.low %v834, %v817
        %v902 = vcombine.low %v831, %v833
        %v904 = vunpack.c.l.s4 1966171168
        %v905 = vunpack.c.0.s8 %v904
        %v906 = vlaneseq
        %v907 = vshrl.u32 %v906, 7
        %v908 = vsub.s32 %v905, %v907
        %v909 = vrot.slane %v899, %v908
        %v911 = vunpack.c.l.s4 1966171168
        %v912 = vunpack.c.0.s8 %v911
        %v913 = vlaneseq
        %v914 = vshrl.u32 %v913, 7
        %v915 = vsub.s32 %v912, %v914
        %v916 = vrot.slane %v900, %v915
        %v918 = vunpack.c.l.s4 1966171168
        %v919 = vunpack.c.0.s8 %v918
        %v920 = vlaneseq
        %v921 = vshrl.u32 %v920, 7
        %v922 = vsub.s32 %v919, %v921
        %v923 = vrot.slane %v901, %v922
        %v925 = vunpack.c.l.s4 1966171168
        %v926 = vunpack.c.0.s8 %v925
        %v927 = vlaneseq
        %v928 = vshrl.u32 %v927, 7
        %v929 = vsub.s32 %v926, %v928
        %v930 = vrot.slane %v902, %v929
        %v931 = vcombine.low %v909, %v916
        %v932 = vcombine.low %v923, %v930
        %v934 = vunpack.c.l.s4 1966171168
        %v935 = vunpack.c.0.s8 %v934
        %v936 = vlaneseq
        %v937 = vshrl.u32 %v936, 7
        %v938 = vsub.s32 %v935, %v937
        %v939 = vrot.slane %v931, %v938
        %v941 = vunpack.c.l.s4 1966171168
        %v942 = vunpack.c.0.s8 %v941
        %v943 = vlaneseq
        %v944 = vshrl.u32 %v943, 7
        %v945 = vsub.s32 %v942, %v944
        %v946 = vrot.slane %v932, %v945
        %v947 = vcombine.low %v939, %v946
        %v948 = vcombine.low %v835, %v849
        %v950 = vunpack.c.l.s4 1966171168
        %v951 = vunpack.c.0.s8 %v950
        %v952 = vlaneseq
        %v953 = vshrl.u32 %v952, 7
        %v954 = vsub.s32 %v951, %v953
        %v955 = vrot.slane %v948, %v954
        %v957 = vunpack.c.l.s4 1966171168
        %v958 = vunpack.c.0.s8 %v957
        %v959 = vlaneseq
        %v960 = vshrl.u32 %v959, 7
        %v961 = vsub.s32 %v958, %v960
        %v962 = vrot.slane %v955, %v961
        %v966 = vpack.c.bf16 %v947, %v898
        %v967 = vpack.c.bf16 %v962, %v962
        %v968 = vld [vmem:[%s550] sm:$0xf]
        %v969 = vld [vmem:[%s550 + $0x4] sm:$0xf]
        %v970 = vld [vmem:[%s550 + $0x8] sm:$0xf]
        %v971 = vld [vmem:[%s550 + $0xc] sm:$0xf]
        %v976 = vunpack.c.l.b16 %v968
        %v977 = vunpack.c.l.b16 %v969
        %v978 = vunpack.c.l.b16 %v970
        %v979 = vunpack.c.l.b16 %v971
        %v980 = vpack.c.b16 %v977, %v976
        %v981 = vpack.c.b16 %v979, %v978
        %vm984 = vcmask 261120
        %v986 = vsel %vm984, %v966, 0
        %v989 = vsel %vm984, %v967, 0
        %991 = vmatprep.subr.bf16.mxu0 0
        %992 = vmatpush1.bf16.msra.mxu0 %v980
        %993 = vmatprep.subr.bf16.mxu0 0
        %994 = vmatpush1.bf16.msra.mxu0 %v981
        %995 = vmatprep.subr.bf16.mxu0 0
        %996 = vmatpush1.bf16.msra.mxu0 0
        %997 = vmatprep.subr.bf16.mxu0 0
        %998 = vmatpush1.bf16.msra.mxu0 0
        %999 = vmatprep.subr.bf16.mxu0 0
        %1000 = vmatpush1.bf16.msra.mxu0 0
        %1001 = vmatprep.subr.bf16.mxu0 0
        %1002 = vmatpush1.bf16.msra.mxu0 0
        %1003 = vmatprep.subr.bf16.mxu0 0
        %1004 = vmatpush1.bf16.msra.mxu0 0
        %1005 = vmatprep.subr.bf16.mxu0 0
        %1006 = vmatpush1.bf16.msra.mxu0 0
        %1007 = vmatprep.subr.bf16.mxu0 0
        %1008 = vmatpush1.bf16.msra.mxu0 0
        %1009 = vmatprep.subr.bf16.mxu0 0
        %1010 = vmatpush1.bf16.msra.mxu0 0
        %1011 = vmatprep.subr.bf16.mxu0 0
        %1012 = vmatpush1.bf16.msra.mxu0 0
        %1013 = vmatprep.subr.bf16.mxu0 0
        %1014 = vmatpush1.bf16.msra.mxu0 0
        %1015 = vmatprep.subr.bf16.mxu0 0
        %1016 = vmatpush1.bf16.msra.mxu0 0
        %1017 = vmatprep.subr.bf16.mxu0 0
        %1018 = vmatpush1.bf16.msra.mxu0 0
        %1019 = vmatprep.subr.bf16.mxu0 0
        %1020 = vmatpush1.bf16.msra.mxu0 0
        %1021 = vmatprep.subr.bf16.mxu0 0
        %1022 = vmatpush1.bf16.msra.mxu0 0
        %1023 = vmatprep.mubr.bf16.mxu0 0
        %1024 = vmatmul.mubr.bf16.gmra.mrb[0].mxu0 %v986
        %v1025 = vpop.f32.mrb[0].mxu0
        %v1026 = vadd.f32 0.0, %v1025
        %v1027 = vpop.f32.mrb[0].mxu0
        %v1028 = vpop.f32.mrb[0].mxu0
        %v1029 = vadd.f32 0.0, %v1028
        %v1030 = vpop.f32.mrb[0].mxu0
        %1031 = vmatprep.mubr.bf16.mxu0 0
        %1032 = vmatmul.mubr.bf16.gmra.mrb[0].mxu0 %v989
        %v1033 = vpop.f32.mrb[0].mxu0
        %v1034 = vadd.f32 0.0, %v1033
        %v1035 = vpop.f32.mrb[0].mxu0
        %v1036 = vpop.f32.mrb[0].mxu0
        %v1037 = vpop.f32.mrb[0].mxu0
        %1038 = vdwg.mxu0
        %v1039 = vmul.f32 %v1026, 0.25
        %v1040 = vmul.f32 %v1029, 0.25
        %v1041 = vmul.f32 %v1034, 0.25
        %1045 = vrot.lane.b32.xlu0 %v1039, 112
        %v1046 = vpop.permute.xlu0 %1045
        %1047 = vrot.lane.b32.xlu0 %v1040, 112
        %v1048 = vpop.permute.xlu0 %1047
        %1049 = vrot.lane.b32.xlu0 %v1041, 112
        %v1050 = vpop.permute.xlu0 %1049
        %v1053 = vcombine.high %v1039, 0.0
        %v1055 = vunpack.c.l.s4 1983009808
        %v1056 = vunpack.c.0.s8 %v1055
        %v1057 = vlaneseq
        %v1058 = vshrl.u32 %v1057, 7
        %v1059 = vsub.s32 %v1056, %v1058
        %v1060 = vrot.slane %v1039, %v1059
        %v1062 = vunpack.c.l.s4 1983009808
        %v1063 = vunpack.c.0.s8 %v1062
        %v1064 = vlaneseq
        %v1065 = vshrl.u32 %v1064, 7
        %v1066 = vsub.s32 %v1063, %v1065
        %v1067 = vrot.slane %v1053, %v1066
        %v1068 = vcombine.high %v1046, 0.0
        %v1070 = vunpack.c.l.s4 1983009808
        %v1071 = vunpack.c.0.s8 %v1070
        %v1072 = vlaneseq
        %v1073 = vshrl.u32 %v1072, 7
        %v1074 = vsub.s32 %v1071, %v1073
        %v1075 = vrot.slane %v1046, %v1074
        %v1077 = vunpack.c.l.s4 1983009808
        %v1078 = vunpack.c.0.s8 %v1077
        %v1079 = vlaneseq
        %v1080 = vshrl.u32 %v1079, 7
        %v1081 = vsub.s32 %v1078, %v1080
        %v1082 = vrot.slane %v1068, %v1081
        %v1083 = vcombine.low %v1060, %v1075
        %v1084 = vcombine.high %v1060, %v1075
        %v1086 = vunpack.c.l.s4 1934713408
        %v1087 = vunpack.c.0.s8 %v1086
        %v1088 = vlaneseq
        %v1089 = vshrl.u32 %v1088, 7
        %v1090 = vsub.s32 %v1087, %v1089
        %v1091 = vrot.slane %v1083, %v1090
        %v1093 = vunpack.c.l.s4 1934713408
        %v1094 = vunpack.c.0.s8 %v1093
        %v1095 = vlaneseq
        %v1096 = vshrl.u32 %v1095, 7
        %v1097 = vsub.s32 %v1094, %v1096
        %v1098 = vrot.slane %v1084, %v1097
        %v1099 = vcombine.low %v1067, %v1082
        %v1100 = vcombine.high %v1067, %v1082
        %v1102 = vunpack.c.l.s4 1934713408
        %v1103 = vunpack.c.0.s8 %v1102
        %v1104 = vlaneseq
        %v1105 = vshrl.u32 %v1104, 7
        %v1106 = vsub.s32 %v1103, %v1105
        %v1107 = vrot.slane %v1099, %v1106
        %v1109 = vunpack.c.l.s4 1934713408
        %v1110 = vunpack.c.0.s8 %v1109
        %v1111 = vlaneseq
        %v1112 = vshrl.u32 %v1111, 7
        %v1113 = vsub.s32 %v1110, %v1112
        %v1114 = vrot.slane %v1100, %v1113
        %v1115 = vcombine.high %v1091, 0.0
        %v1116 = vcombine.high %v1098, 0.0
        %v1117 = vcombine.high %v1107, 0.0
        %v1118 = vcombine.high %v1114, 0.0
        %v1119 = vcombine.high %v1040, 0.0
        %v1121 = vunpack.c.l.s4 1983009808
        %v1122 = vunpack.c.0.s8 %v1121
        %v1123 = vlaneseq
        %v1124 = vshrl.u32 %v1123, 7
        %v1125 = vsub.s32 %v1122, %v1124
        %v1126 = vrot.slane %v1040, %v1125
        %v1128 = vunpack.c.l.s4 1983009808
        %v1129 = vunpack.c.0.s8 %v1128
        %v1130 = vlaneseq
        %v1131 = vshrl.u32 %v1130, 7
        %v1132 = vsub.s32 %v1129, %v1131
        %v1133 = vrot.slane %v1119, %v1132
        %v1134 = vcombine.high %v1048, 0.0
        %v1136 = vunpack.c.l.s4 1983009808
        %v1137 = vunpack.c.0.s8 %v1136
        %v1138 = vlaneseq
        %v1139 = vshrl.u32 %v1138, 7
        %v1140 = vsub.s32 %v1137, %v1139
        %v1141 = vrot.slane %v1048, %v1140
        %v1143 = vunpack.c.l.s4 1983009808
        %v1144 = vunpack.c.0.s8 %v1143
        %v1145 = vlaneseq
        %v1146 = vshrl.u32 %v1145, 7
        %v1147 = vsub.s32 %v1144, %v1146
        %v1148 = vrot.slane %v1134, %v1147
        %v1149 = vcombine.low %v1126, %v1141
        %v1150 = vcombine.high %v1126, %v1141
        %v1152 = vunpack.c.l.s4 1934713408
        %v1153 = vunpack.c.0.s8 %v1152
        %v1154 = vlaneseq
        %v1155 = vshrl.u32 %v1154, 7
        %v1156 = vsub.s32 %v1153, %v1155
        %v1157 = vrot.slane %v1149, %v1156
        %v1159 = vunpack.c.l.s4 1934713408
        %v1160 = vunpack.c.0.s8 %v1159
        %v1161 = vlaneseq
        %v1162 = vshrl.u32 %v1161, 7
        %v1163 = vsub.s32 %v1160, %v1162
        %v1164 = vrot.slane %v1150, %v1163
        %v1165 = vcombine.low %v1133, %v1148
        %v1166 = vcombine.high %v1133, %v1148
        %v1168 = vunpack.c.l.s4 1934713408
        %v1169 = vunpack.c.0.s8 %v1168
        %v1170 = vlaneseq
        %v1171 = vshrl.u32 %v1170, 7
        %v1172 = vsub.s32 %v1169, %v1171
        %v1173 = vrot.slane %v1165, %v1172
        %v1175 = vunpack.c.l.s4 1934713408
        %v1176 = vunpack.c.0.s8 %v1175
        %v1177 = vlaneseq
        %v1178 = vshrl.u32 %v1177, 7
        %v1179 = vsub.s32 %v1176, %v1178
        %v1180 = vrot.slane %v1166, %v1179
        %v1181 = vcombine.high %v1157, 0.0
        %v1182 = vcombine.high %v1164, 0.0
        %v1183 = vcombine.high %v1173, 0.0
        %v1184 = vcombine.high %v1180, 0.0
        %v1186 = vcombine.low %v1041, %v1050
        %v1188 = vunpack.c.l.s4 1934713408
        %v1189 = vunpack.c.0.s8 %v1188
        %v1190 = vlaneseq
        %v1191 = vshrl.u32 %v1190, 7
        %v1192 = vsub.s32 %v1189, %v1191
        %v1193 = vrot.slane %v1186, %v1192
        %v1194 = vcombine.low %v1091, %v1098
        %v1196 = vunpack.c.l.s4 1983009808
        %v1197 = vunpack.c.0.s8 %v1196
        %v1198 = vlaneseq
        %v1199 = vshrl.u32 %v1198, 7
        %v1200 = vsub.s32 %v1197, %v1199
        %v1201 = vrot.slane %v1194, %v1200
        %v1202 = vcombine.low %v1115, %v1116
        %v1204 = vunpack.c.l.s4 1983009808
        %v1205 = vunpack.c.0.s8 %v1204
        %v1206 = vlaneseq
        %v1207 = vshrl.u32 %v1206, 7
        %v1208 = vsub.s32 %v1205, %v1207
        %v1209 = vrot.slane %v1202, %v1208
        %v1210 = vcombine.low %v1107, %v1114
        %v1212 = vunpack.c.l.s4 1983009808
        %v1213 = vunpack.c.0.s8 %v1212
        %v1214 = vlaneseq
        %v1215 = vshrl.u32 %v1214, 7
        %v1216 = vsub.s32 %v1213, %v1215
        %v1217 = vrot.slane %v1210, %v1216
        %v1218 = vcombine.low %v1117, %v1118
        %v1220 = vunpack.c.l.s4 1983009808
        %v1221 = vunpack.c.0.s8 %v1220
        %v1222 = vlaneseq
        %v1223 = vshrl.u32 %v1222, 7
        %v1224 = vsub.s32 %v1221, %v1223
        %v1225 = vrot.slane %v1218, %v1224
        %v1226 = vcombine.low %v1201, %v1209
        %v1228 = vunpack.c.l.s4 1934713408
        %v1229 = vunpack.c.0.s8 %v1228
        %v1230 = vlaneseq
        %v1231 = vshrl.u32 %v1230, 7
        %v1232 = vsub.s32 %v1229, %v1231
        %v1233 = vrot.slane %v1226, %v1232
        %v1234 = vcombine.low %v1217, %v1225
        %v1236 = vunpack.c.l.s4 1934713408
        %v1237 = vunpack.c.0.s8 %v1236
        %v1238 = vlaneseq
        %v1239 = vshrl.u32 %v1238, 7
        %v1240 = vsub.s32 %v1237, %v1239
        %v1241 = vrot.slane %v1234, %v1240
        %v1242 = vcombine.low %v1233, %v1241
        %v1243 = vcombine.high %v1233, %v1241
        %v1245 = vunpack.c.l.s4 1934713408
        %v1246 = vunpack.c.0.s8 %v1245
        %v1247 = vlaneseq
        %v1248 = vshrl.u32 %v1247, 7
        %v1249 = vsub.s32 %v1246, %v1248
        %v1250 = vrot.slane %v1157, %v1249
        %v1251 = vcombine.high %v1250, 0.0
        %v1252 = vcombine.low %v1181, %v1182
        %v1254 = vunpack.c.l.s4 1983009808
        %v1255 = vunpack.c.0.s8 %v1254
        %v1256 = vlaneseq
        %v1257 = vshrl.u32 %v1256, 7
        %v1258 = vsub.s32 %v1255, %v1257
        %v1259 = vrot.slane %v1252, %v1258
        %v1260 = vcombine.low %v1164, %v1173
        %v1262 = vunpack.c.l.s4 1983009808
        %v1263 = vunpack.c.0.s8 %v1262
        %v1264 = vlaneseq
        %v1265 = vshrl.u32 %v1264, 7
        %v1266 = vsub.s32 %v1263, %v1265
        %v1267 = vrot.slane %v1260, %v1266
        %v1268 = vcombine.low %v1183, %v1184
        %v1270 = vunpack.c.l.s4 1983009808
        %v1271 = vunpack.c.0.s8 %v1270
        %v1272 = vlaneseq
        %v1273 = vshrl.u32 %v1272, 7
        %v1274 = vsub.s32 %v1271, %v1273
        %v1275 = vrot.slane %v1268, %v1274
        %v1276 = vcombine.low %v1180, %v1193
        %v1278 = vunpack.c.l.s4 1983009808
        %v1279 = vunpack.c.0.s8 %v1278
        %v1280 = vlaneseq
        %v1281 = vshrl.u32 %v1280, 7
        %v1282 = vsub.s32 %v1279, %v1281
        %v1283 = vrot.slane %v1276, %v1282
        %v1284 = vcombine.low %v1259, %v1267
        %v1286 = vunpack.c.l.s4 1934713408
        %v1287 = vunpack.c.0.s8 %v1286
        %v1288 = vlaneseq
        %v1289 = vshrl.u32 %v1288, 7
        %v1290 = vsub.s32 %v1287, %v1289
        %v1291 = vrot.slane %v1284, %v1290
        %v1292 = vcombine.low %v1275, %v1283
        %v1294 = vunpack.c.l.s4 1934713408
        %v1295 = vunpack.c.0.s8 %v1294
        %v1296 = vlaneseq
        %v1297 = vshrl.u32 %v1296, 7
        %v1298 = vsub.s32 %v1295, %v1297
        %v1299 = vrot.slane %v1292, %v1298
        %v1300 = vcombine.low %v1291, %v1299
        %v1301 = vcombine.high %v1291, %v1299
        %v1302 = vcombine.high %v1193, 0.0
        %v1304 = vunpack.c.l.s4 1934713408
        %v1305 = vunpack.c.0.s8 %v1304
        %v1306 = vlaneseq
        %v1307 = vshrl.u32 %v1306, 7
        %v1308 = vsub.s32 %v1305, %v1307
        %v1309 = vrot.slane %v1302, %v1308
        %v1310 = vcombine.high %v1309, 0.0
        %v1311 = vpack.c.bf16 %v1250, %v1242
        %v1312 = vpack.c.bf16 %v1251, %v1243
        %v1313 = vpack.c.bf16 %v1309, %v1300
        %v1314 = vpack.c.bf16 %v1310, %v1301
        %1318 = vrot.lane.b32.xlu0 %v1026, 112
        %v1319 = vpop.permute.xlu0 %1318
        %1320 = vrot.lane.b32.xlu0 %v1029, 112
        %v1321 = vpop.permute.xlu0 %1320
        %1322 = vrot.lane.b32.xlu0 %v1034, 112
        %v1323 = vpop.permute.xlu0 %1322
        %1324 = vrot.lane.b32.xlu0 %v1026, 96
        %v1325 = vpop.permute.xlu0 %1324
        %1326 = vrot.lane.b32.xlu0 %v1029, 96
        %v1327 = vpop.permute.xlu0 %1326
        %1328 = vrot.lane.b32.xlu0 %v1034, 96
        %v1329 = vpop.permute.xlu0 %1328
        %1330 = vrot.lane.b32.xlu0 %v1319, 96
        %v1331 = vpop.permute.xlu0 %1330
        %1332 = vrot.lane.b32.xlu0 %v1321, 96
        %v1333 = vpop.permute.xlu0 %1332
        %1334 = vrot.lane.b32.xlu0 %v1323, 96
        %v1335 = vpop.permute.xlu0 %1334
        %v1340 = vcombine.high %v1325, 0.0
        %v1342 = vunpack.c.l.s4 1983009808
        %v1343 = vunpack.c.0.s8 %v1342
        %v1344 = vlaneseq
        %v1345 = vshrl.u32 %v1344, 7
        %v1346 = vsub.s32 %v1343, %v1345
        %v1347 = vrot.slane %v1325, %v1346
        %v1349 = vunpack.c.l.s4 1983009808
        %v1350 = vunpack.c.0.s8 %v1349
        %v1351 = vlaneseq
        %v1352 = vshrl.u32 %v1351, 7
        %v1353 = vsub.s32 %v1350, %v1352
        %v1354 = vrot.slane %v1340, %v1353
        %v1355 = vcombine.high %v1331, 0.0
        %v1357 = vunpack.c.l.s4 1983009808
        %v1358 = vunpack.c.0.s8 %v1357
        %v1359 = vlaneseq
        %v1360 = vshrl.u32 %v1359, 7
        %v1361 = vsub.s32 %v1358, %v1360
        %v1362 = vrot.slane %v1331, %v1361
        %v1364 = vunpack.c.l.s4 1983009808
        %v1365 = vunpack.c.0.s8 %v1364
        %v1366 = vlaneseq
        %v1367 = vshrl.u32 %v1366, 7
        %v1368 = vsub.s32 %v1365, %v1367
        %v1369 = vrot.slane %v1355, %v1368
        %v1370 = vcombine.low %v1347, %v1362
        %v1371 = vcombine.high %v1347, %v1362
        %v1373 = vunpack.c.l.s4 1934713408
        %v1374 = vunpack.c.0.s8 %v1373
        %v1375 = vlaneseq
        %v1376 = vshrl.u32 %v1375, 7
        %v1377 = vsub.s32 %v1374, %v1376
        %v1378 = vrot.slane %v1370, %v1377
        %v1380 = vunpack.c.l.s4 1934713408
        %v1381 = vunpack.c.0.s8 %v1380
        %v1382 = vlaneseq
        %v1383 = vshrl.u32 %v1382, 7
        %v1384 = vsub.s32 %v1381, %v1383
        %v1385 = vrot.slane %v1371, %v1384
        %v1386 = vcombine.low %v1354, %v1369
        %v1387 = vcombine.high %v1354, %v1369
        %v1389 = vunpack.c.l.s4 1934713408
        %v1390 = vunpack.c.0.s8 %v1389
        %v1391 = vlaneseq
        %v1392 = vshrl.u32 %v1391, 7
        %v1393 = vsub.s32 %v1390, %v1392
        %v1394 = vrot.slane %v1386, %v1393
        %v1396 = vunpack.c.l.s4 1934713408
        %v1397 = vunpack.c.0.s8 %v1396
        %v1398 = vlaneseq
        %v1399 = vshrl.u32 %v1398, 7
        %v1400 = vsub.s32 %v1397, %v1399
        %v1401 = vrot.slane %v1387, %v1400
        %v1402 = vcombine.high %v1378, 0.0
        %v1403 = vcombine.high %v1385, 0.0
        %v1404 = vcombine.high %v1394, 0.0
        %v1405 = vcombine.high %v1401, 0.0
        %v1406 = vcombine.high %v1327, 0.0
        %v1408 = vunpack.c.l.s4 1983009808
        %v1409 = vunpack.c.0.s8 %v1408
        %v1410 = vlaneseq
        %v1411 = vshrl.u32 %v1410, 7
        %v1412 = vsub.s32 %v1409, %v1411
        %v1413 = vrot.slane %v1327, %v1412
        %v1415 = vunpack.c.l.s4 1983009808
        %v1416 = vunpack.c.0.s8 %v1415
        %v1417 = vlaneseq
        %v1418 = vshrl.u32 %v1417, 7
        %v1419 = vsub.s32 %v1416, %v1418
        %v1420 = vrot.slane %v1406, %v1419
        %v1421 = vcombine.high %v1333, 0.0
        %v1423 = vunpack.c.l.s4 1983009808
        %v1424 = vunpack.c.0.s8 %v1423
        %v1425 = vlaneseq
        %v1426 = vshrl.u32 %v1425, 7
        %v1427 = vsub.s32 %v1424, %v1426
        %v1428 = vrot.slane %v1333, %v1427
        %v1430 = vunpack.c.l.s4 1983009808
        %v1431 = vunpack.c.0.s8 %v1430
        %v1432 = vlaneseq
        %v1433 = vshrl.u32 %v1432, 7
        %v1434 = vsub.s32 %v1431, %v1433
        %v1435 = vrot.slane %v1421, %v1434
        %v1436 = vcombine.low %v1413, %v1428
        %v1437 = vcombine.high %v1413, %v1428
        %v1439 = vunpack.c.l.s4 1934713408
        %v1440 = vunpack.c.0.s8 %v1439
        %v1441 = vlaneseq
        %v1442 = vshrl.u32 %v1441, 7
        %v1443 = vsub.s32 %v1440, %v1442
        %v1444 = vrot.slane %v1436, %v1443
        %v1446 = vunpack.c.l.s4 1934713408
        %v1447 = vunpack.c.0.s8 %v1446
        %v1448 = vlaneseq
        %v1449 = vshrl.u32 %v1448, 7
        %v1450 = vsub.s32 %v1447, %v1449
        %v1451 = vrot.slane %v1437, %v1450
        %v1452 = vcombine.low %v1420, %v1435
        %v1453 = vcombine.high %v1420, %v1435
        %v1455 = vunpack.c.l.s4 1934713408
        %v1456 = vunpack.c.0.s8 %v1455
        %v1457 = vlaneseq
        %v1458 = vshrl.u32 %v1457, 7
        %v1459 = vsub.s32 %v1456, %v1458
        %v1460 = vrot.slane %v1452, %v1459
        %v1462 = vunpack.c.l.s4 1934713408
        %v1463 = vunpack.c.0.s8 %v1462
        %v1464 = vlaneseq
        %v1465 = vshrl.u32 %v1464, 7
        %v1466 = vsub.s32 %v1463, %v1465
        %v1467 = vrot.slane %v1453, %v1466
        %v1468 = vcombine.high %v1444, 0.0
        %v1469 = vcombine.high %v1451, 0.0
        %v1470 = vcombine.high %v1460, 0.0
        %v1471 = vcombine.high %v1467, 0.0
        %v1474 = vcombine.low %v1329, %v1335
        %v1476 = vunpack.c.l.s4 1934713408
        %v1477 = vunpack.c.0.s8 %v1476
        %v1478 = vlaneseq
        %v1479 = vshrl.u32 %v1478, 7
        %v1480 = vsub.s32 %v1477, %v1479
        %v1481 = vrot.slane %v1474, %v1480
        %v1482 = vcombine.low %v1378, %v1385
        %v1484 = vunpack.c.l.s4 1983009808
        %v1485 = vunpack.c.0.s8 %v1484
        %v1486 = vlaneseq
        %v1487 = vshrl.u32 %v1486, 7
        %v1488 = vsub.s32 %v1485, %v1487
        %v1489 = vrot.slane %v1482, %v1488
        %v1490 = vcombine.low %v1402, %v1403
        %v1492 = vunpack.c.l.s4 1983009808
        %v1493 = vunpack.c.0.s8 %v1492
        %v1494 = vlaneseq
        %v1495 = vshrl.u32 %v1494, 7
        %v1496 = vsub.s32 %v1493, %v1495
        %v1497 = vrot.slane %v1490, %v1496
        %v1498 = vcombine.low %v1394, %v1401
        %v1500 = vunpack.c.l.s4 1983009808
        %v1501 = vunpack.c.0.s8 %v1500
        %v1502 = vlaneseq
        %v1503 = vshrl.u32 %v1502, 7
        %v1504 = vsub.s32 %v1501, %v1503
        %v1505 = vrot.slane %v1498, %v1504
        %v1506 = vcombine.low %v1404, %v1405
        %v1508 = vunpack.c.l.s4 1983009808
        %v1509 = vunpack.c.0.s8 %v1508
        %v1510 = vlaneseq
        %v1511 = vshrl.u32 %v1510, 7
        %v1512 = vsub.s32 %v1509, %v1511
        %v1513 = vrot.slane %v1506, %v1512
        %v1514 = vcombine.low %v1489, %v1497
        %v1516 = vunpack.c.l.s4 1934713408
        %v1517 = vunpack.c.0.s8 %v1516
        %v1518 = vlaneseq
        %v1519 = vshrl.u32 %v1518, 7
        %v1520 = vsub.s32 %v1517, %v1519
        %v1521 = vrot.slane %v1514, %v1520
        %v1522 = vcombine.low %v1505, %v1513
        %v1524 = vunpack.c.l.s4 1934713408
        %v1525 = vunpack.c.0.s8 %v1524
        %v1526 = vlaneseq
        %v1527 = vshrl.u32 %v1526, 7
        %v1528 = vsub.s32 %v1525, %v1527
        %v1529 = vrot.slane %v1522, %v1528
        %v1530 = vcombine.low %v1521, %v1529
        %v1531 = vcombine.high %v1521, %v1529
        %v1533 = vunpack.c.l.s4 1934713408
        %v1534 = vunpack.c.0.s8 %v1533
        %v1535 = vlaneseq
        %v1536 = vshrl.u32 %v1535, 7
        %v1537 = vsub.s32 %v1534, %v1536
        %v1538 = vrot.slane %v1444, %v1537
        %v1539 = vcombine.high %v1538, 0.0
        %v1540 = vcombine.low %v1468, %v1469
        %v1542 = vunpack.c.l.s4 1983009808
        %v1543 = vunpack.c.0.s8 %v1542
        %v1544 = vlaneseq
        %v1545 = vshrl.u32 %v1544, 7
        %v1546 = vsub.s32 %v1543, %v1545
        %v1547 = vrot.slane %v1540, %v1546
        %v1548 = vcombine.low %v1451, %v1460
        %v1550 = vunpack.c.l.s4 1983009808
        %v1551 = vunpack.c.0.s8 %v1550
        %v1552 = vlaneseq
        %v1553 = vshrl.u32 %v1552, 7
        %v1554 = vsub.s32 %v1551, %v1553
        %v1555 = vrot.slane %v1548, %v1554
        %v1556 = vcombine.low %v1470, %v1471
        %v1558 = vunpack.c.l.s4 1983009808
        %v1559 = vunpack.c.0.s8 %v1558
        %v1560 = vlaneseq
        %v1561 = vshrl.u32 %v1560, 7
        %v1562 = vsub.s32 %v1559, %v1561
        %v1563 = vrot.slane %v1556, %v1562
        %v1564 = vcombine.low %v1467, %v1481
        %v1566 = vunpack.c.l.s4 1983009808
        %v1567 = vunpack.c.0.s8 %v1566
        %v1568 = vlaneseq
        %v1569 = vshrl.u32 %v1568, 7
        %v1570 = vsub.s32 %v1567, %v1569
        %v1571 = vrot.slane %v1564, %v1570
        %v1572 = vcombine.low %v1547, %v1555
        %v1574 = vunpack.c.l.s4 1934713408
        %v1575 = vunpack.c.0.s8 %v1574
        %v1576 = vlaneseq
        %v1577 = vshrl.u32 %v1576, 7
        %v1578 = vsub.s32 %v1575, %v1577
        %v1579 = vrot.slane %v1572, %v1578
        %v1580 = vcombine.low %v1563, %v1571
        %v1582 = vunpack.c.l.s4 1934713408
        %v1583 = vunpack.c.0.s8 %v1582
        %v1584 = vlaneseq
        %v1585 = vshrl.u32 %v1584, 7
        %v1586 = vsub.s32 %v1583, %v1585
        %v1587 = vrot.slane %v1580, %v1586
        %v1588 = vcombine.low %v1579, %v1587
        %v1589 = vcombine.high %v1579, %v1587
        %v1590 = vcombine.high %v1481, 0.0
        %v1592 = vunpack.c.l.s4 1934713408
        %v1593 = vunpack.c.0.s8 %v1592
        %v1594 = vlaneseq
        %v1595 = vshrl.u32 %v1594, 7
        %v1596 = vsub.s32 %v1593, %v1595
        %v1597 = vrot.slane %v1590, %v1596
        %v1598 = vcombine.high %v1597, 0.0
        %v1599 = vpack.c.bf16 %v1538, %v1530
        %v1600 = vpack.c.bf16 %v1539, %v1531
        %v1601 = vpack.c.bf16 %v1597, %v1588
        %v1602 = vpack.c.bf16 %v1598, %v1589
        %1603 = vrot.lane.b32.xlu0 %v1026, 64
        %v1604 = vpop.permute.xlu0 %1603
        %1605 = vrot.lane.b32.xlu0 %v1029, 64
        %v1606 = vpop.permute.xlu0 %1605
        %1607 = vrot.lane.b32.xlu0 %v1034, 64
        %v1608 = vpop.permute.xlu0 %1607
        %1609 = vrot.lane.b32.xlu0 %v1319, 64
        %v1610 = vpop.permute.xlu0 %1609
        %1611 = vrot.lane.b32.xlu0 %v1321, 64
        %v1612 = vpop.permute.xlu0 %1611
        %1613 = vrot.lane.b32.xlu0 %v1323, 64
        %v1614 = vpop.permute.xlu0 %1613
        %v1619 = vcombine.high %v1604, 0.0
        %v1621 = vunpack.c.l.s4 1983009808
        %v1622 = vunpack.c.0.s8 %v1621
        %v1623 = vlaneseq
        %v1624 = vshrl.u32 %v1623, 7
        %v1625 = vsub.s32 %v1622, %v1624
        %v1626 = vrot.slane %v1604, %v1625
        %v1628 = vunpack.c.l.s4 1983009808
        %v1629 = vunpack.c.0.s8 %v1628
        %v1630 = vlaneseq
        %v1631 = vshrl.u32 %v1630, 7
        %v1632 = vsub.s32 %v1629, %v1631
        %v1633 = vrot.slane %v1619, %v1632
        %v1634 = vcombine.high %v1610, 0.0
        %v1636 = vunpack.c.l.s4 1983009808
        %v1637 = vunpack.c.0.s8 %v1636
        %v1638 = vlaneseq
        %v1639 = vshrl.u32 %v1638, 7
        %v1640 = vsub.s32 %v1637, %v1639
        %v1641 = vrot.slane %v1610, %v1640
        %v1643 = vunpack.c.l.s4 1983009808
        %v1644 = vunpack.c.0.s8 %v1643
        %v1645 = vlaneseq
        %v1646 = vshrl.u32 %v1645, 7
        %v1647 = vsub.s32 %v1644, %v1646
        %v1648 = vrot.slane %v1634, %v1647
        %v1649 = vcombine.low %v1626, %v1641
        %v1650 = vcombine.high %v1626, %v1641
        %v1652 = vunpack.c.l.s4 1934713408
        %v1653 = vunpack.c.0.s8 %v1652
        %v1654 = vlaneseq
        %v1655 = vshrl.u32 %v1654, 7
        %v1656 = vsub.s32 %v1653, %v1655
        %v1657 = vrot.slane %v1649, %v1656
        %v1659 = vunpack.c.l.s4 1934713408
        %v1660 = vunpack.c.0.s8 %v1659
        %v1661 = vlaneseq
        %v1662 = vshrl.u32 %v1661, 7
        %v1663 = vsub.s32 %v1660, %v1662
        %v1664 = vrot.slane %v1650, %v1663
        %v1665 = vcombine.low %v1633, %v1648
        %v1666 = vcombine.high %v1633, %v1648
        %v1668 = vunpack.c.l.s4 1934713408
        %v1669 = vunpack.c.0.s8 %v1668
        %v1670 = vlaneseq
        %v1671 = vshrl.u32 %v1670, 7
        %v1672 = vsub.s32 %v1669, %v1671
        %v1673 = vrot.slane %v1665, %v1672
        %v1675 = vunpack.c.l.s4 1934713408
        %v1676 = vunpack.c.0.s8 %v1675
        %v1677 = vlaneseq
        %v1678 = vshrl.u32 %v1677, 7
        %v1679 = vsub.s32 %v1676, %v1678
        %v1680 = vrot.slane %v1666, %v1679
        %v1681 = vcombine.high %v1657, 0.0
        %v1682 = vcombine.high %v1664, 0.0
        %v1683 = vcombine.high %v1673, 0.0
        %v1684 = vcombine.high %v1680, 0.0
        %v1685 = vcombine.high %v1606, 0.0
        %v1687 = vunpack.c.l.s4 1983009808
        %v1688 = vunpack.c.0.s8 %v1687
        %v1689 = vlaneseq
        %v1690 = vshrl.u32 %v1689, 7
        %v1691 = vsub.s32 %v1688, %v1690
        %v1692 = vrot.slane %v1606, %v1691
        %v1694 = vunpack.c.l.s4 1983009808
        %v1695 = vunpack.c.0.s8 %v1694
        %v1696 = vlaneseq
        %v1697 = vshrl.u32 %v1696, 7
        %v1698 = vsub.s32 %v1695, %v1697
        %v1699 = vrot.slane %v1685, %v1698
        %v1700 = vcombine.high %v1612, 0.0
        %v1702 = vunpack.c.l.s4 1983009808
        %v1703 = vunpack.c.0.s8 %v1702
        %v1704 = vlaneseq
        %v1705 = vshrl.u32 %v1704, 7
        %v1706 = vsub.s32 %v1703, %v1705
        %v1707 = vrot.slane %v1612, %v1706
        %v1709 = vunpack.c.l.s4 1983009808
        %v1710 = vunpack.c.0.s8 %v1709
        %v1711 = vlaneseq
        %v1712 = vshrl.u32 %v1711, 7
        %v1713 = vsub.s32 %v1710, %v1712
        %v1714 = vrot.slane %v1700, %v1713
        %v1715 = vcombine.low %v1692, %v1707
        %v1716 = vcombine.high %v1692, %v1707
        %v1718 = vunpack.c.l.s4 1934713408
        %v1719 = vunpack.c.0.s8 %v1718
        %v1720 = vlaneseq
        %v1721 = vshrl.u32 %v1720, 7
        %v1722 = vsub.s32 %v1719, %v1721
        %v1723 = vrot.slane %v1715, %v1722
        %v1725 = vunpack.c.l.s4 1934713408
        %v1726 = vunpack.c.0.s8 %v1725
        %v1727 = vlaneseq
        %v1728 = vshrl.u32 %v1727, 7
        %v1729 = vsub.s32 %v1726, %v1728
        %v1730 = vrot.slane %v1716, %v1729
        %v1731 = vcombine.low %v1699, %v1714
        %v1732 = vcombine.high %v1699, %v1714
        %v1734 = vunpack.c.l.s4 1934713408
        %v1735 = vunpack.c.0.s8 %v1734
        %v1736 = vlaneseq
        %v1737 = vshrl.u32 %v1736, 7
        %v1738 = vsub.s32 %v1735, %v1737
        %v1739 = vrot.slane %v1731, %v1738
        %v1741 = vunpack.c.l.s4 1934713408
        %v1742 = vunpack.c.0.s8 %v1741
        %v1743 = vlaneseq
        %v1744 = vshrl.u32 %v1743, 7
        %v1745 = vsub.s32 %v1742, %v1744
        %v1746 = vrot.slane %v1732, %v1745
        %v1747 = vcombine.high %v1723, 0.0
        %v1748 = vcombine.high %v1730, 0.0
        %v1749 = vcombine.high %v1739, 0.0
        %v1750 = vcombine.high %v1746, 0.0
        %v1753 = vcombine.low %v1608, %v1614
        %v1755 = vunpack.c.l.s4 1934713408
        %v1756 = vunpack.c.0.s8 %v1755
        %v1757 = vlaneseq
        %v1758 = vshrl.u32 %v1757, 7
        %v1759 = vsub.s32 %v1756, %v1758
        %v1760 = vrot.slane %v1753, %v1759
        %v1761 = vcombine.low %v1657, %v1664
        %v1763 = vunpack.c.l.s4 1983009808
        %v1764 = vunpack.c.0.s8 %v1763
        %v1765 = vlaneseq
        %v1766 = vshrl.u32 %v1765, 7
        %v1767 = vsub.s32 %v1764, %v1766
        %v1768 = vrot.slane %v1761, %v1767
        %v1769 = vcombine.low %v1681, %v1682
        %v1771 = vunpack.c.l.s4 1983009808
        %v1772 = vunpack.c.0.s8 %v1771
        %v1773 = vlaneseq
        %v1774 = vshrl.u32 %v1773, 7
        %v1775 = vsub.s32 %v1772, %v1774
        %v1776 = vrot.slane %v1769, %v1775
        %v1777 = vcombine.low %v1673, %v1680
        %v1779 = vunpack.c.l.s4 1983009808
        %v1780 = vunpack.c.0.s8 %v1779
        %v1781 = vlaneseq
        %v1782 = vshrl.u32 %v1781, 7
        %v1783 = vsub.s32 %v1780, %v1782
        %v1784 = vrot.slane %v1777, %v1783
        %v1785 = vcombine.low %v1683, %v1684
        %v1787 = vunpack.c.l.s4 1983009808
        %v1788 = vunpack.c.0.s8 %v1787
        %v1789 = vlaneseq
        %v1790 = vshrl.u32 %v1789, 7
        %v1791 = vsub.s32 %v1788, %v1790
        %v1792 = vrot.slane %v1785, %v1791
        %v1793 = vcombine.low %v1768, %v1776
        %v1795 = vunpack.c.l.s4 1934713408
        %v1796 = vunpack.c.0.s8 %v1795
        %v1797 = vlaneseq
        %v1798 = vshrl.u32 %v1797, 7
        %v1799 = vsub.s32 %v1796, %v1798
        %v1800 = vrot.slane %v1793, %v1799
        %v1801 = vcombine.low %v1784, %v1792
        %v1803 = vunpack.c.l.s4 1934713408
        %v1804 = vunpack.c.0.s8 %v1803
        %v1805 = vlaneseq
        %v1806 = vshrl.u32 %v1805, 7
        %v1807 = vsub.s32 %v1804, %v1806
        %v1808 = vrot.slane %v1801, %v1807
        %v1809 = vcombine.low %v1800, %v1808
        %v1810 = vcombine.high %v1800, %v1808
        %v1812 = vunpack.c.l.s4 1934713408
        %v1813 = vunpack.c.0.s8 %v1812
        %v1814 = vlaneseq
        %v1815 = vshrl.u32 %v1814, 7
        %v1816 = vsub.s32 %v1813, %v1815
        %v1817 = vrot.slane %v1723, %v1816
        %v1818 = vcombine.high %v1817, 0.0
        %v1819 = vcombine.low %v1747, %v1748
        %v1821 = vunpack.c.l.s4 1983009808
        %v1822 = vunpack.c.0.s8 %v1821
        %v1823 = vlaneseq
        %v1824 = vshrl.u32 %v1823, 7
        %v1825 = vsub.s32 %v1822, %v1824
        %v1826 = vrot.slane %v1819, %v1825
        %v1827 = vcombine.low %v1730, %v1739
        %v1829 = vunpack.c.l.s4 1983009808
        %v1830 = vunpack.c.0.s8 %v1829
        %v1831 = vlaneseq
        %v1832 = vshrl.u32 %v1831, 7
        %v1833 = vsub.s32 %v1830, %v1832
        %v1834 = vrot.slane %v1827, %v1833
        %v1835 = vcombine.low %v1749, %v1750
        %v1837 = vunpack.c.l.s4 1983009808
        %v1838 = vunpack.c.0.s8 %v1837
        %v1839 = vlaneseq
        %v1840 = vshrl.u32 %v1839, 7
        %v1841 = vsub.s32 %v1838, %v1840
        %v1842 = vrot.slane %v1835, %v1841
        %v1843 = vcombine.low %v1746, %v1760
        %v1845 = vunpack.c.l.s4 1983009808
        %v1846 = vunpack.c.0.s8 %v1845
        %v1847 = vlaneseq
        %v1848 = vshrl.u32 %v1847, 7
        %v1849 = vsub.s32 %v1846, %v1848
        %v1850 = vrot.slane %v1843, %v1849
        %v1851 = vcombine.low %v1826, %v1834
        %v1853 = vunpack.c.l.s4 1934713408
        %v1854 = vunpack.c.0.s8 %v1853
        %v1855 = vlaneseq
        %v1856 = vshrl.u32 %v1855, 7
        %v1857 = vsub.s32 %v1854, %v1856
        %v1858 = vrot.slane %v1851, %v1857
        %v1859 = vcombine.low %v1842, %v1850
        %v1861 = vunpack.c.l.s4 1934713408
        %v1862 = vunpack.c.0.s8 %v1861
        %v1863 = vlaneseq
        %v1864 = vshrl.u32 %v1863, 7
        %v1865 = vsub.s32 %v1862, %v1864
        %v1866 = vrot.slane %v1859, %v1865
        %v1867 = vcombine.low %v1858, %v1866
        %v1868 = vcombine.high %v1858, %v1866
        %v1869 = vcombine.high %v1760, 0.0
        %v1871 = vunpack.c.l.s4 1934713408
        %v1872 = vunpack.c.0.s8 %v1871
        %v1873 = vlaneseq
        %v1874 = vshrl.u32 %v1873, 7
        %v1875 = vsub.s32 %v1872, %v1874
        %v1876 = vrot.slane %v1869, %v1875
        %v1877 = vcombine.high %v1876, 0.0
        %v1878 = vpack.c.bf16 %v1817, %v1809
        %v1879 = vpack.c.bf16 %v1818, %v1810
        %v1880 = vpack.c.bf16 %v1876, %v1867
        %v1881 = vpack.c.bf16 %v1877, %v1868
        %vm1882 = vcmask 130048
        %v1884 = vsel %vm1882, %v1311, 0
        %v1887 = vsel %vm1882, %v1599, 0
        %1889 = vmatprep.subr.bf16.mxu0 0
        %1890 = vmatpush1.bf16.xpose.msra.mxu0 %v1887
        %1891 = vmatprep.subr.bf16.mxu0 0
        %1892 = vmatpush1.bf16.xpose.msra.mxu0 0
        %1893 = vmatprep.subr.bf16.mxu0 0
        %1894 = vmatpush1.bf16.xpose.msra.mxu0 0
        %1895 = vmatprep.subr.bf16.mxu0 0
        %1896 = vmatpush1.bf16.xpose.msra.mxu0 0
        %1897 = vmatprep.subr.bf16.mxu0 0
        %1898 = vmatpush1.bf16.xpose.msra.mxu0 0
        %1899 = vmatprep.subr.bf16.mxu0 0
        %1900 = vmatpush1.bf16.xpose.msra.mxu0 0
        %1901 = vmatprep.subr.bf16.mxu0 0
        %1902 = vmatpush1.bf16.xpose.msra.mxu0 0
        %1903 = vmatprep.subr.bf16.mxu0 0
        %1904 = vmatpush1.bf16.xpose.msra.mxu0 0
        %1905 = vmatprep.subr.bf16.mxu0 0
        %1906 = vmatpush1.bf16.xpose.msra.mxu0 0
        %1907 = vmatprep.subr.bf16.mxu0 0
        %1908 = vmatpush1.bf16.xpose.msra.mxu0 0
        %1909 = vmatprep.subr.bf16.mxu0 0
        %1910 = vmatpush1.bf16.xpose.msra.mxu0 0
        %1911 = vmatprep.subr.bf16.mxu0 0
        %1912 = vmatpush1.bf16.xpose.msra.mxu0 0
        %1913 = vmatprep.subr.bf16.mxu0 0
        %1914 = vmatpush1.bf16.xpose.msra.mxu0 0
        %1915 = vmatprep.subr.bf16.mxu0 0
        %1916 = vmatpush1.bf16.xpose.msra.mxu0 0
        %1917 = vmatprep.subr.bf16.mxu0 0
        %1918 = vmatpush1.bf16.xpose.msra.mxu0 0
        %1919 = vmatprep.subr.bf16.mxu0 0
        %1920 = vmatpush1.bf16.xpose.msra.mxu0 0
        %1921 = vmatprep.mubr.bf16.mxu0 0
        %1922 = vmatmul.mubr.bf16.gmra.mrb[0].mxu0 %v1884
        %v1923 = vpop.f32.mrb[0].mxu0
        %v1924 = vadd.f32 0.0, %v1923
        %v1925 = vpop.f32.mrb[0].mxu0
        %v1926 = vpop.f32.mrb[0].mxu0
        %v1927 = vadd.f32 0.0, %v1926
        %v1928 = vpop.f32.mrb[0].mxu0
        %1929 = vdwg.mxu0
        %v1931 = vsel %vm1882, %v1312, 0
        %v1934 = vsel %vm1882, %v1600, 0
        %1936 = vmatprep.subr.bf16.mxu0 0
        %1937 = vmatpush1.bf16.xpose.msra.mxu0 %v1934
        %1938 = vmatprep.subr.bf16.mxu0 0
        %1939 = vmatpush1.bf16.xpose.msra.mxu0 0
        %1940 = vmatprep.subr.bf16.mxu0 0
        %1941 = vmatpush1.bf16.xpose.msra.mxu0 0
        %1942 = vmatprep.subr.bf16.mxu0 0
        %1943 = vmatpush1.bf16.xpose.msra.mxu0 0
        %1944 = vmatprep.subr.bf16.mxu0 0
        %1945 = vmatpush1.bf16.xpose.msra.mxu0 0
        %1946 = vmatprep.subr.bf16.mxu0 0
        %1947 = vmatpush1.bf16.xpose.msra.mxu0 0
        %1948 = vmatprep.subr.bf16.mxu0 0
        %1949 = vmatpush1.bf16.xpose.msra.mxu0 0
        %1950 = vmatprep.subr.bf16.mxu0 0
        %1951 = vmatpush1.bf16.xpose.msra.mxu0 0
        %1952 = vmatprep.subr.bf16.mxu0 0
        %1953 = vmatpush1.bf16.xpose.msra.mxu0 0
        %1954 = vmatprep.subr.bf16.mxu0 0
        %1955 = vmatpush1.bf16.xpose.msra.mxu0 0
        %1956 = vmatprep.subr.bf16.mxu0 0
        %1957 = vmatpush1.bf16.xpose.msra.mxu0 0
        %1958 = vmatprep.subr.bf16.mxu0 0
        %1959 = vmatpush1.bf16.xpose.msra.mxu0 0
        %1960 = vmatprep.subr.bf16.mxu0 0
        %1961 = vmatpush1.bf16.xpose.msra.mxu0 0
        %1962 = vmatprep.subr.bf16.mxu0 0
        %1963 = vmatpush1.bf16.xpose.msra.mxu0 0
        %1964 = vmatprep.subr.bf16.mxu0 0
        %1965 = vmatpush1.bf16.xpose.msra.mxu0 0
        %1966 = vmatprep.subr.bf16.mxu0 0
        %1967 = vmatpush1.bf16.xpose.msra.mxu0 0
        %1968 = vmatprep.mubr.bf16.mxu0 0
        %1969 = vmatmul.mubr.bf16.gmra.mrb[0].mxu0 %v1931
        %v1970 = vpop.f32.mrb[0].mxu0
        %v1971 = vadd.f32 0.0, %v1970
        %v1972 = vpop.f32.mrb[0].mxu0
        %v1973 = vpop.f32.mrb[0].mxu0
        %v1974 = vadd.f32 0.0, %v1973
        %v1975 = vpop.f32.mrb[0].mxu0
        %1976 = vdwg.mxu0
        %v1978 = vsel %vm1882, %v1313, 0
        %v1981 = vsel %vm1882, %v1601, 0
        %1983 = vmatprep.subr.bf16.mxu0 0
        %1984 = vmatpush1.bf16.xpose.msra.mxu0 %v1981
        %1985 = vmatprep.subr.bf16.mxu0 0
        %1986 = vmatpush1.bf16.xpose.msra.mxu0 0
        %1987 = vmatprep.subr.bf16.mxu0 0
        %1988 = vmatpush1.bf16.xpose.msra.mxu0 0
        %1989 = vmatprep.subr.bf16.mxu0 0
        %1990 = vmatpush1.bf16.xpose.msra.mxu0 0
        %1991 = vmatprep.subr.bf16.mxu0 0
        %1992 = vmatpush1.bf16.xpose.msra.mxu0 0
        %1993 = vmatprep.subr.bf16.mxu0 0
        %1994 = vmatpush1.bf16.xpose.msra.mxu0 0
        %1995 = vmatprep.subr.bf16.mxu0 0
        %1996 = vmatpush1.bf16.xpose.msra.mxu0 0
        %1997 = vmatprep.subr.bf16.mxu0 0
        %1998 = vmatpush1.bf16.xpose.msra.mxu0 0
        %1999 = vmatprep.subr.bf16.mxu0 0
        %2000 = vmatpush1.bf16.xpose.msra.mxu0 0
        %2001 = vmatprep.subr.bf16.mxu0 0
        %2002 = vmatpush1.bf16.xpose.msra.mxu0 0
        %2003 = vmatprep.subr.bf16.mxu0 0
        %2004 = vmatpush1.bf16.xpose.msra.mxu0 0
        %2005 = vmatprep.subr.bf16.mxu0 0
        %2006 = vmatpush1.bf16.xpose.msra.mxu0 0
        %2007 = vmatprep.subr.bf16.mxu0 0
        %2008 = vmatpush1.bf16.xpose.msra.mxu0 0
        %2009 = vmatprep.subr.bf16.mxu0 0
        %2010 = vmatpush1.bf16.xpose.msra.mxu0 0
        %2011 = vmatprep.subr.bf16.mxu0 0
        %2012 = vmatpush1.bf16.xpose.msra.mxu0 0
        %2013 = vmatprep.subr.bf16.mxu0 0
        %2014 = vmatpush1.bf16.xpose.msra.mxu0 0
        %2015 = vmatprep.mubr.bf16.mxu0 0
        %2016 = vmatmul.mubr.bf16.gmra.mrb[0].mxu0 %v1978
        %v2017 = vpop.f32.mrb[0].mxu0
        %v2018 = vadd.f32 0.0, %v2017
        %v2019 = vpop.f32.mrb[0].mxu0
        %v2020 = vpop.f32.mrb[0].mxu0
        %v2021 = vadd.f32 0.0, %v2020
        %v2022 = vpop.f32.mrb[0].mxu0
        %2023 = vdwg.mxu0
        %v2025 = vsel %vm1882, %v1314, 0
        %v2028 = vsel %vm1882, %v1602, 0
        %2030 = vmatprep.subr.bf16.mxu0 0
        %2031 = vmatpush1.bf16.xpose.msra.mxu0 %v2028
        %2032 = vmatprep.subr.bf16.mxu0 0
        %2033 = vmatpush1.bf16.xpose.msra.mxu0 0
        %2034 = vmatprep.subr.bf16.mxu0 0
        %2035 = vmatpush1.bf16.xpose.msra.mxu0 0
        %2036 = vmatprep.subr.bf16.mxu0 0
        %2037 = vmatpush1.bf16.xpose.msra.mxu0 0
        %2038 = vmatprep.subr.bf16.mxu0 0
        %2039 = vmatpush1.bf16.xpose.msra.mxu0 0
        %2040 = vmatprep.subr.bf16.mxu0 0
        %2041 = vmatpush1.bf16.xpose.msra.mxu0 0
        %2042 = vmatprep.subr.bf16.mxu0 0
        %2043 = vmatpush1.bf16.xpose.msra.mxu0 0
        %2044 = vmatprep.subr.bf16.mxu0 0
        %2045 = vmatpush1.bf16.xpose.msra.mxu0 0
        %2046 = vmatprep.subr.bf16.mxu0 0
        %2047 = vmatpush1.bf16.xpose.msra.mxu0 0
        %2048 = vmatprep.subr.bf16.mxu0 0
        %2049 = vmatpush1.bf16.xpose.msra.mxu0 0
        %2050 = vmatprep.subr.bf16.mxu0 0
        %2051 = vmatpush1.bf16.xpose.msra.mxu0 0
        %2052 = vmatprep.subr.bf16.mxu0 0
        %2053 = vmatpush1.bf16.xpose.msra.mxu0 0
        %2054 = vmatprep.subr.bf16.mxu0 0
        %2055 = vmatpush1.bf16.xpose.msra.mxu0 0
        %2056 = vmatprep.subr.bf16.mxu0 0
        %2057 = vmatpush1.bf16.xpose.msra.mxu0 0
        %2058 = vmatprep.subr.bf16.mxu0 0
        %2059 = vmatpush1.bf16.xpose.msra.mxu0 0
        %2060 = vmatprep.subr.bf16.mxu0 0
        %2061 = vmatpush1.bf16.xpose.msra.mxu0 0
        %2062 = vmatprep.mubr.bf16.mxu0 0
        %2063 = vmatmul.mubr.bf16.gmra.mrb[0].mxu0 %v2025
        %v2064 = vpop.f32.mrb[0].mxu0
        %v2065 = vadd.f32 0.0, %v2064
        %v2066 = vpop.f32.mrb[0].mxu0
        %v2067 = vpop.f32.mrb[0].mxu0
        %v2068 = vadd.f32 0.0, %v2067
        %v2069 = vpop.f32.mrb[0].mxu0
        %2070 = vdwg.mxu0
        %vm2071 = vcmask 72704
        %v2072 = vsel %vm2071, %v1924, -inf
        %2073 = vmax.xlane.f32.xlu0 %v2072
        %v2074 = vpop.xlane.xlu0 %2073
        %vm2075 = vcmask 65536
        %v2076 = vsel %vm2075, %v1927, -inf
        %2077 = vmax.xlane.f32.xlu0 %v2076
        %v2078 = vpop.xlane.xlu0 %2077
        %v2079 = vsel %vm2071, %v1971, -inf
        %2080 = vmax.xlane.f32.xlu0 %v2079
        %v2081 = vpop.xlane.xlu0 %2080
        %v2082 = vsel %vm2075, %v1974, -inf
        %2083 = vmax.xlane.f32.xlu0 %v2082
        %v2084 = vpop.xlane.xlu0 %2083
        %v2085 = vsel %vm2071, %v2018, -inf
        %2086 = vmax.xlane.f32.xlu0 %v2085
        %v2087 = vpop.xlane.xlu0 %2086
        %v2088 = vsel %vm2075, %v2021, -inf
        %2089 = vmax.xlane.f32.xlu0 %v2088
        %v2090 = vpop.xlane.xlu0 %2089
        %v2091 = vsel %vm2071, %v2065, -inf
        %2092 = vmax.xlane.f32.xlu0 %v2091
        %v2093 = vpop.xlane.xlu0 %2092
        %v2094 = vsel %vm2075, %v2068, -inf
        %2095 = vmax.xlane.f32.xlu0 %v2094
        %v2096 = vpop.xlane.xlu0 %2095
        %v2097 = vsub.f32 %v1924, %v2074
        %v2098 = vsub.f32 %v1927, %v2078
        %v2099 = vsub.f32 %v1971, %v2081
        %v2100 = vsub.f32 %v1974, %v2084
        %v2101 = vsub.f32 %v2018, %v2087
        %v2102 = vsub.f32 %v2021, %v2090
        %v2103 = vsub.f32 %v2065, %v2093
        %v2104 = vsub.f32 %v2068, %v2096
        %v2105 = vmul.f32 %v2097, 1.442695
        %v2106 = vpow.pop %v2105
        %v2107 = vmul.f32 %v2098, 1.442695
        %v2108 = vpow.pop %v2107
        %v2109 = vmul.f32 %v2099, 1.442695
        %v2110 = vpow.pop %v2109
        %v2111 = vmul.f32 %v2100, 1.442695
        %v2112 = vpow.pop %v2111
        %v2113 = vmul.f32 %v2101, 1.442695
        %v2114 = vpow.pop %v2113
        %v2115 = vmul.f32 %v2102, 1.442695
        %v2116 = vpow.pop %v2115
        %v2117 = vmul.f32 %v2103, 1.442695
        %v2118 = vpow.pop %v2117
        %v2119 = vmul.f32 %v2104, 1.442695
        %v2120 = vpow.pop %v2119
        %v2121 = vsel %vm2071, %v2106, 0.0
        %2122 = vadd.xlane.f32.xlu0 %v2121
        %v2123 = vpop.xlane.xlu0 %2122
        %v2124 = vsel %vm2075, %v2108, 0.0
        %2125 = vadd.xlane.f32.xlu0 %v2124
        %v2126 = vpop.xlane.xlu0 %2125
        %v2127 = vsel %vm2071, %v2110, 0.0
        %2128 = vadd.xlane.f32.xlu0 %v2127
        %v2129 = vpop.xlane.xlu0 %2128
        %v2130 = vsel %vm2075, %v2112, 0.0
        %2131 = vadd.xlane.f32.xlu0 %v2130
        %v2132 = vpop.xlane.xlu0 %2131
        %v2133 = vsel %vm2071, %v2114, 0.0
        %2134 = vadd.xlane.f32.xlu0 %v2133
        %v2135 = vpop.xlane.xlu0 %2134
        %v2136 = vsel %vm2075, %v2116, 0.0
        %2137 = vadd.xlane.f32.xlu0 %v2136
        %v2138 = vpop.xlane.xlu0 %2137
        %v2139 = vsel %vm2071, %v2118, 0.0
        %2140 = vadd.xlane.f32.xlu0 %v2139
        %v2141 = vpop.xlane.xlu0 %2140
        %v2142 = vsel %vm2075, %v2120, 0.0
        %2143 = vadd.xlane.f32.xlu0 %v2142
        %v2144 = vpop.xlane.xlu0 %2143
        %v2145 = vrcp.pop %v2123
        %v2146 = vrcp.pop %v2126
        %v2147 = vrcp.pop %v2129
        %v2148 = vrcp.pop %v2132
        %v2149 = vrcp.pop %v2135
        %v2150 = vrcp.pop %v2138
        %v2151 = vrcp.pop %v2141
        %v2152 = vrcp.pop %v2144
        %v2153 = vmul.f32 %v2106, %v2145
        %v2154 = vmul.f32 %v2108, %v2146
        %v2155 = vmul.f32 %v2110, %v2147
        %v2156 = vmul.f32 %v2112, %v2148
        %v2157 = vmul.f32 %v2114, %v2149
        %v2158 = vmul.f32 %v2116, %v2150
        %v2159 = vmul.f32 %v2118, %v2151
        %v2160 = vmul.f32 %v2120, %v2152
        %v2161 = vpack.c.bf16 %v2154, %v2153
        %v2162 = vpack.c.bf16 %v2156, %v2155
        %v2163 = vpack.c.bf16 %v2158, %v2157
        %v2164 = vpack.c.bf16 %v2160, %v2159
        %v2166 = vsel %vm2071, %v2161, 0
        %vm2168 = vcmask 1043456
        %vm2169 = vcmask 1044480
        %v2170 = vsel %vm2168, 4294967295, 65535
        %v2171 = vsel %vm2169, %v2170, 0
        %v2173 = vand.u32 %v1878, %v2171
        %2175 = vmatprep.subr.bf16.mxu0 0
        %2176 = vmatpush1.bf16.msra.mxu0 %v2173
        %2177 = vmatprep.subr.bf16.mxu0 0
        %2178 = vmatpush1.bf16.msra.mxu0 0
        %2179 = vmatprep.subr.bf16.mxu0 0
        %2180 = vmatpush1.bf16.msra.mxu0 0
        %2181 = vmatprep.subr.bf16.mxu0 0
        %2182 = vmatpush1.bf16.msra.mxu0 0
        %2183 = vmatprep.subr.bf16.mxu0 0
        %2184 = vmatpush1.bf16.msra.mxu0 0
        %2185 = vmatprep.subr.bf16.mxu0 0
        %2186 = vmatpush1.bf16.msra.mxu0 0
        %2187 = vmatprep.subr.bf16.mxu0 0
        %2188 = vmatpush1.bf16.msra.mxu0 0
        %2189 = vmatprep.subr.bf16.mxu0 0
        %2190 = vmatpush1.bf16.msra.mxu0 0
        %2191 = vmatprep.subr.bf16.mxu0 0
        %2192 = vmatpush1.bf16.msra.mxu0 0
        %2193 = vmatprep.subr.bf16.mxu0 0
        %2194 = vmatpush1.bf16.msra.mxu0 0
        %2195 = vmatprep.subr.bf16.mxu0 0
        %2196 = vmatpush1.bf16.msra.mxu0 0
        %2197 = vmatprep.subr.bf16.mxu0 0
        %2198 = vmatpush1.bf16.msra.mxu0 0
        %2199 = vmatprep.subr.bf16.mxu0 0
        %2200 = vmatpush1.bf16.msra.mxu0 0
        %2201 = vmatprep.subr.bf16.mxu0 0
        %2202 = vmatpush1.bf16.msra.mxu0 0
        %2203 = vmatprep.subr.bf16.mxu0 0
        %2204 = vmatpush1.bf16.msra.mxu0 0
        %2205 = vmatprep.subr.bf16.mxu0 0
        %2206 = vmatpush1.bf16.msra.mxu0 0
        %2207 = vmatprep.mubr.bf16.mxu0 0
        %2208 = vmatmul.mubr.bf16.gmra.mrb[0].mxu0 %v2166
        %v2209 = vpop.f32.mrb[0].mxu0
        %v2210 = vadd.f32 0.0, %v2209
        %v2211 = vpop.f32.mrb[0].mxu0
        %v2212 = vpop.f32.mrb[0].mxu0
        %v2213 = vadd.f32 0.0, %v2212
        %v2214 = vpop.f32.mrb[0].mxu0
        %2215 = vdwg.mxu0
        %v2217 = vsel %vm2071, %v2162, 0
        %v2220 = vand.u32 %v1879, %v2171
        %2222 = vmatprep.subr.bf16.mxu0 0
        %2223 = vmatpush1.bf16.msra.mxu0 %v2220
        %2224 = vmatprep.subr.bf16.mxu0 0
        %2225 = vmatpush1.bf16.msra.mxu0 0
        %2226 = vmatprep.subr.bf16.mxu0 0
        %2227 = vmatpush1.bf16.msra.mxu0 0
        %2228 = vmatprep.subr.bf16.mxu0 0
        %2229 = vmatpush1.bf16.msra.mxu0 0
        %2230 = vmatprep.subr.bf16.mxu0 0
        %2231 = vmatpush1.bf16.msra.mxu0 0
        %2232 = vmatprep.subr.bf16.mxu0 0
        %2233 = vmatpush1.bf16.msra.mxu0 0
        %2234 = vmatprep.subr.bf16.mxu0 0
        %2235 = vmatpush1.bf16.msra.mxu0 0
        %2236 = vmatprep.subr.bf16.mxu0 0
        %2237 = vmatpush1.bf16.msra.mxu0 0
        %2238 = vmatprep.subr.bf16.mxu0 0
        %2239 = vmatpush1.bf16.msra.mxu0 0
        %2240 = vmatprep.subr.bf16.mxu0 0
        %2241 = vmatpush1.bf16.msra.mxu0 0
        %2242 = vmatprep.subr.bf16.mxu0 0
        %2243 = vmatpush1.bf16.msra.mxu0 0
        %2244 = vmatprep.subr.bf16.mxu0 0
        %2245 = vmatpush1.bf16.msra.mxu0 0
        %2246 = vmatprep.subr.bf16.mxu0 0
        %2247 = vmatpush1.bf16.msra.mxu0 0
        %2248 = vmatprep.subr.bf16.mxu0 0
        %2249 = vmatpush1.bf16.msra.mxu0 0
        %2250 = vmatprep.subr.bf16.mxu0 0
        %2251 = vmatpush1.bf16.msra.mxu0 0
        %2252 = vmatprep.subr.bf16.mxu0 0
        %2253 = vmatpush1.bf16.msra.mxu0 0
        %2254 = vmatprep.mubr.bf16.mxu0 0
        %2255 = vmatmul.mubr.bf16.gmra.mrb[0].mxu0 %v2217
        %v2256 = vpop.f32.mrb[0].mxu0
        %v2257 = vadd.f32 0.0, %v2256
        %v2258 = vpop.f32.mrb[0].mxu0
        %v2259 = vpop.f32.mrb[0].mxu0
        %v2260 = vadd.f32 0.0, %v2259
        %v2261 = vpop.f32.mrb[0].mxu0
        %2262 = vdwg.mxu0
        %v2264 = vsel %vm2071, %v2163, 0
        %v2267 = vand.u32 %v1880, %v2171
        %2269 = vmatprep.subr.bf16.mxu0 0
        %2270 = vmatpush1.bf16.msra.mxu0 %v2267
        %2271 = vmatprep.subr.bf16.mxu0 0
        %2272 = vmatpush1.bf16.msra.mxu0 0
        %2273 = vmatprep.subr.bf16.mxu0 0
        %2274 = vmatpush1.bf16.msra.mxu0 0
        %2275 = vmatprep.subr.bf16.mxu0 0
        %2276 = vmatpush1.bf16.msra.mxu0 0
        %2277 = vmatprep.subr.bf16.mxu0 0
        %2278 = vmatpush1.bf16.msra.mxu0 0
        %2279 = vmatprep.subr.bf16.mxu0 0
        %2280 = vmatpush1.bf16.msra.mxu0 0
        %2281 = vmatprep.subr.bf16.mxu0 0
        %2282 = vmatpush1.bf16.msra.mxu0 0
        %2283 = vmatprep.subr.bf16.mxu0 0
        %2284 = vmatpush1.bf16.msra.mxu0 0
        %2285 = vmatprep.subr.bf16.mxu0 0
        %2286 = vmatpush1.bf16.msra.mxu0 0
        %2287 = vmatprep.subr.bf16.mxu0 0
        %2288 = vmatpush1.bf16.msra.mxu0 0
        %2289 = vmatprep.subr.bf16.mxu0 0
        %2290 = vmatpush1.bf16.msra.mxu0 0
        %2291 = vmatprep.subr.bf16.mxu0 0
        %2292 = vmatpush1.bf16.msra.mxu0 0
        %2293 = vmatprep.subr.bf16.mxu0 0
        %2294 = vmatpush1.bf16.msra.mxu0 0
        %2295 = vmatprep.subr.bf16.mxu0 0
        %2296 = vmatpush1.bf16.msra.mxu0 0
        %2297 = vmatprep.subr.bf16.mxu0 0
        %2298 = vmatpush1.bf16.msra.mxu0 0
        %2299 = vmatprep.subr.bf16.mxu0 0
        %2300 = vmatpush1.bf16.msra.mxu0 0
        %2301 = vmatprep.mubr.bf16.mxu0 0
        %2302 = vmatmul.mubr.bf16.gmra.mrb[0].mxu0 %v2264
        %v2303 = vpop.f32.mrb[0].mxu0
        %v2304 = vadd.f32 0.0, %v2303
        %v2305 = vpop.f32.mrb[0].mxu0
        %v2306 = vpop.f32.mrb[0].mxu0
        %v2307 = vadd.f32 0.0, %v2306
        %v2308 = vpop.f32.mrb[0].mxu0
        %2309 = vdwg.mxu0
        %v2311 = vsel %vm2071, %v2164, 0
        %v2314 = vand.u32 %v1881, %v2171
        %2316 = vmatprep.subr.bf16.mxu0 0
        %2317 = vmatpush1.bf16.msra.mxu0 %v2314
        %2318 = vmatprep.subr.bf16.mxu0 0
        %2319 = vmatpush1.bf16.msra.mxu0 0
        %2320 = vmatprep.subr.bf16.mxu0 0
        %2321 = vmatpush1.bf16.msra.mxu0 0
        %2322 = vmatprep.subr.bf16.mxu0 0
        %2323 = vmatpush1.bf16.msra.mxu0 0
        %2324 = vmatprep.subr.bf16.mxu0 0
        %2325 = vmatpush1.bf16.msra.mxu0 0
        %2326 = vmatprep.subr.bf16.mxu0 0
        %2327 = vmatpush1.bf16.msra.mxu0 0
        %2328 = vmatprep.subr.bf16.mxu0 0
        %2329 = vmatpush1.bf16.msra.mxu0 0
        %2330 = vmatprep.subr.bf16.mxu0 0
        %2331 = vmatpush1.bf16.msra.mxu0 0
        %2332 = vmatprep.subr.bf16.mxu0 0
        %2333 = vmatpush1.bf16.msra.mxu0 0
        %2334 = vmatprep.subr.bf16.mxu0 0
        %2335 = vmatpush1.bf16.msra.mxu0 0
        %2336 = vmatprep.subr.bf16.mxu0 0
        %2337 = vmatpush1.bf16.msra.mxu0 0
        %2338 = vmatprep.subr.bf16.mxu0 0
        %2339 = vmatpush1.bf16.msra.mxu0 0
        %2340 = vmatprep.subr.bf16.mxu0 0
        %2341 = vmatpush1.bf16.msra.mxu0 0
        %2342 = vmatprep.subr.bf16.mxu0 0
        %2343 = vmatpush1.bf16.msra.mxu0 0
        %2344 = vmatprep.subr.bf16.mxu0 0
        %2345 = vmatpush1.bf16.msra.mxu0 0
        %2346 = vmatprep.subr.bf16.mxu0 0
        %2347 = vmatpush1.bf16.msra.mxu0 0
        %2348 = vmatprep.mubr.bf16.mxu0 0
        %2349 = vmatmul.mubr.bf16.gmra.mrb[0].mxu0 %v2311
        %v2350 = vpop.f32.mrb[0].mxu0
        %v2351 = vadd.f32 0.0, %v2350
        %v2352 = vpop.f32.mrb[0].mxu0
        %v2353 = vpop.f32.mrb[0].mxu0
        %v2354 = vadd.f32 0.0, %v2353
        %v2355 = vpop.f32.mrb[0].mxu0
        %2356 = vdwg.mxu0
        %v2357 = vcombine.high %v2210, 0.0
        %v2359 = vunpack.c.l.s4 1983009808
        %v2360 = vunpack.c.0.s8 %v2359
        %v2361 = vlaneseq
        %v2362 = vshrl.u32 %v2361, 7
        %v2363 = vsub.s32 %v2360, %v2362
        %v2364 = vrot.slane %v2210, %v2363
        %v2366 = vunpack.c.l.s4 1983009808
        %v2367 = vunpack.c.0.s8 %v2366
        %v2368 = vlaneseq
        %v2369 = vshrl.u32 %v2368, 7
        %v2370 = vsub.s32 %v2367, %v2369
        %v2371 = vrot.slane %v2357, %v2370
        %v2372 = vcombine.high %v2257, 0.0
        %v2374 = vunpack.c.l.s4 1983009808
        %v2375 = vunpack.c.0.s8 %v2374
        %v2376 = vlaneseq
        %v2377 = vshrl.u32 %v2376, 7
        %v2378 = vsub.s32 %v2375, %v2377
        %v2379 = vrot.slane %v2257, %v2378
        %v2381 = vunpack.c.l.s4 1983009808
        %v2382 = vunpack.c.0.s8 %v2381
        %v2383 = vlaneseq
        %v2384 = vshrl.u32 %v2383, 7
        %v2385 = vsub.s32 %v2382, %v2384
        %v2386 = vrot.slane %v2372, %v2385
        %v2387 = vcombine.low %v2364, %v2379
        %v2388 = vcombine.high %v2364, %v2379
        %v2390 = vunpack.c.l.s4 1934713408
        %v2391 = vunpack.c.0.s8 %v2390
        %v2392 = vlaneseq
        %v2393 = vshrl.u32 %v2392, 7
        %v2394 = vsub.s32 %v2391, %v2393
        %v2395 = vrot.slane %v2387, %v2394
        %v2397 = vunpack.c.l.s4 1934713408
        %v2398 = vunpack.c.0.s8 %v2397
        %v2399 = vlaneseq
        %v2400 = vshrl.u32 %v2399, 7
        %v2401 = vsub.s32 %v2398, %v2400
        %v2402 = vrot.slane %v2388, %v2401
        %v2403 = vcombine.low %v2371, %v2386
        %v2404 = vcombine.high %v2371, %v2386
        %v2406 = vunpack.c.l.s4 1934713408
        %v2407 = vunpack.c.0.s8 %v2406
        %v2408 = vlaneseq
        %v2409 = vshrl.u32 %v2408, 7
        %v2410 = vsub.s32 %v2407, %v2409
        %v2411 = vrot.slane %v2403, %v2410
        %v2413 = vunpack.c.l.s4 1934713408
        %v2414 = vunpack.c.0.s8 %v2413
        %v2415 = vlaneseq
        %v2416 = vshrl.u32 %v2415, 7
        %v2417 = vsub.s32 %v2414, %v2416
        %v2418 = vrot.slane %v2404, %v2417
        %v2419 = vcombine.high %v2395, 0.0
        %v2420 = vcombine.high %v2402, 0.0
        %v2421 = vcombine.high %v2411, 0.0
        %v2422 = vcombine.high %v2418, 0.0
        %v2423 = vcombine.low %v2213, %v2260
        %v2425 = vunpack.c.l.s4 1934713408
        %v2426 = vunpack.c.0.s8 %v2425
        %v2427 = vlaneseq
        %v2428 = vshrl.u32 %v2427, 7
        %v2429 = vsub.s32 %v2426, %v2428
        %v2430 = vrot.slane %v2423, %v2429
        %v2431 = vcombine.high %v2304, 0.0
        %v2433 = vunpack.c.l.s4 1983009808
        %v2434 = vunpack.c.0.s8 %v2433
        %v2435 = vlaneseq
        %v2436 = vshrl.u32 %v2435, 7
        %v2437 = vsub.s32 %v2434, %v2436
        %v2438 = vrot.slane %v2304, %v2437
        %v2440 = vunpack.c.l.s4 1983009808
        %v2441 = vunpack.c.0.s8 %v2440
        %v2442 = vlaneseq
        %v2443 = vshrl.u32 %v2442, 7
        %v2444 = vsub.s32 %v2441, %v2443
        %v2445 = vrot.slane %v2431, %v2444
        %v2446 = vcombine.high %v2351, 0.0
        %v2448 = vunpack.c.l.s4 1983009808
        %v2449 = vunpack.c.0.s8 %v2448
        %v2450 = vlaneseq
        %v2451 = vshrl.u32 %v2450, 7
        %v2452 = vsub.s32 %v2449, %v2451
        %v2453 = vrot.slane %v2351, %v2452
        %v2455 = vunpack.c.l.s4 1983009808
        %v2456 = vunpack.c.0.s8 %v2455
        %v2457 = vlaneseq
        %v2458 = vshrl.u32 %v2457, 7
        %v2459 = vsub.s32 %v2456, %v2458
        %v2460 = vrot.slane %v2446, %v2459
        %v2461 = vcombine.low %v2438, %v2453
        %v2462 = vcombine.high %v2438, %v2453
        %v2464 = vunpack.c.l.s4 1934713408
        %v2465 = vunpack.c.0.s8 %v2464
        %v2466 = vlaneseq
        %v2467 = vshrl.u32 %v2466, 7
        %v2468 = vsub.s32 %v2465, %v2467
        %v2469 = vrot.slane %v2461, %v2468
        %v2471 = vunpack.c.l.s4 1934713408
        %v2472 = vunpack.c.0.s8 %v2471
        %v2473 = vlaneseq
        %v2474 = vshrl.u32 %v2473, 7
        %v2475 = vsub.s32 %v2472, %v2474
        %v2476 = vrot.slane %v2462, %v2475
        %v2477 = vcombine.low %v2445, %v2460
        %v2478 = vcombine.high %v2445, %v2460
        %v2480 = vunpack.c.l.s4 1934713408
        %v2481 = vunpack.c.0.s8 %v2480
        %v2482 = vlaneseq
        %v2483 = vshrl.u32 %v2482, 7
        %v2484 = vsub.s32 %v2481, %v2483
        %v2485 = vrot.slane %v2477, %v2484
        %v2487 = vunpack.c.l.s4 1934713408
        %v2488 = vunpack.c.0.s8 %v2487
        %v2489 = vlaneseq
        %v2490 = vshrl.u32 %v2489, 7
        %v2491 = vsub.s32 %v2488, %v2490
        %v2492 = vrot.slane %v2478, %v2491
        %v2493 = vcombine.high %v2469, 0.0
        %v2494 = vcombine.high %v2476, 0.0
        %v2495 = vcombine.high %v2485, 0.0
        %v2496 = vcombine.low %v2307, %v2354
        %v2497 = vcombine.low %v2395, %v2402
        %v2499 = vunpack.c.l.s4 1983009808
        %v2500 = vunpack.c.0.s8 %v2499
        %v2501 = vlaneseq
        %v2502 = vshrl.u32 %v2501, 7
        %v2503 = vsub.s32 %v2500, %v2502
        %v2504 = vrot.slane %v2497, %v2503
        %v2505 = vcombine.low %v2419, %v2420
        %v2507 = vunpack.c.l.s4 1983009808
        %v2508 = vunpack.c.0.s8 %v2507
        %v2509 = vlaneseq
        %v2510 = vshrl.u32 %v2509, 7
        %v2511 = vsub.s32 %v2508, %v2510
        %v2512 = vrot.slane %v2505, %v2511
        %v2513 = vcombine.low %v2411, %v2418
        %v2515 = vunpack.c.l.s4 1983009808
        %v2516 = vunpack.c.0.s8 %v2515
        %v2517 = vlaneseq
        %v2518 = vshrl.u32 %v2517, 7
        %v2519 = vsub.s32 %v2516, %v2518
        %v2520 = vrot.slane %v2513, %v2519
        %v2521 = vcombine.low %v2421, %v2422
        %v2523 = vunpack.c.l.s4 1983009808
        %v2524 = vunpack.c.0.s8 %v2523
        %v2525 = vlaneseq
        %v2526 = vshrl.u32 %v2525, 7
        %v2527 = vsub.s32 %v2524, %v2526
        %v2528 = vrot.slane %v2521, %v2527
        %v2529 = vcombine.low %v2504, %v2512
        %v2531 = vunpack.c.l.s4 1934713408
        %v2532 = vunpack.c.0.s8 %v2531
        %v2533 = vlaneseq
        %v2534 = vshrl.u32 %v2533, 7
        %v2535 = vsub.s32 %v2532, %v2534
        %v2536 = vrot.slane %v2529, %v2535
        %v2537 = vcombine.low %v2520, %v2528
        %v2539 = vunpack.c.l.s4 1934713408
        %v2540 = vunpack.c.0.s8 %v2539
        %v2541 = vlaneseq
        %v2542 = vshrl.u32 %v2541, 7
        %v2543 = vsub.s32 %v2540, %v2542
        %v2544 = vrot.slane %v2537, %v2543
        %v2545 = vcombine.low %v2536, %v2544
        %v2546 = vcombine.high %v2536, %v2544
        %v2547 = vcombine.low %v2430, %v2493
        %v2549 = vunpack.c.l.s4 1983009808
        %v2550 = vunpack.c.0.s8 %v2549
        %v2551 = vlaneseq
        %v2552 = vshrl.u32 %v2551, 7
        %v2553 = vsub.s32 %v2550, %v2552
        %v2554 = vrot.slane %v2547, %v2553
        %v2555 = vcombine.low %v2469, %v2476
        %v2557 = vunpack.c.l.s4 1983009808
        %v2558 = vunpack.c.0.s8 %v2557
        %v2559 = vlaneseq
        %v2560 = vshrl.u32 %v2559, 7
        %v2561 = vsub.s32 %v2558, %v2560
        %v2562 = vrot.slane %v2555, %v2561
        %v2563 = vcombine.low %v2494, %v2495
        %v2565 = vunpack.c.l.s4 1983009808
        %v2566 = vunpack.c.0.s8 %v2565
        %v2567 = vlaneseq
        %v2568 = vshrl.u32 %v2567, 7
        %v2569 = vsub.s32 %v2566, %v2568
        %v2570 = vrot.slane %v2563, %v2569
        %v2571 = vcombine.low %v2485, %v2492
        %v2573 = vunpack.c.l.s4 1983009808
        %v2574 = vunpack.c.0.s8 %v2573
        %v2575 = vlaneseq
        %v2576 = vshrl.u32 %v2575, 7
        %v2577 = vsub.s32 %v2574, %v2576
        %v2578 = vrot.slane %v2571, %v2577
        %v2579 = vcombine.low %v2554, %v2562
        %v2581 = vunpack.c.l.s4 1934713408
        %v2582 = vunpack.c.0.s8 %v2581
        %v2583 = vlaneseq
        %v2584 = vshrl.u32 %v2583, 7
        %v2585 = vsub.s32 %v2582, %v2584
        %v2586 = vrot.slane %v2579, %v2585
        %v2587 = vcombine.low %v2570, %v2578
        %v2589 = vunpack.c.l.s4 1934713408
        %v2590 = vunpack.c.0.s8 %v2589
        %v2591 = vlaneseq
        %v2592 = vshrl.u32 %v2591, 7
        %v2593 = vsub.s32 %v2590, %v2592
        %v2594 = vrot.slane %v2587, %v2593
        %v2595 = vcombine.low %v2586, %v2594
        %v2596 = vcombine.high %v2586, %v2594
        %v2597 = vcombine.high %v2492, 0.0
        %v2599 = vunpack.c.l.s4 1934713408
        %v2600 = vunpack.c.0.s8 %v2599
        %v2601 = vlaneseq
        %v2602 = vshrl.u32 %v2601, 7
        %v2603 = vsub.s32 %v2600, %v2602
        %v2604 = vrot.slane %v2496, %v2603
        %v2605 = vcombine.low %v2597, %v2604
        %v2607 = vunpack.c.l.s4 1934713408
        %v2608 = vunpack.c.0.s8 %v2607
        %v2609 = vlaneseq
        %v2610 = vshrl.u32 %v2609, 7
        %v2611 = vsub.s32 %v2608, %v2610
        %v2612 = vrot.slane %v2605, %v2611
        %v2613 = vcombine.high %v2612, 0.0
        %2617 = vrot.lane.b32.xlu0 %v2546, 16
        %v2618 = vpop.permute.xlu0 %2617
        %2619 = vrot.lane.b32.xlu0 %v2596, 16
        %v2620 = vpop.permute.xlu0 %2619
        %2621 = vrot.lane.b32.xlu0 %v2613, 16
        %v2622 = vpop.permute.xlu0 %2621
        %v2626 = vsel %vm1882, %v2545, %v2618
        %v2627 = vsel %vm1882, %v2595, %v2620
        %v2628 = vsel %vm1882, %v2612, %v2622
        %v2629 = vpack.c.bf16 %v2627, %v2626
        %v2630 = vpack.c.bf16 %v2628, %v2628
        %v2631 = vld [vmem:[%s559] sm:$0xf]
        %v2632 = vld [vmem:[%s559 + $0x4] sm:$0xf]
        %v2633 = vld [vmem:[%s559 + $0x8] sm:$0xf]
        %v2634 = vld [vmem:[%s559 + $0xc] sm:$0xf]
        %v2635 = vld [vmem:[%s567] sm:$0x1]
        %v2637 = vlaneseq
        %v2638 = vshrl.u32 %v2637, 7
        %v2639 = vsub.s32 0, %v2638
        %v2640 = vrot.slane %v2635, %v2639
        %v2646 = vunpack.c.l.b16 %v2631
        %v2647 = vunpack.c.l.b16 %v2632
        %v2648 = vunpack.c.l.b16 %v2633
        %v2649 = vunpack.c.l.b16 %v2634
        %v2650 = vpack.c.b16 %v2647, %v2646
        %v2651 = vpack.c.b16 %v2649, %v2648
        %v2655 = vsel %vm984, %v2629, 0
        %v2658 = vsel %vm984, %v2630, 0
        %2660 = vmatprep.subr.bf16.mxu0 0
        %2661 = vmatpush1.bf16.msra.mxu0 %v2650
        %2662 = vmatprep.subr.bf16.mxu0 0
        %2663 = vmatpush1.bf16.msra.mxu0 %v2651
        %2664 = vmatprep.subr.bf16.mxu0 0
        %2665 = vmatpush1.bf16.msra.mxu0 0
        %2666 = vmatprep.subr.bf16.mxu0 0
        %2667 = vmatpush1.bf16.msra.mxu0 0
        %2668 = vmatprep.subr.bf16.mxu0 0
        %2669 = vmatpush1.bf16.msra.mxu0 0
        %2670 = vmatprep.subr.bf16.mxu0 0
        %2671 = vmatpush1.bf16.msra.mxu0 0
        %2672 = vmatprep.subr.bf16.mxu0 0
        %2673 = vmatpush1.bf16.msra.mxu0 0
        %2674 = vmatprep.subr.bf16.mxu0 0
        %2675 = vmatpush1.bf16.msra.mxu0 0
        %2676 = vmatprep.subr.bf16.mxu0 0
        %2677 = vmatpush1.bf16.msra.mxu0 0
        %2678 = vmatprep.subr.bf16.mxu0 0
        %2679 = vmatpush1.bf16.msra.mxu0 0
        %2680 = vmatprep.subr.bf16.mxu0 0
        %2681 = vmatpush1.bf16.msra.mxu0 0
        %2682 = vmatprep.subr.bf16.mxu0 0
        %2683 = vmatpush1.bf16.msra.mxu0 0
        %2684 = vmatprep.subr.bf16.mxu0 0
        %2685 = vmatpush1.bf16.msra.mxu0 0
        %2686 = vmatprep.subr.bf16.mxu0 0
        %2687 = vmatpush1.bf16.msra.mxu0 0
        %2688 = vmatprep.subr.bf16.mxu0 0
        %2689 = vmatpush1.bf16.msra.mxu0 0
        %2690 = vmatprep.subr.bf16.mxu0 0
        %2691 = vmatpush1.bf16.msra.mxu0 0
        %2692 = vmatprep.mubr.bf16.mxu0 0
        %2693 = vmatmul.mubr.bf16.gmra.mrb[0].mxu0 %v2655
        %v2694 = vpop.f32.mrb[0].mxu0
        %v2695 = vadd.f32 %v2640, %v2694
        %v2696 = vpop.f32.mrb[0].mxu0
        %v2697 = vpop.f32.mrb[0].mxu0
        %v2698 = vadd.f32 %v2640, %v2697
        %v2699 = vpop.f32.mrb[0].mxu0
        %2700 = vmatprep.mubr.bf16.mxu0 0
        %2701 = vmatmul.mubr.bf16.gmra.mrb[0].mxu0 %v2658
        %v2702 = vpop.f32.mrb[0].mxu0
        %v2703 = vadd.f32 %v2640, %v2702
        %v2704 = vpop.f32.mrb[0].mxu0
        %v2705 = vpop.f32.mrb[0].mxu0
        %v2706 = vpop.f32.mrb[0].mxu0
        %2707 = vdwg.mxu0
        %v2708 = vadd.f32 %v2695, %v898
        %v2709 = vadd.f32 %v2698, %v947
        %v2710 = vadd.f32 %v2703, %v962
        %v2711 = vpack.c.bf16 %v2709, %v2708
        %v2712 = vpack.c.bf16 %v2710, %v2710
        %v2713 = vld [vmem:[%s576] sm:$0xf]
        %v2714 = vld [vmem:[%s576 + $0x4] sm:$0xf]
        %v2715 = vld [vmem:[%s576 + $0x8] sm:$0xf]
        %v2716 = vld [vmem:[%s576 + $0xc] sm:$0xf]
        %v2717 = vld [vmem:[%s584] sm:$0x1]
        %v2719 = vlaneseq
        %v2720 = vshrl.u32 %v2719, 7
        %v2721 = vsub.s32 0, %v2720
        %v2722 = vrot.slane %v2717, %v2721
        %v2728 = vunpack.c.l.b16 %v2713
        %v2729 = vunpack.c.l.b16 %v2714
        %v2730 = vunpack.c.l.b16 %v2715
        %v2731 = vunpack.c.l.b16 %v2716
        %v2732 = vpack.c.b16 %v2729, %v2728
        %v2733 = vpack.c.b16 %v2731, %v2730
        %v2737 = vsel %vm984, %v2711, 0
        %v2740 = vsel %vm984, %v2712, 0
        %2742 = vmatprep.subr.bf16.mxu0 0
        %2743 = vmatpush1.bf16.msra.mxu0 %v2732
        %2744 = vmatprep.subr.bf16.mxu0 0
        %2745 = vmatpush1.bf16.msra.mxu0 %v2733
        %2746 = vmatprep.subr.bf16.mxu0 0
        %2747 = vmatpush1.bf16.msra.mxu0 0
        %2748 = vmatprep.subr.bf16.mxu0 0
        %2749 = vmatpush1.bf16.msra.mxu0 0
        %2750 = vmatprep.subr.bf16.mxu0 0
        %2751 = vmatpush1.bf16.msra.mxu0 0
        %2752 = vmatprep.subr.bf16.mxu0 0
        %2753 = vmatpush1.bf16.msra.mxu0 0
        %2754 = vmatprep.subr.bf16.mxu0 0
        %2755 = vmatpush1.bf16.msra.mxu0 0
        %2756 = vmatprep.subr.bf16.mxu0 0
        %2757 = vmatpush1.bf16.msra.mxu0 0
        %2758 = vmatprep.subr.bf16.mxu0 0
        %2759 = vmatpush1.bf16.msra.mxu0 0
        %2760 = vmatprep.subr.bf16.mxu0 0
        %2761 = vmatpush1.bf16.msra.mxu0 0
        %2762 = vmatprep.subr.bf16.mxu0 0
        %2763 = vmatpush1.bf16.msra.mxu0 0
        %2764 = vmatprep.subr.bf16.mxu0 0
        %2765 = vmatpush1.bf16.msra.mxu0 0
        %2766 = vmatprep.subr.bf16.mxu0 0
        %2767 = vmatpush1.bf16.msra.mxu0 0
        %2768 = vmatprep.subr.bf16.mxu0 0
        %2769 = vmatpush1.bf16.msra.mxu0 0
        %2770 = vmatprep.subr.bf16.mxu0 0
        %2771 = vmatpush1.bf16.msra.mxu0 0
        %2772 = vmatprep.subr.bf16.mxu0 0
        %2773 = vmatpush1.bf16.msra.mxu0 0
        %2774 = vmatprep.mubr.bf16.mxu0 0
        %2775 = vmatmul.mubr.bf16.gmra.mrb[0].mxu0 %v2737
        %v2776 = vpop.f32.mrb[0].mxu0
        %v2777 = vadd.f32 %v2722, %v2776
        %v2778 = vpop.f32.mrb[0].mxu0
        %v2779 = vpop.f32.mrb[0].mxu0
        %v2780 = vadd.f32 %v2722, %v2779
        %v2781 = vpop.f32.mrb[0].mxu0
        %2782 = vmatprep.mubr.bf16.mxu0 0
        %2783 = vmatmul.mubr.bf16.gmra.mrb[0].mxu0 %v2740
        %v2784 = vpop.f32.mrb[0].mxu0
        %v2785 = vadd.f32 %v2722, %v2784
        %v2786 = vpop.f32.mrb[0].mxu0
        %v2787 = vpop.f32.mrb[0].mxu0
        %v2788 = vpop.f32.mrb[0].mxu0
        %2789 = vdwg.mxu0
        %v2790 = vmax.f32 %v2777, 0.0
        %v2791 = vmax.f32 %v2780, 0.0
        %v2792 = vmax.f32 %v2785, 0.0
        %v2793 = vpack.c.bf16 %v2791, %v2790
        %v2794 = vpack.c.bf16 %v2792, %v2792
        %v2795 = vld [vmem:[%s593] sm:$0xf]
        %v2796 = vld [vmem:[%s593 + $0x4] sm:$0xf]
        %v2797 = vld [vmem:[%s593 + $0x8] sm:$0xf]
        %v2798 = vld [vmem:[%s593 + $0xc] sm:$0xf]
        %v2799 = vld [vmem:[%s593 + $0x10] sm:$0xf]
        %v2800 = vld [vmem:[%s593 + $0x14] sm:$0xf]
        %v2801 = vld [vmem:[%s593 + $0x18] sm:$0xf]
        %v2802 = vld [vmem:[%s593 + $0x1c] sm:$0xf]
        %v2803 = vld [vmem:[%s601] sm:$0x1]
        %v2805 = vlaneseq
        %v2806 = vshrl.u32 %v2805, 7
        %v2807 = vsub.s32 0, %v2806
        %v2808 = vrot.slane %v2803, %v2807
        %v2818 = vunpack.c.l.b16 %v2795
        %v2819 = vunpack.c.l.b16 %v2796
        %v2820 = vunpack.c.l.b16 %v2797
        %v2821 = vunpack.c.l.b16 %v2798
        %v2822 = vunpack.c.l.b16 %v2799
        %v2823 = vunpack.c.l.b16 %v2800
        %v2824 = vunpack.c.l.b16 %v2801
        %v2825 = vunpack.c.l.b16 %v2802
        %v2826 = vpack.c.b16 %v2819, %v2818
        %v2827 = vpack.c.b16 %v2821, %v2820
        %v2828 = vpack.c.b16 %v2823, %v2822
        %v2829 = vpack.c.b16 %v2825, %v2824
        %vm2834 = vcmask 523264
        %v2836 = vsel %vm2834, %v2793, 0
        %v2839 = vsel %vm2834, %v2794, 0
        %2841 = vmatprep.subr.bf16.mxu0 0
        %2842 = vmatpush1.bf16.msra.mxu0 %v2826
        %2843 = vmatprep.subr.bf16.mxu0 0
        %2844 = vmatpush1.bf16.msra.mxu0 %v2827
        %2845 = vmatprep.subr.bf16.mxu0 0
        %2846 = vmatpush1.bf16.msra.mxu0 %v2828
        %2847 = vmatprep.subr.bf16.mxu0 0
        %2848 = vmatpush1.bf16.msra.mxu0 %v2829
        %2849 = vmatprep.subr.bf16.mxu0 0
        %2850 = vmatpush1.bf16.msra.mxu0 0
        %2851 = vmatprep.subr.bf16.mxu0 0
        %2852 = vmatpush1.bf16.msra.mxu0 0
        %2853 = vmatprep.subr.bf16.mxu0 0
        %2854 = vmatpush1.bf16.msra.mxu0 0
        %2855 = vmatprep.subr.bf16.mxu0 0
        %2856 = vmatpush1.bf16.msra.mxu0 0
        %2857 = vmatprep.subr.bf16.mxu0 0
        %2858 = vmatpush1.bf16.msra.mxu0 0
        %2859 = vmatprep.subr.bf16.mxu0 0
        %2860 = vmatpush1.bf16.msra.mxu0 0
        %2861 = vmatprep.subr.bf16.mxu0 0
        %2862 = vmatpush1.bf16.msra.mxu0 0
        %2863 = vmatprep.subr.bf16.mxu0 0
        %2864 = vmatpush1.bf16.msra.mxu0 0
        %2865 = vmatprep.subr.bf16.mxu0 0
        %2866 = vmatpush1.bf16.msra.mxu0 0
        %2867 = vmatprep.subr.bf16.mxu0 0
        %2868 = vmatpush1.bf16.msra.mxu0 0
        %2869 = vmatprep.subr.bf16.mxu0 0
        %2870 = vmatpush1.bf16.msra.mxu0 0
        %2871 = vmatprep.subr.bf16.mxu0 0
        %2872 = vmatpush1.bf16.msra.mxu0 0
        %2873 = vmatprep.mubr.bf16.mxu0 0
        %2874 = vmatmul.mubr.bf16.gmra.mrb[0].mxu0 %v2836
        %v2875 = vpop.f32.mrb[0].mxu0
        %v2876 = vadd.f32 %v2808, %v2875
        %v2877 = vpop.f32.mrb[0].mxu0
        %v2878 = vpop.f32.mrb[0].mxu0
        %v2879 = vadd.f32 %v2808, %v2878
        %v2880 = vpop.f32.mrb[0].mxu0
        %2881 = vmatprep.mubr.bf16.mxu0 0
        %2882 = vmatmul.mubr.bf16.gmra.mrb[0].mxu0 %v2839
        %v2883 = vpop.f32.mrb[0].mxu0
        %v2884 = vadd.f32 %v2808, %v2883
        %v2885 = vpop.f32.mrb[0].mxu0
        %v2886 = vpop.f32.mrb[0].mxu0
        %v2887 = vpop.f32.mrb[0].mxu0
        %2888 = vdwg.mxu0
        %v2889 = vadd.f32 %v2876, %v2708
        %v2890 = vadd.f32 %v2879, %v2709
        %v2891 = vadd.f32 %v2884, %v2710
        %v2892 = vsel %vm984, %v2889, 0.0
        %2893 = vadd.xlane.f32.xlu0 %v2892
        %v2894 = vpop.xlane.xlu0 %2893
        %v2895 = vsel %vm984, %v2890, 0.0
        %2896 = vadd.xlane.f32.xlu0 %v2895
        %v2897 = vpop.xlane.xlu0 %2896
        %vm2898 = vcmask 254976
        %v2899 = vsel %vm2898, %v2891, 0.0
        %2900 = vadd.xlane.f32.xlu0 %v2899
        %v2901 = vpop.xlane.xlu0 %2900
        %v2902 = vrcp.pop 32.0
        %v2903 = vmul.f32 %v2894, %v2902
        %v2904 = vmul.f32 %v2897, %v2902
        %v2905 = vmul.f32 %v2901, %v2902
        %v2906 = vsub.f32 %v2889, %v2903
        %v2907 = vsub.f32 %v2890, %v2904
        %v2908 = vsub.f32 %v2891, %v2905
        %v2909 = vmul.f32 %v2906, %v2906
        %v2910 = vmul.f32 %v2907, %v2907
        %v2911 = vmul.f32 %v2908, %v2908
        %v2912 = vsel %vm984, %v2909, 0.0
        %2913 = vadd.xlane.f32.xlu0 %v2912
        %v2914 = vpop.xlane.xlu0 %2913
        %v2915 = vsel %vm984, %v2910, 0.0
        %2916 = vadd.xlane.f32.xlu0 %v2915
        %v2917 = vpop.xlane.xlu0 %2916
        %v2918 = vsel %vm2898, %v2911, 0.0
        %2919 = vadd.xlane.f32.xlu0 %v2918
        %v2920 = vpop.xlane.xlu0 %2919
        %v2921 = vmul.f32 %v2914, %v2902
        %v2922 = vmul.f32 %v2917, %v2902
        %v2923 = vmul.f32 %v2920, %v2902
        %v2924 = vadd.f32 %v2921, 1e-06
        %v2925 = vadd.f32 %v2922, 1e-06
        %v2926 = vadd.f32 %v2923, 1e-06
        %v2927 = vrsqrt.pop %v2924
        %v2928 = vrsqrt.pop %v2925
        %v2929 = vrsqrt.pop %v2926
        %v2930 = vmul.f32 %v2906, %v2927
        %v2931 = vmul.f32 %v2907, %v2928
        %v2932 = vmul.f32 %v2908, %v2929
        %v2933 = vld [vmem:[%s609] sm:$0x1]
        %v2935 = vlaneseq
        %v2936 = vshrl.u32 %v2935, 7
        %v2937 = vsub.s32 0, %v2936
        %v2938 = vrot.slane %v2933, %v2937
        %v2940 = vmul.f32 %v2930, %v2938
        %v2941 = vmul.f32 %v2931, %v2938
        %v2942 = vmul.f32 %v2932, %v2938
        %v2943 = vld [vmem:[%s617] sm:$0x1]
        %v2945 = vlaneseq
        %v2946 = vshrl.u32 %v2945, 7
        %v2947 = vsub.s32 0, %v2946
        %v2948 = vrot.slane %v2943, %v2947
        %v2950 = vadd.f32 %v2940, %v2948
        %v2951 = vadd.f32 %v2941, %v2948
        %v2952 = vadd.f32 %v2942, %v2948
        %v2956 = vcombine.high %v2950, %v2950
        %v2958 = vunpack.c.l.s4 1966171168
        %v2959 = vunpack.c.0.s8 %v2958
        %v2960 = vlaneseq
        %v2961 = vshrl.u32 %v2960, 7
        %v2962 = vsub.s32 %v2959, %v2961
        %v2963 = vrot.slane %v2950, %v2962
        %v2965 = vunpack.c.l.s4 1966171168
        %v2966 = vunpack.c.0.s8 %v2965
        %v2967 = vlaneseq
        %v2968 = vshrl.u32 %v2967, 7
        %v2969 = vsub.s32 %v2966, %v2968
        %v2970 = vrot.slane %v2956, %v2969
        %v2971 = vcombine.high %v2963, %v2963
        %v2972 = vcombine.high %v2970, %v2970
        %v2974 = vunpack.c.l.s4 1966171168
        %v2975 = vunpack.c.0.s8 %v2974
        %v2976 = vlaneseq
        %v2977 = vshrl.u32 %v2976, 7
        %v2978 = vsub.s32 %v2975, %v2977
        %v2979 = vrot.slane %v2963, %v2978
        %v2981 = vunpack.c.l.s4 1966171168
        %v2982 = vunpack.c.0.s8 %v2981
        %v2983 = vlaneseq
        %v2984 = vshrl.u32 %v2983, 7
        %v2985 = vsub.s32 %v2982, %v2984
        %v2986 = vrot.slane %v2970, %v2985
        %v2988 = vunpack.c.l.s4 1966171168
        %v2989 = vunpack.c.0.s8 %v2988
        %v2990 = vlaneseq
        %v2991 = vshrl.u32 %v2990, 7
        %v2992 = vsub.s32 %v2989, %v2991
        %v2993 = vrot.slane %v2971, %v2992
        %v2995 = vunpack.c.l.s4 1966171168
        %v2996 = vunpack.c.0.s8 %v2995
        %v2997 = vlaneseq
        %v2998 = vshrl.u32 %v2997, 7
        %v2999 = vsub.s32 %v2996, %v2998
        %v3000 = vrot.slane %v2972, %v2999
        %v3001 = vcombine.high %v2979, %v2979
        %v3002 = vcombine.high %v2986, %v2986
        %v3003 = vcombine.high %v2993, %v2993
        %v3004 = vcombine.high %v3000, %v3000
        %v3005 = vcombine.high %v2951, %v2951
        %v3007 = vunpack.c.l.s4 1966171168
        %v3008 = vunpack.c.0.s8 %v3007
        %v3009 = vlaneseq
        %v3010 = vshrl.u32 %v3009, 7
        %v3011 = vsub.s32 %v3008, %v3010
        %v3012 = vrot.slane %v2951, %v3011
        %v3014 = vunpack.c.l.s4 1966171168
        %v3015 = vunpack.c.0.s8 %v3014
        %v3016 = vlaneseq
        %v3017 = vshrl.u32 %v3016, 7
        %v3018 = vsub.s32 %v3015, %v3017
        %v3019 = vrot.slane %v3005, %v3018
        %v3020 = vcombine.high %v3012, %v3012
        %v3021 = vcombine.high %v3019, %v3019
        %v3023 = vunpack.c.l.s4 1966171168
        %v3024 = vunpack.c.0.s8 %v3023
        %v3025 = vlaneseq
        %v3026 = vshrl.u32 %v3025, 7
        %v3027 = vsub.s32 %v3024, %v3026
        %v3028 = vrot.slane %v3012, %v3027
        %v3030 = vunpack.c.l.s4 1966171168
        %v3031 = vunpack.c.0.s8 %v3030
        %v3032 = vlaneseq
        %v3033 = vshrl.u32 %v3032, 7
        %v3034 = vsub.s32 %v3031, %v3033
        %v3035 = vrot.slane %v3019, %v3034
        %v3037 = vunpack.c.l.s4 1966171168
        %v3038 = vunpack.c.0.s8 %v3037
        %v3039 = vlaneseq
        %v3040 = vshrl.u32 %v3039, 7
        %v3041 = vsub.s32 %v3038, %v3040
        %v3042 = vrot.slane %v3020, %v3041
        %v3044 = vunpack.c.l.s4 1966171168
        %v3045 = vunpack.c.0.s8 %v3044
        %v3046 = vlaneseq
        %v3047 = vshrl.u32 %v3046, 7
        %v3048 = vsub.s32 %v3045, %v3047
        %v3049 = vrot.slane %v3021, %v3048
        %v3050 = vcombine.high %v3028, %v3028
        %v3051 = vcombine.high %v3035, %v3035
        %v3052 = vcombine.high %v3042, %v3042
        %v3053 = vcombine.high %v3049, %v3049
        %v3055 = vunpack.c.l.s4 1966171168
        %v3056 = vunpack.c.0.s8 %v3055
        %v3057 = vlaneseq
        %v3058 = vshrl.u32 %v3057, 7
        %v3059 = vsub.s32 %v3056, %v3058
        %v3060 = vrot.slane %v2952, %v3059
        %v3061 = vcombine.high %v3060, %v3060
        %v3063 = vunpack.c.l.s4 1966171168
        %v3064 = vunpack.c.0.s8 %v3063
        %v3065 = vlaneseq
        %v3066 = vshrl.u32 %v3065, 7
        %v3067 = vsub.s32 %v3064, %v3066
        %v3068 = vrot.slane %v3060, %v3067
        %v3070 = vunpack.c.l.s4 1966171168
        %v3071 = vunpack.c.0.s8 %v3070
        %v3072 = vlaneseq
        %v3073 = vshrl.u32 %v3072, 7
        %v3074 = vsub.s32 %v3071, %v3073
        %v3075 = vrot.slane %v3061, %v3074
        %v3076 = vcombine.low %v2979, %v2993
        %v3077 = vcombine.low %v3001, %v3003
        %v3078 = vcombine.low %v2986, %v3000
        %v3079 = vcombine.low %v3002, %v3004
        %v3081 = vunpack.c.l.s4 1966171168
        %v3082 = vunpack.c.0.s8 %v3081
        %v3083 = vlaneseq
        %v3084 = vshrl.u32 %v3083, 7
        %v3085 = vsub.s32 %v3082, %v3084
        %v3086 = vrot.slane %v3076, %v3085
        %v3088 = vunpack.c.l.s4 1966171168
        %v3089 = vunpack.c.0.s8 %v3088
        %v3090 = vlaneseq
        %v3091 = vshrl.u32 %v3090, 7
        %v3092 = vsub.s32 %v3089, %v3091
        %v3093 = vrot.slane %v3077, %v3092
        %v3095 = vunpack.c.l.s4 1966171168
        %v3096 = vunpack.c.0.s8 %v3095
        %v3097 = vlaneseq
        %v3098 = vshrl.u32 %v3097, 7
        %v3099 = vsub.s32 %v3096, %v3098
        %v3100 = vrot.slane %v3078, %v3099
        %v3102 = vunpack.c.l.s4 1966171168
        %v3103 = vunpack.c.0.s8 %v3102
        %v3104 = vlaneseq
        %v3105 = vshrl.u32 %v3104, 7
        %v3106 = vsub.s32 %v3103, %v3105
        %v3107 = vrot.slane %v3079, %v3106
        %v3108 = vcombine.low %v3086, %v3093
        %v3109 = vcombine.low %v3100, %v3107
        %v3111 = vunpack.c.l.s4 1966171168
        %v3112 = vunpack.c.0.s8 %v3111
        %v3113 = vlaneseq
        %v3114 = vshrl.u32 %v3113, 7
        %v3115 = vsub.s32 %v3112, %v3114
        %v3116 = vrot.slane %v3108, %v3115
        %v3118 = vunpack.c.l.s4 1966171168
        %v3119 = vunpack.c.0.s8 %v3118
        %v3120 = vlaneseq
        %v3121 = vshrl.u32 %v3120, 7
        %v3122 = vsub.s32 %v3119, %v3121
        %v3123 = vrot.slane %v3109, %v3122
        %v3124 = vcombine.low %v3116, %v3123
        %v3126 = vunpack.c.l.s4 1966171168
        %v3127 = vunpack.c.0.s8 %v3126
        %v3128 = vlaneseq
        %v3129 = vshrl.u32 %v3128, 7
        %v3130 = vsub.s32 %v3127, %v3129
        %v3131 = vrot.slane %v3028, %v3130
        %v3133 = vunpack.c.l.s4 1966171168
        %v3134 = vunpack.c.0.s8 %v3133
        %v3135 = vlaneseq
        %v3136 = vshrl.u32 %v3135, 7
        %v3137 = vsub.s32 %v3134, %v3136
        %v3138 = vrot.slane %v3131, %v3137
        %v3139 = vcombine.low %v3042, %v3050
        %v3140 = vcombine.low %v3052, %v3035
        %v3141 = vcombine.low %v3049, %v3051
        %v3142 = vcombine.low %v3053, %v3068
        %v3144 = vunpack.c.l.s4 1966171168
        %v3145 = vunpack.c.0.s8 %v3144
        %v3146 = vlaneseq
        %v3147 = vshrl.u32 %v3146, 7
        %v3148 = vsub.s32 %v3145, %v3147
        %v3149 = vrot.slane %v3139, %v3148
        %v3151 = vunpack.c.l.s4 1966171168
        %v3152 = vunpack.c.0.s8 %v3151
        %v3153 = vlaneseq
        %v3154 = vshrl.u32 %v3153, 7
        %v3155 = vsub.s32 %v3152, %v3154
        %v3156 = vrot.slane %v3140, %v3155
        %v3158 = vunpack.c.l.s4 1966171168
        %v3159 = vunpack.c.0.s8 %v3158
        %v3160 = vlaneseq
        %v3161 = vshrl.u32 %v3160, 7
        %v3162 = vsub.s32 %v3159, %v3161
        %v3163 = vrot.slane %v3141, %v3162
        %v3165 = vunpack.c.l.s4 1966171168
        %v3166 = vunpack.c.0.s8 %v3165
        %v3167 = vlaneseq
        %v3168 = vshrl.u32 %v3167, 7
        %v3169 = vsub.s32 %v3166, %v3168
        %v3170 = vrot.slane %v3142, %v3169
        %v3171 = vcombine.low %v3149, %v3156
        %v3172 = vcombine.low %v3163, %v3170
        %v3174 = vunpack.c.l.s4 1966171168
        %v3175 = vunpack.c.0.s8 %v3174
        %v3176 = vlaneseq
        %v3177 = vshrl.u32 %v3176, 7
        %v3178 = vsub.s32 %v3175, %v3177
        %v3179 = vrot.slane %v3171, %v3178
        %v3181 = vunpack.c.l.s4 1966171168
        %v3182 = vunpack.c.0.s8 %v3181
        %v3183 = vlaneseq
        %v3184 = vshrl.u32 %v3183, 7
        %v3185 = vsub.s32 %v3182, %v3184
        %v3186 = vrot.slane %v3172, %v3185
        %v3187 = vcombine.low %v3179, %v3186
        %v3189 = vunpack.c.l.s4 1966171168
        %v3190 = vunpack.c.0.s8 %v3189
        %v3191 = vlaneseq
        %v3192 = vshrl.u32 %v3191, 7
        %v3193 = vsub.s32 %v3190, %v3192
        %v3194 = vrot.slane %v3075, %v3193
        %v3196 = vunpack.c.l.s4 1966171168
        %v3197 = vunpack.c.0.s8 %v3196
        %v3198 = vlaneseq
        %v3199 = vshrl.u32 %v3198, 7
        %v3200 = vsub.s32 %v3197, %v3199
        %v3201 = vrot.slane %v3194, %v3200
        %3206 = vst.msk [vmem:[#allocation2] sm:$0xff] %vm984, %v3124
        %vm3207 = vcmask 253952
        %3208 = vst.msk [vmem:[#allocation2 + $0x8] sm:$0x1] %vm3207, %v3138
        %3209 = vst.msk [vmem:[#allocation2 + $0x10] sm:$0xff] %vm984, %v3187
        %3210 = vst.msk [vmem:[#allocation2 + $0x18] sm:$0x1] %vm3207, %v3201
        %p3211 = scmp.eq.s32.totalorder %s43, 1
        // Predicated region
        $region105: #{tpu_custom_call.1} parent=59 // pred_check
          %p3212 = pneg %p3211
        $region106: #{tpu_custom_call.1} parent=59 // pred_check_branch
          %3214 = sbr.rel (%p3212) target = $region108
        $region107: #{tpu_custom_call.1} parent=59 // pred_region
          %3215 = vst.msk [vmem:[#allocation20] sm:$0xff] %vm984, %v3124
          %3216 = vst.msk [vmem:[#allocation20 + $0x8] sm:$0x1] %vm3207, %v3138
          %3217 = vst.msk [vmem:[#allocation20 + $0x10] sm:$0xff] %vm984, %v3187
          %3218 = vst.msk [vmem:[#allocation20 + $0x18] sm:$0x1] %vm3207, %v3201
        $region108: #{tpu_custom_call.1} parent=59 // pred_fallthru
          _
        // Predicated region
        $region109: #{tpu_custom_call.1} parent=59 // pred_check
          %p3219 = pneg %p328
        $region110: #{tpu_custom_call.1} parent=59 // pred_check_branch
          %3221 = sbr.rel (%p3219) target = $region112
        $region111: #{tpu_custom_call.1} parent=59 // pred_region
          %s3222 = smul.u32 2, %s42
          %s3224 = ssub.s32 512, 512
          %3225 = vsyncadd [#allocation5], %s3224
          %s3226 = smul.addr %s3222, 2
          %s3227 = smul.addr %s3226, 128
          %s3228 = scalar_lea.hbm %s10, %s3227
          %s3229 = sshll.u32 [#allocation20], 4
          %s3230 = int_to_ptr.vmem [resolvable:$true] %s3229
          %3235 = dma.vmem_to_hbm [thread:$0]  %s3230, 512, %s3228, [#allocation5], 128, 128, 8
        $region112: #{tpu_custom_call.1} parent=59 // pred_fallthru
          _
        // Predicated region
        $region113: #{tpu_custom_call.1} parent=59 // pred_check
          %p3236 = pneg %p328
        $region114: #{tpu_custom_call.1} parent=59 // pred_check_branch
          %3238 = sbr.rel (%p3236) target = $region116
        $region115: #{tpu_custom_call.1} parent=59 // pred_region
          %3239 = dma.done [#allocation5], 512
        $region116: #{tpu_custom_call.1} parent=59 // pred_fallthru
          _
      $region60: #{tpu_custom_call.1} parent=5 // pred_fallthru
        _
      %p3240 = scmp.le.s32.totalorder 2, %s33
      // Predicated region
      $region117: #{tpu_custom_call.1} parent=5 // pred_check
        %p3241 = pneg %p3240
      $region118: #{tpu_custom_call.1} parent=5 // pred_check_branch
        %3243 = sbr.rel (%p3241) target = $region120
      $region119: #{tpu_custom_call.1} parent=5 // pred_region
        %s3244 = ssub.s32 %s33, 2
      $region120: #{tpu_custom_call.1} parent=5 // pred_fallthru
        _
    $region6: #{tpu_custom_call.1} parent=1 // loop_footer
      %s37 = sadd.s32 1, %s33
    $region7: #{tpu_custom_call.1} parent=1 // loop_footer_branch
      %32 = sbr.rel target = $region3
    $region8: #{tpu_custom_call.1} parent=1 // loop_exit
      _
    %3245 = vsyncpa [#allocation4], 1
    %s3246 = scalar_lea.sflag [#allocation4], 1
    %3247 = vsyncpa %s3246, 1
    %3248 = vsyncpa [#allocation7], 1
    %s3249 = scalar_lea.sflag [#allocation7], 1
    %3250 = vsyncpa %s3249, 1
    %3251 = vsyncpa [#allocation10], 1
    %s3252 = scalar_lea.sflag [#allocation10], 1
    %3253 = vsyncpa %s3252, 1
    %3254 = vsyncpa [#allocation13], 1
    %s3255 = scalar_lea.sflag [#allocation13], 1
    %3256 = vsyncpa %s3255, 1
    %3257 = vsyncpa [#allocation16], 1
    %s3258 = scalar_lea.sflag [#allocation16], 1
    %3259 = vsyncpa %s3258, 1
    %3260 = vsyncpa [#allocation19], 1
    %s3261 = scalar_lea.sflag [#allocation19], 1
    %3262 = vsyncpa %s3261, 1
    %3263 = vsyncpa [#allocation5], 1
    %s3264 = scalar_lea.sflag [#allocation5], 1
    %3265 = vsyncpa %s3264, 1

</llo_original>
